<compile_context>
chip_gen: v6e
topology: v6e:2x2x1
jax: 0.10.0
libtpu: 0.0.40
codegen_flags: <defaults>
</compile_context>

<pallas_src>
import functools

import jax
import jax.numpy as jnp
import numpy as np
from jax.experimental import pallas as pl
from jax.experimental.pallas import tpu as pltpu


def _round_up(n, m):
    return (n + m - 1) // m * m


def _pick_tile(n_pad, candidates, min_tiles=1):
    """Largest candidate (all multiples of 128) that divides n_pad with >= min_tiles tiles."""
    for c in candidates:
        if c <= n_pad and n_pad % c == 0 and n_pad // c >= min_tiles:
            return c
    return 128  # n_pad is always a multiple of 128


def _default_score_dtype():
    """bf16 elementwise/exp on v6e/v7x (bf16 VPU+EUP); f32 on v5e and older parts."""
    try:
        kind = jax.devices()[0].device_kind.lower()
    except Exception:
        return jnp.float32
    if ("v6" in kind) or ("v7" in kind) or ("tpu7" in kind):
        return jnp.bfloat16
    return jnp.float32


# -----------------------------------------------------------------------------
# Stage 1: fused multi-head projection + attention scores (transposed layouts).
# -----------------------------------------------------------------------------
def gat_project_kernel(x_ref, w_ref, al_ref, ar_ref, bias_ref,
                       featp_ref, el_ref, er_ref):
    # x_ref    : (F_in, TR)   compute dtype   transposed node-feature column tile
    # w_ref    : (H*Dp, F_in) compute dtype   fused projection; rows h*Dp+D.. are zero
    # al/ar    : (H, H*Dp)    compute dtype   block-diagonal attn_l / attn_r selectors
    # bias_ref : (H*Dp, 1)    f32             1.0 at each head's "ones" row, else 0
    # featp_ref: (H*Dp, TR)   compute dtype   feat^T (+ ones rows), lane dense
    # el/er    : (H, TR)      f32             per-head src / dst scores, lane dense
    featp = jnp.dot(w_ref[...], x_ref[...], preferred_element_type=jnp.float32)
    featp = featp + bias_ref[...]                       # insert the per-head ones row
    featp_c = featp.astype(featp_ref.dtype)
    # al/ar have zero columns at the ones rows, so the bias does not leak into el/er.
    el_ref[...] = jnp.dot(al_ref[...], featp_c, preferred_element_type=jnp.float32)
    er_ref[...] = jnp.dot(ar_ref[...], featp_c, preferred_element_type=jnp.float32)
    featp_ref[...] = featp_c


# -----------------------------------------------------------------------------
# Stage 2: masked edge-softmax + aggregation, src-major, exact precomputed shift.
# -----------------------------------------------------------------------------
def gat_attention_kernel(el_ref, er_ref, elmax_ref, featp_ref, adj_ref,
                         out_ref, acc_ref, *, num_heads, out_feats, d_pad,
                         negative_slope, score_dtype):
    # el_ref    : (TK, H)     f32   src scores  (node-major -> (TK, 1) column slices)
    # er_ref    : (H, TQ)     f32   dst scores  (head-major -> (1, TQ) row slices)
    # elmax_ref : (1, H)      f32   per-head max_j el[j, h]  (exact softmax shift)
    # featp_ref : (H*Dp, TK)  bf16  feat^T; ones row at h*Dp + D, zero padding above
    # adj_ref   : (TK, TQ)    int8  adj[k, q] != 0 iff edge src k -> dst q
    # out_ref   : (H*D, TQ)   f32   normalized output, transposed & lane dense
    # acc_ref   : (H*Dp, TQ)  f32   running [weighted sum ; denominator] per head
    k = pl.program_id(1)

    @pl.when(k == 0)
    def _init():
        acc_ref[...] = jnp.zeros_like(acc_ref)

    # One int8 -> score-dtype cast per grid step, shared by every head.
    adj_s = adj_ref[...].astype(jnp.float32).astype(score_dtype)      # (TK, TQ) in {0,1}

    for h in range(num_heads):                                        # static unroll
        lo = h * d_pad
        # Exact shift: LeakyReLU monotone => m[q] = LeakyReLU(er[q] + max_j el[j])
        # equals the UNMASKED row max of e.  (Same underflow caveat as the previous
        # running-max version if a non-edge score exceeds every real edge by >~80.)
        er_row = er_ref[h:h + 1, :]                                   # (1, TQ) f32
        m_row = er_row + elmax_ref[0:1, h:h + 1]
        m_row = jnp.maximum(m_row, negative_slope * m_row)            # LeakyReLU

        el_col = el_ref[:, h:h + 1].astype(score_dtype)               # (TK, 1)
        e = el_col + er_row.astype(score_dtype)                       # (TK, TQ)
        e = jnp.maximum(e, negative_slope * e)                        # LeakyReLU
        p = jnp.exp(e - m_row.astype(score_dtype)) * adj_s            # masked, unnormalized

        # featp rows [lo, lo+D) = features, row lo+D = ones (-> denominator), rows
        # above = zero padding.  One lane-dense MXU matmul yields acc AND l.
        acc_ref[lo:lo + d_pad, :] += jnp.dot(
            featp_ref[lo:lo + d_pad, :], p.astype(featp_ref.dtype),
            preferred_element_type=jnp.float32)

    @pl.when(k == pl.num_programs(1) - 1)
    def _finalize():
        for h in range(num_heads):
            lo = h * d_pad
            l_row = acc_ref[lo + out_feats:lo + out_feats + 1, :]     # (1, TQ)
            inv_l = pl.reciprocal(jnp.maximum(l_row, 1e-30), approx=True)
            out_ref[h * out_feats:(h + 1) * out_feats, :] = (
                acc_ref[lo:lo + out_feats, :] * inv_l).astype(out_ref.dtype)


def gat_conv_forward(x, w_all, attn_l, attn_r, adj, *, num_heads, out_feats,
                     negative_slope=0.2, compute_dtype=jnp.bfloat16,
                     score_dtype=None):
    """GATConv (att_type='GAT') forward.

    x      : (N, F_in) f32 node features.
    w_all  : (F_in, H*D) f32 fused fc weight (column h*D+d == head h, feature d).
    attn_l : (H, D) f32,  attn_r : (H, D) f32.
    adj    : (N, N); adj[i, j] != 0 iff edge src j -> dst i (self-loops included).
    Returns (N, H, D) f32.
    """
    if score_dtype is None:
        score_dtype = _default_score_dtype()

    N, f_in = x.shape
    H, D = num_heads, out_feats
    HD = H * D
    d_pad = _round_up(D + 1, 8)          # per-head feature rows + ones row, 8-aligned
    hdp = H * d_pad
    assert w_all.shape == (f_in, HD)
    cbytes = jnp.dtype(compute_dtype).itemsize

    # Pad the node count so every tile is lane/sublane aligned; padded nodes have
    # zero features and no edges, so they contribute nothing and are sliced off.
    n_pad = _round_up(max(N, 128), 128)
    TQ = _pick_tile(n_pad, (512, 256, 128), min_tiles=2)   # dst tile ("parallel")
    TK = _pick_tile(n_pad, (2048, 1024, 512, 256, 128))    # src tile ("arbitrary")
    TR = _pick_tile(n_pad, (1024, 512, 256, 128))          # stage-1 node tile
    pad = n_pad - N

    # ----- Stage-1 operands, pre-oriented so both kernels store lane-dense tiles -----
    x_t = x.astype(compute_dtype).T                                   # (F_in, N)
    if pad:
        x_t = jnp.pad(x_t, ((0, 0), (0, pad)))

    # Fused projection with a zero row after each head's D rows (the ones-row slot).
    w_heads = w_all.T.reshape(H, D, f_in).astype(jnp.float32)         # (H, D, F_in)
    w_aug = jnp.zeros((H, d_pad, f_in), jnp.float32).at[:, :D, :].set(w_heads)
    w_aug_t = w_aug.reshape(hdp, f_in).astype(compute_dtype)          # (H*Dp, F_in)

    # Block-diagonal selectors: el / er become small lane-dense MXU matmuls.
    eye_h = jnp.eye(H, dtype=jnp.float32)
    attn_l_p = jnp.pad(attn_l.astype(jnp.float32), ((0, 0), (0, d_pad - D)))
    attn_r_p = jnp.pad(attn_r.astype(jnp.float32), ((0, 0), (0, d_pad - D)))
    a_l = (eye_h[:, :, None] * attn_l_p[None, :, :]).reshape(H, hdp).astype(compute_dtype)
    a_r = (eye_h[:, :, None] * attn_r_p[None, :, :]).reshape(H, hdp).astype(compute_dtype)

    ones_bias = jnp.zeros((H, d_pad), jnp.float32).at[:, D].set(1.0).reshape(hdp, 1)

    # Src-major int8 edge mask: adj_src[k, q] = 1 iff edge src k -> dst q.
    adj_src = (adj != 0).T.astype(jnp.int8)
    if pad:
        adj_src = jnp.pad(adj_src, ((0, pad), (0, pad)))

    vmem_limit = 48 * 1024 * 1024   # fits v7x's 64 MiB core; ample on v5e/v6e (128 MiB)

    # ---------------- Stage 1: projection + scores ----------------
    proj_cost = pl.CostEstimate(
        flops=2 * n_pad * f_in * hdp + 4 * n_pad * hdp * H,
        transcendentals=0,
        bytes_accessed=(f_in * n_pad * cbytes
                        + (n_pad // TR) * hdp * f_in * cbytes
                        + n_pad * hdp * cbytes + 2 * n_pad * H * 4))
    featp, el_t, er_t = pl.pallas_call(
        gat_project_kernel,
        out_shape=(jax.ShapeDtypeStruct((hdp, n_pad), compute_dtype),
                   jax.ShapeDtypeStruct((H, n_pad), jnp.float32),
                   jax.ShapeDtypeStruct((H, n_pad), jnp.float32)),
        grid_spec=pltpu.PrefetchScalarGridSpec(
            num_scalar_prefetch=0,
            grid=(n_pad // TR,),
            in_specs=[
                pl.BlockSpec((f_in, TR), lambda r: (0, r)),
                pl.BlockSpec((hdp, f_in), lambda r: (0, 0)),
                pl.BlockSpec((H, hdp), lambda r: (0, 0)),
                pl.BlockSpec((H, hdp), lambda r: (0, 0)),
                pl.BlockSpec((hdp, 1), lambda r: (0, 0)),
            ],
            out_specs=[
                pl.BlockSpec((hdp, TR), lambda r: (0, r)),
                pl.BlockSpec((H, TR), lambda r: (0, r)),
                pl.BlockSpec((H, TR), lambda r: (0, r)),
            ],
        ),
        compiler_params=pltpu.CompilerParams(
            dimension_semantics=("parallel",), vmem_limit_bytes=vmem_limit),
        cost_estimate=proj_cost,
    )(x_t, w_aug_t, a_l, a_r, ones_bias)

    # Tiny O(N*H) reorders in XLA: el as (N, H) for (TK,1) column slices; exact
    # per-head softmax shift max_j el[j, h] over the REAL (unpadded) nodes.
    el_nh = el_t.T                                                    # (n_pad, H)
    el_max = jnp.max(el_t[:, :N], axis=1).reshape(1, H)               # (1, H)

    # ---------------- Stage 2: edge softmax + aggregation ----------------
    attn_cost = pl.CostEstimate(
        flops=2 * H * d_pad * n_pad * n_pad + 6 * H * n_pad * n_pad,
        transcendentals=H * n_pad * n_pad,
        bytes_accessed=(n_pad * n_pad                                 # int8 adjacency
                        + (n_pad // TQ) * n_pad * hdp * cbytes        # featp re-reads
                        + (n_pad // TQ) * n_pad * H * 4               # el re-reads
                        + (n_pad // TK) * n_pad * H * 4               # er re-reads
                        + n_pad * HD * 4))                            # output
    out_t = pl.pallas_call(
        functools.partial(gat_attention_kernel, num_heads=H, out_feats=D,
                          d_pad=d_pad, negative_slope=negative_slope,
                          score_dtype=score_dtype),
        out_shape=jax.ShapeDtypeStruct((HD, n_pad), jnp.float32),
        grid_spec=pltpu.PrefetchScalarGridSpec(
            num_scalar_prefetch=0,
            grid=(n_pad // TQ, n_pad // TK),
            in_specs=[
                pl.BlockSpec((TK, H), lambda q, k: (k, 0)),     # el   (src scores)
                pl.BlockSpec((H, TQ), lambda q, k: (0, q)),     # er^T (dst scores)
                pl.BlockSpec((1, H), lambda q, k: (0, 0)),      # per-head max el
                pl.BlockSpec((hdp, TK), lambda q, k: (0, k)),   # featp^T (+ ones rows)
                pl.BlockSpec((TK, TQ), lambda q, k: (k, q)),    # int8 adjacency, src-major
            ],
            out_specs=pl.BlockSpec((HD, TQ), lambda q, k: (0, q)),
            scratch_shapes=[pltpu.VMEM((hdp, TQ), jnp.float32)],
        ),
        compiler_params=pltpu.CompilerParams(
            dimension_semantics=("parallel", "arbitrary"),
            vmem_limit_bytes=vmem_limit),
        cost_estimate=attn_cost,
    )(el_nh, er_t, el_max, featp, adj_src)

    # (H*D, n_pad) -> (N, H, D): cheap O(N*H*D) slice + transpose in XLA.
    return out_t[:, :N].reshape(H, D, N).transpose(2, 0, 1)


def gat_conv_reference(x, w_all, attn_l, attn_r, adj, num_heads, out_feats,
                       negative_slope=0.2):
    """Pure-JAX f32 reference mirroring the PyTorch/DGL semantics."""
    N = x.shape[0]
    H, D = num_heads, out_feats
    feat = jnp.dot(x, w_all).reshape(N, H, D)
    el = jnp.sum(feat * attn_l[None], axis=-1)                        # (N, H) src scores
    er = jnp.sum(feat * attn_r[None], axis=-1)                        # (N, H) dst scores
    e = er[:, None, :] + el[None, :, :]                               # (dst, src, H)
    e = jnp.where(e >= 0, e, negative_slope * e)
    mask = (adj != 0)[:, :, None]
    e = jnp.where(mask, e, -1e30)
    e = e - jnp.max(e, axis=1, keepdims=True)
    p = jnp.exp(e) * mask
    alpha = p / jnp.sum(p, axis=1, keepdims=True)
    return jnp.einsum("ijh,jhd->ihd", alpha, feat)


def xavier_normal(key, shape, fan_in, fan_out, gain):
    std = gain * np.sqrt(2.0 / (fan_in + fan_out))
    return std * jax.random.normal(key, shape, dtype=jnp.float32)


if __name__ == "__main__":
    # Small deterministic problem; N not a multiple of 128 to exercise padding and
    # multi-tile accumulation (N=300 -> padded 384, 3 dst tiles x 3 src tiles).
    N, F_IN, D_OUT, H = 300, 128, 8, 4
    NEG_SLOPE = 0.2
    gain = float(np.sqrt(2.0))   # nn.init.calculate_gain('relu')

    key = jax.random.PRNGKey(0)
    k_x, k_adj, k_fc, k_al, k_ar = jax.random.split(key, 5)

    x = jax.random.normal(k_x, (N, F_IN), dtype=jnp.float32)

    # Dense adjacency: adj[i, j] = 1 iff edge src j -> dst i; self-loops ensure every
    # destination has >= 1 incoming edge (DGL edge_softmax well-defined).
    adj = jax.random.uniform(k_adj, (N, N)) < 0.3
    adj = jnp.logical_or(adj, jnp.eye(N, dtype=bool)).astype(jnp.int8)

    # fc: nn.Linear(F_IN, H*D, bias=False) -> weight (H*D, F_IN), y = x @ W.T.
    fc_weight = xavier_normal(k_fc, (H * D_OUT, F_IN), fan_in=F_IN,
                              fan_out=H * D_OUT, gain=gain)
    w_all = fc_weight.T                                               # (F_IN, H*D)

    # attn_l / attn_r: PyTorch parameter shape (1, H, D) -> head-major (H, D).
    attn_l = xavier_normal(k_al, (1, H, D_OUT), fan_in=D_OUT,
                           fan_out=H * D_OUT, gain=gain)[0]
    attn_r = xavier_normal(k_ar, (1, H, D_OUT), fan_in=D_OUT,
                           fan_out=H * D_OUT, gain=gain)[0]

    fwd = jax.jit(gat_conv_forward,
                  static_argnames=("num_heads", "out_feats", "negative_slope",
                                   "compute_dtype", "score_dtype"))
    out = fwd(x, w_all, attn_l, attn_r, adj, num_heads=H, out_feats=D_OUT,
              negative_slope=NEG_SLOPE, compute_dtype=jnp.bfloat16)
    out = jax.block_until_ready(out)

    ref = gat_conv_reference(x, w_all, attn_l, attn_r, adj, H, D_OUT, NEG_SLOPE)
    ref = jax.block_until_ready(ref)

    assert out.shape == (N, H, D_OUT), out.shape
    # bf16 matmuls (+ bf16 score/exp math on v6e/v7x) vs a pure-f32 reference.
    np.testing.assert_allclose(np.asarray(out), np.asarray(ref), rtol=5e-2, atol=1e-1)

    # TODO(synk): feat_drop / attn_drop (rates 0.0 -> identity), residual=False,
    # activation=None, and the non-'GAT' att_type branches (cosine / scaled_dot /
    # pearson / spearman incl. soft_rank) are not implemented.
    print("KERNEL_OK")
</pallas_src>

<mosaic_0001>
module attributes {stable_mosaic.version = 11 : i64} {
  func.func @gat_project_kernel(%arg0: i32, %arg1: memref<128x128xbf16, #tpu.memory_space<vmem>>, %arg2: memref<64x128xbf16, #tpu.memory_space<vmem>>, %arg3: memref<4x64xbf16, #tpu.memory_space<vmem>>, %arg4: memref<4x64xbf16, #tpu.memory_space<vmem>>, %arg5: memref<64x1xf32, #tpu.memory_space<vmem>>, %arg6: memref<64x128xbf16, #tpu.memory_space<vmem>>, %arg7: memref<4x128xf32, #tpu.memory_space<vmem>>, %arg8: memref<4x128xf32, #tpu.memory_space<vmem>>) attributes {dimension_semantics = [#tpu.dimension_semantics<parallel>], iteration_bounds = array<i64: 3>, scalar_prefetch = 0 : i64, scratch_operands = 0 : i64, tpu.core_type = #tpu.core_type<tc>, window_params = [{transform_indices = @transform_0, window_bounds = array<i64: 128, 128>}, {pipeline_mode = #tpu.pipeline_mode<synchronous>, transform_indices = @transform_1, window_bounds = array<i64: 64, 128>}, {pipeline_mode = #tpu.pipeline_mode<synchronous>, transform_indices = @transform_2, window_bounds = array<i64: 4, 64>}, {pipeline_mode = #tpu.pipeline_mode<synchronous>, transform_indices = @transform_3, window_bounds = array<i64: 4, 64>}, {pipeline_mode = #tpu.pipeline_mode<synchronous>, transform_indices = @transform_4, window_bounds = array<i64: 64, 1>}, {transform_indices = @transform_5, window_bounds = array<i64: 64, 128>}, {transform_indices = @transform_6, window_bounds = array<i64: 4, 128>}, {transform_indices = @transform_7, window_bounds = array<i64: 4, 128>}]} {
    %c0 = arith.constant 0 : index
    %c0_0 = arith.constant 0 : index
    %0 = vector.load %arg2[%c0, %c0_0] : memref<64x128xbf16, #tpu.memory_space<vmem>>, vector<64x128xbf16>
    %c0_1 = arith.constant 0 : index
    %c0_2 = arith.constant 0 : index
    %1 = vector.load %arg1[%c0_1, %c0_2] : memref<128x128xbf16, #tpu.memory_space<vmem>>, vector<128x128xbf16>
    %cst = arith.constant dense<0.000000e+00> : vector<64x128xf32>
    %2 = tpu.matmul %0, %1, %cst {dimension_numbers = #tpu.dot_dimension_numbers<[1], [0], [0], [1], [0, 0, 1, 1], [], []>} : vector<64x128xbf16>, vector<128x128xbf16>, vector<64x128xf32> -> vector<64x128xf32>
    %c0_3 = arith.constant 0 : index
    %c0_4 = arith.constant 0 : index
    %3 = vector.load %arg5[%c0_3, %c0_4] : memref<64x1xf32, #tpu.memory_space<vmem>>, vector<64x1xf32>
    %4 = vector.broadcast %3 : vector<64x1xf32> to vector<64x128xf32>
    %5 = arith.addf %2, %4 : vector<64x128xf32>
    %6 = arith.truncf %5 : vector<64x128xf32> to vector<64x128xbf16>
    %c0_5 = arith.constant 0 : index
    %c0_6 = arith.constant 0 : index
    %7 = vector.load %arg3[%c0_5, %c0_6] : memref<4x64xbf16, #tpu.memory_space<vmem>>, vector<4x64xbf16>
    %cst_7 = arith.constant dense<0.000000e+00> : vector<4x128xf32>
    %8 = tpu.matmul %7, %6, %cst_7 {dimension_numbers = #tpu.dot_dimension_numbers<[1], [0], [0], [1], [0, 0, 1, 1], [], []>} : vector<4x64xbf16>, vector<64x128xbf16>, vector<4x128xf32> -> vector<4x128xf32>
    %c0_8 = arith.constant 0 : index
    %c0_9 = arith.constant 0 : index
    %9 = vector.load %arg7[%c0_8, %c0_9] : memref<4x128xf32, #tpu.memory_space<vmem>>, vector<4x128xf32>
    tpu.vector_store %arg7[%c0_8, %c0_9], %8 {strides = array<i32>} : memref<4x128xf32, #tpu.memory_space<vmem>>, vector<4x128xf32>,
    %c0_10 = arith.constant 0 : index
    %c0_11 = arith.constant 0 : index
    %10 = vector.load %arg4[%c0_10, %c0_11] : memref<4x64xbf16, #tpu.memory_space<vmem>>, vector<4x64xbf16>
    %cst_12 = arith.constant dense<0.000000e+00> : vector<4x128xf32>
    %11 = tpu.matmul %10, %6, %cst_12 {dimension_numbers = #tpu.dot_dimension_numbers<[1], [0], [0], [1], [0, 0, 1, 1], [], []>} : vector<4x64xbf16>, vector<64x128xbf16>, vector<4x128xf32> -> vector<4x128xf32>
    %c0_13 = arith.constant 0 : index
    %c0_14 = arith.constant 0 : index
    %12 = vector.load %arg8[%c0_13, %c0_14] : memref<4x128xf32, #tpu.memory_space<vmem>>, vector<4x128xf32>
    tpu.vector_store %arg8[%c0_13, %c0_14], %11 {strides = array<i32>} : memref<4x128xf32, #tpu.memory_space<vmem>>, vector<4x128xf32>,
    %c0_15 = arith.constant 0 : index
    %c0_16 = arith.constant 0 : index
    %13 = vector.load %arg6[%c0_15, %c0_16] : memref<64x128xbf16, #tpu.memory_space<vmem>>, vector<64x128xbf16>
    tpu.vector_store %arg6[%c0_15, %c0_16], %6 {strides = array<i32>} : memref<64x128xbf16, #tpu.memory_space<vmem>>, vector<64x128xbf16>,
    return
  }
  func.func @transform_0(%arg0: i32) -> (i32, i32) {
    %c0_i32 = arith.constant 0 : i32
    %c0_i32_0 = arith.constant 0 : i32
    return %c0_i32, %arg0 : i32, i32
  }
  func.func @transform_1(%arg0: i32) -> (i32, i32) {
    %c0_i32 = arith.constant 0 : i32
    %c0_i32_0 = arith.constant 0 : i32
    %c0_i32_1 = arith.constant 0 : i32
    return %c0_i32, %c0_i32_0 : i32, i32
  }
  func.func @transform_2(%arg0: i32) -> (i32, i32) {
    %c0_i32 = arith.constant 0 : i32
    %c0_i32_0 = arith.constant 0 : i32
    %c0_i32_1 = arith.constant 0 : i32
    return %c0_i32, %c0_i32_0 : i32, i32
  }
  func.func @transform_3(%arg0: i32) -> (i32, i32) {
    %c0_i32 = arith.constant 0 : i32
    %c0_i32_0 = arith.constant 0 : i32
    %c0_i32_1 = arith.constant 0 : i32
    return %c0_i32, %c0_i32_0 : i32, i32
  }
  func.func @transform_4(%arg0: i32) -> (i32, i32) {
    %c0_i32 = arith.constant 0 : i32
    %c0_i32_0 = arith.constant 0 : i32
    %c0_i32_1 = arith.constant 0 : i32
    return %c0_i32, %c0_i32_0 : i32, i32
  }
  func.func @transform_5(%arg0: i32) -> (i32, i32) {
    %c0_i32 = arith.constant 0 : i32
    %c0_i32_0 = arith.constant 0 : i32
    return %c0_i32, %arg0 : i32, i32
  }
  func.func @transform_6(%arg0: i32) -> (i32, i32) {
    %c0_i32 = arith.constant 0 : i32
    %c0_i32_0 = arith.constant 0 : i32
    return %c0_i32, %arg0 : i32, i32
  }
  func.func @transform_7(%arg0: i32) -> (i32, i32) {
    %c0_i32 = arith.constant 0 : i32
    %c0_i32_0 = arith.constant 0 : i32
    return %c0_i32, %arg0 : i32, i32
  }
}

module attributes {stable_mosaic.version = 11 : i64} {
  func.func @gat_attention_kernel(%arg0: i32, %arg1: i32, %arg2: memref<128x4xf32, #tpu.memory_space<vmem>>, %arg3: memref<4x128xf32, #tpu.memory_space<vmem>>, %arg4: memref<1x4xf32, #tpu.memory_space<vmem>>, %arg5: memref<64x128xbf16, #tpu.memory_space<vmem>>, %arg6: memref<128x128xi8, #tpu.memory_space<vmem>>, %arg7: memref<32x128xf32, #tpu.memory_space<vmem>>, %arg8: memref<64x128xf32, #tpu.memory_space<vmem>>) attributes {dimension_semantics = [#tpu.dimension_semantics<parallel>, #tpu.dimension_semantics<arbitrary>], iteration_bounds = array<i64: 3, 3>, scalar_prefetch = 0 : i64, scratch_operands = 1 : i64, tpu.core_type = #tpu.core_type<tc>, window_params = [{transform_indices = @transform_0, window_bounds = array<i64: 128, 4>}, {transform_indices = @transform_1, window_bounds = array<i64: 4, 128>}, {pipeline_mode = #tpu.pipeline_mode<synchronous>, transform_indices = @transform_2, window_bounds = array<i64: 1, 4>}, {transform_indices = @transform_3, window_bounds = array<i64: 64, 128>}, {transform_indices = @transform_4, window_bounds = array<i64: 128, 128>}, {transform_indices = @transform_5, window_bounds = array<i64: 32, 128>}]} {
    %c0_i32 = arith.constant 0 : i32
    %0 = arith.cmpi eq, %arg1, %c0_i32 : i32
    %1 = arith.extui %0 : i1 to i32
    %c0_i32_0 = arith.constant 0 : i32
    %2 = arith.cmpi ne, %1, %c0_i32_0 : i32
    scf.if %2 {
      %cst_56 = arith.constant 0.000000e+00 : f32
      %104 = vector.broadcast %cst_56 : f32 to vector<64x128xf32>
      %c0_57 = arith.constant 0 : index
      %c0_58 = arith.constant 0 : index
      %105 = vector.load %arg8[%c0_57, %c0_58] : memref<64x128xf32, #tpu.memory_space<vmem>>, vector<64x128xf32>
      tpu.vector_store %arg8[%c0_57, %c0_58], %104 {strides = array<i32>} : memref<64x128xf32, #tpu.memory_space<vmem>>, vector<64x128xf32>,
    } else {
    }
    %c0 = arith.constant 0 : index
    %c0_1 = arith.constant 0 : index
    %3 = vector.load %arg6[%c0, %c0_1] : memref<128x128xi8, #tpu.memory_space<vmem>>, vector<128x128xi8>
    %4 = arith.sitofp %3 : vector<128x128xi8> to vector<128x128xf32>
    %c0_2 = arith.constant 0 : index
    %c0_3 = arith.constant 0 : index
    %5 = vector.load %arg3[%c0_2, %c0_3] : memref<4x128xf32, #tpu.memory_space<vmem>>, vector<1x128xf32>
    %c0_4 = arith.constant 0 : index
    %c0_5 = arith.constant 0 : index
    %6 = vector.load %arg4[%c0_4, %c0_5] : memref<1x4xf32, #tpu.memory_space<vmem>>, vector<1x1xf32>
    %7 = vector.broadcast %6 : vector<1x1xf32> to vector<1x128xf32>
    %8 = arith.addf %5, %7 : vector<1x128xf32>
    %cst = arith.constant 2.000000e-01 : f32
    %9 = vector.broadcast %cst : f32 to vector<1x128xf32>
    %10 = arith.mulf %9, %8 : vector<1x128xf32>
    %11 = arith.maximumf %8, %10 : vector<1x128xf32>
    %c0_6 = arith.constant 0 : index
    %c0_7 = arith.constant 0 : index
    %12 = vector.load %arg2[%c0_6, %c0_7] : memref<128x4xf32, #tpu.memory_space<vmem>>, vector<128x1xf32>
    %13 = vector.broadcast %12 : vector<128x1xf32> to vector<128x128xf32>
    %14 = vector.broadcast %5 : vector<1x128xf32> to vector<128x128xf32>
    %15 = arith.addf %13, %14 : vector<128x128xf32>
    %cst_8 = arith.constant 2.000000e-01 : f32
    %16 = vector.broadcast %cst_8 : f32 to vector<128x128xf32>
    %17 = arith.mulf %16, %15 : vector<128x128xf32>
    %18 = arith.maximumf %15, %17 : vector<128x128xf32>
    %19 = vector.broadcast %11 : vector<1x128xf32> to vector<128x128xf32>
    %20 = arith.subf %18, %19 : vector<128x128xf32>
    %21 = math.exp %20 : vector<128x128xf32>
    %22 = arith.mulf %21, %4 : vector<128x128xf32>
    %c0_9 = arith.constant 0 : index
    %c0_10 = arith.constant 0 : index
    %23 = vector.load %arg8[%c0_9, %c0_10] : memref<64x128xf32, #tpu.memory_space<vmem>>, vector<16x128xf32>
    %c0_11 = arith.constant 0 : index
    %c0_12 = arith.constant 0 : index
    %24 = vector.load %arg5[%c0_11, %c0_12] : memref<64x128xbf16, #tpu.memory_space<vmem>>, vector<16x128xbf16>
    %25 = arith.truncf %22 : vector<128x128xf32> to vector<128x128xbf16>
    %cst_13 = arith.constant dense<0.000000e+00> : vector<16x128xf32>
    %26 = tpu.matmul %24, %25, %cst_13 {dimension_numbers = #tpu.dot_dimension_numbers<[1], [0], [0], [1], [0, 0, 1, 1], [], []>} : vector<16x128xbf16>, vector<128x128xbf16>, vector<16x128xf32> -> vector<16x128xf32>
    %27 = arith.addf %23, %26 : vector<16x128xf32>
    %c0_14 = arith.constant 0 : index
    %c0_15 = arith.constant 0 : index
    %28 = vector.load %arg8[%c0_14, %c0_15] : memref<64x128xf32, #tpu.memory_space<vmem>>, vector<16x128xf32>
    tpu.vector_store %arg8[%c0_14, %c0_15], %27 {strides = array<i32>} : memref<64x128xf32, #tpu.memory_space<vmem>>, vector<16x128xf32>,
    %c1 = arith.constant 1 : index
    %c0_16 = arith.constant 0 : index
    %29 = vector.load %arg3[%c1, %c0_16] : memref<4x128xf32, #tpu.memory_space<vmem>>, vector<1x128xf32>
    %c0_17 = arith.constant 0 : index
    %c1_18 = arith.constant 1 : index
    %30 = vector.load %arg4[%c0_17, %c1_18] : memref<1x4xf32, #tpu.memory_space<vmem>>, vector<1x1xf32>
    %31 = vector.broadcast %30 : vector<1x1xf32> to vector<1x128xf32>
    %32 = arith.addf %29, %31 : vector<1x128xf32>
    %cst_19 = arith.constant 2.000000e-01 : f32
    %33 = vector.broadcast %cst_19 : f32 to vector<1x128xf32>
    %34 = arith.mulf %33, %32 : vector<1x128xf32>
    %35 = arith.maximumf %32, %34 : vector<1x128xf32>
    %c0_20 = arith.constant 0 : index
    %c1_21 = arith.constant 1 : index
    %36 = vector.load %arg2[%c0_20, %c1_21] : memref<128x4xf32, #tpu.memory_space<vmem>>, vector<128x1xf32>
    %37 = vector.broadcast %36 : vector<128x1xf32> to vector<128x128xf32>
    %38 = vector.broadcast %29 : vector<1x128xf32> to vector<128x128xf32>
    %39 = arith.addf %37, %38 : vector<128x128xf32>
    %cst_22 = arith.constant 2.000000e-01 : f32
    %40 = vector.broadcast %cst_22 : f32 to vector<128x128xf32>
    %41 = arith.mulf %40, %39 : vector<128x128xf32>
    %42 = arith.maximumf %39, %41 : vector<128x128xf32>
    %43 = vector.broadcast %35 : vector<1x128xf32> to vector<128x128xf32>
    %44 = arith.subf %42, %43 : vector<128x128xf32>
    %45 = math.exp %44 : vector<128x128xf32>
    %46 = arith.mulf %45, %4 : vector<128x128xf32>
    %c16 = arith.constant 16 : index
    %c0_23 = arith.constant 0 : index
    %47 = vector.load %arg8[%c16, %c0_23] : memref<64x128xf32, #tpu.memory_space<vmem>>, vector<16x128xf32>
    %c16_24 = arith.constant 16 : index
    %c0_25 = arith.constant 0 : index
    %48 = vector.load %arg5[%c16_24, %c0_25] : memref<64x128xbf16, #tpu.memory_space<vmem>>, vector<16x128xbf16>
    %49 = arith.truncf %46 : vector<128x128xf32> to vector<128x128xbf16>
    %cst_26 = arith.constant dense<0.000000e+00> : vector<16x128xf32>
    %50 = tpu.matmul %48, %49, %cst_26 {dimension_numbers = #tpu.dot_dimension_numbers<[1], [0], [0], [1], [0, 0, 1, 1], [], []>} : vector<16x128xbf16>, vector<128x128xbf16>, vector<16x128xf32> -> vector<16x128xf32>
    %51 = arith.addf %47, %50 : vector<16x128xf32>
    %c16_27 = arith.constant 16 : index
    %c0_28 = arith.constant 0 : index
    %52 = vector.load %arg8[%c16_27, %c0_28] : memref<64x128xf32, #tpu.memory_space<vmem>>, vector<16x128xf32>
    tpu.vector_store %arg8[%c16_27, %c0_28], %51 {strides = array<i32>} : memref<64x128xf32, #tpu.memory_space<vmem>>, vector<16x128xf32>,
    %c2 = arith.constant 2 : index
    %c0_29 = arith.constant 0 : index
    %53 = vector.load %arg3[%c2, %c0_29] : memref<4x128xf32, #tpu.memory_space<vmem>>, vector<1x128xf32>
    %c0_30 = arith.constant 0 : index
    %c2_31 = arith.constant 2 : index
    %54 = vector.load %arg4[%c0_30, %c2_31] : memref<1x4xf32, #tpu.memory_space<vmem>>, vector<1x1xf32>
    %55 = vector.broadcast %54 : vector<1x1xf32> to vector<1x128xf32>
    %56 = arith.addf %53, %55 : vector<1x128xf32>
    %cst_32 = arith.constant 2.000000e-01 : f32
    %57 = vector.broadcast %cst_32 : f32 to vector<1x128xf32>
    %58 = arith.mulf %57, %56 : vector<1x128xf32>
    %59 = arith.maximumf %56, %58 : vector<1x128xf32>
    %c0_33 = arith.constant 0 : index
    %c2_34 = arith.constant 2 : index
    %60 = vector.load %arg2[%c0_33, %c2_34] : memref<128x4xf32, #tpu.memory_space<vmem>>, vector<128x1xf32>
    %61 = vector.broadcast %60 : vector<128x1xf32> to vector<128x128xf32>
    %62 = vector.broadcast %53 : vector<1x128xf32> to vector<128x128xf32>
    %63 = arith.addf %61, %62 : vector<128x128xf32>
    %cst_35 = arith.constant 2.000000e-01 : f32
    %64 = vector.broadcast %cst_35 : f32 to vector<128x128xf32>
    %65 = arith.mulf %64, %63 : vector<128x128xf32>
    %66 = arith.maximumf %63, %65 : vector<128x128xf32>
    %67 = vector.broadcast %59 : vector<1x128xf32> to vector<128x128xf32>
    %68 = arith.subf %66, %67 : vector<128x128xf32>
    %69 = math.exp %68 : vector<128x128xf32>
    %70 = arith.mulf %69, %4 : vector<128x128xf32>
    %c32 = arith.constant 32 : index
    %c0_36 = arith.constant 0 : index
    %71 = vector.load %arg8[%c32, %c0_36] : memref<64x128xf32, #tpu.memory_space<vmem>>, vector<16x128xf32>
    %c32_37 = arith.constant 32 : index
    %c0_38 = arith.constant 0 : index
    %72 = vector.load %arg5[%c32_37, %c0_38] : memref<64x128xbf16, #tpu.memory_space<vmem>>, vector<16x128xbf16>
    %73 = arith.truncf %70 : vector<128x128xf32> to vector<128x128xbf16>
    %cst_39 = arith.constant dense<0.000000e+00> : vector<16x128xf32>
    %74 = tpu.matmul %72, %73, %cst_39 {dimension_numbers = #tpu.dot_dimension_numbers<[1], [0], [0], [1], [0, 0, 1, 1], [], []>} : vector<16x128xbf16>, vector<128x128xbf16>, vector<16x128xf32> -> vector<16x128xf32>
    %75 = arith.addf %71, %74 : vector<16x128xf32>
    %c32_40 = arith.constant 32 : index
    %c0_41 = arith.constant 0 : index
    %76 = vector.load %arg8[%c32_40, %c0_41] : memref<64x128xf32, #tpu.memory_space<vmem>>, vector<16x128xf32>
    tpu.vector_store %arg8[%c32_40, %c0_41], %75 {strides = array<i32>} : memref<64x128xf32, #tpu.memory_space<vmem>>, vector<16x128xf32>,
    %c3 = arith.constant 3 : index
    %c0_42 = arith.constant 0 : index
    %77 = vector.load %arg3[%c3, %c0_42] : memref<4x128xf32, #tpu.memory_space<vmem>>, vector<1x128xf32>
    %c0_43 = arith.constant 0 : index
    %c3_44 = arith.constant 3 : index
    %78 = vector.load %arg4[%c0_43, %c3_44] : memref<1x4xf32, #tpu.memory_space<vmem>>, vector<1x1xf32>
    %79 = vector.broadcast %78 : vector<1x1xf32> to vector<1x128xf32>
    %80 = arith.addf %77, %79 : vector<1x128xf32>
    %cst_45 = arith.constant 2.000000e-01 : f32
    %81 = vector.broadcast %cst_45 : f32 to vector<1x128xf32>
    %82 = arith.mulf %81, %80 : vector<1x128xf32>
    %83 = arith.maximumf %80, %82 : vector<1x128xf32>
    %c0_46 = arith.constant 0 : index
    %c3_47 = arith.constant 3 : index
    %84 = vector.load %arg2[%c0_46, %c3_47] : memref<128x4xf32, #tpu.memory_space<vmem>>, vector<128x1xf32>
    %85 = vector.broadcast %84 : vector<128x1xf32> to vector<128x128xf32>
    %86 = vector.broadcast %77 : vector<1x128xf32> to vector<128x128xf32>
    %87 = arith.addf %85, %86 : vector<128x128xf32>
    %cst_48 = arith.constant 2.000000e-01 : f32
    %88 = vector.broadcast %cst_48 : f32 to vector<128x128xf32>
    %89 = arith.mulf %88, %87 : vector<128x128xf32>
    %90 = arith.maximumf %87, %89 : vector<128x128xf32>
    %91 = vector.broadcast %83 : vector<1x128xf32> to vector<128x128xf32>
    %92 = arith.subf %90, %91 : vector<128x128xf32>
    %93 = math.exp %92 : vector<128x128xf32>
    %94 = arith.mulf %93, %4 : vector<128x128xf32>
    %c48 = arith.constant 48 : index
    %c0_49 = arith.constant 0 : index
    %95 = vector.load %arg8[%c48, %c0_49] : memref<64x128xf32, #tpu.memory_space<vmem>>, vector<16x128xf32>
    %c48_50 = arith.constant 48 : index
    %c0_51 = arith.constant 0 : index
    %96 = vector.load %arg5[%c48_50, %c0_51] : memref<64x128xbf16, #tpu.memory_space<vmem>>, vector<16x128xbf16>
    %97 = arith.truncf %94 : vector<128x128xf32> to vector<128x128xbf16>
    %cst_52 = arith.constant dense<0.000000e+00> : vector<16x128xf32>
    %98 = tpu.matmul %96, %97, %cst_52 {dimension_numbers = #tpu.dot_dimension_numbers<[1], [0], [0], [1], [0, 0, 1, 1], [], []>} : vector<16x128xbf16>, vector<128x128xbf16>, vector<16x128xf32> -> vector<16x128xf32>
    %99 = arith.addf %95, %98 : vector<16x128xf32>
    %c48_53 = arith.constant 48 : index
    %c0_54 = arith.constant 0 : index
    %100 = vector.load %arg8[%c48_53, %c0_54] : memref<64x128xf32, #tpu.memory_space<vmem>>, vector<16x128xf32>
    tpu.vector_store %arg8[%c48_53, %c0_54], %99 {strides = array<i32>} : memref<64x128xf32, #tpu.memory_space<vmem>>, vector<16x128xf32>,
    %c2_i32 = arith.constant 2 : i32
    %101 = arith.cmpi eq, %arg1, %c2_i32 : i32
    %102 = arith.extui %101 : i1 to i32
    %c0_i32_55 = arith.constant 0 : i32
    %103 = arith.cmpi ne, %102, %c0_i32_55 : i32
    scf.if %103 {
      %c8 = arith.constant 8 : index
      %c0_56 = arith.constant 0 : index
      %104 = vector.load %arg8[%c8, %c0_56] : memref<64x128xf32, #tpu.memory_space<vmem>>, vector<1x128xf32>
      %cst_57 = arith.constant 1.000000e-30 : f32
      %105 = vector.broadcast %cst_57 : f32 to vector<1x128xf32>
      %106 = arith.maximumf %104, %105 : vector<1x128xf32>
      %107 = tpu.reciprocal %106 {approx = true} : vector<1x128xf32> -> vector<1x128xf32>
      %c0_58 = arith.constant 0 : index
      %c0_59 = arith.constant 0 : index
      %108 = vector.load %arg8[%c0_58, %c0_59] : memref<64x128xf32, #tpu.memory_space<vmem>>, vector<8x128xf32>
      %109 = vector.broadcast %107 : vector<1x128xf32> to vector<8x128xf32>
      %110 = arith.mulf %108, %109 : vector<8x128xf32>
      %c0_60 = arith.constant 0 : index
      %c0_61 = arith.constant 0 : index
      %111 = vector.load %arg7[%c0_60, %c0_61] : memref<32x128xf32, #tpu.memory_space<vmem>>, vector<8x128xf32>
      tpu.vector_store %arg7[%c0_60, %c0_61], %110 {strides = array<i32>} : memref<32x128xf32, #tpu.memory_space<vmem>>, vector<8x128xf32>,
      %c24 = arith.constant 24 : index
      %c0_62 = arith.constant 0 : index
      %112 = vector.load %arg8[%c24, %c0_62] : memref<64x128xf32, #tpu.memory_space<vmem>>, vector<1x128xf32>
      %cst_63 = arith.constant 1.000000e-30 : f32
      %113 = vector.broadcast %cst_63 : f32 to vector<1x128xf32>
      %114 = arith.maximumf %112, %113 : vector<1x128xf32>
      %115 = tpu.reciprocal %114 {approx = true} : vector<1x128xf32> -> vector<1x128xf32>
      %c16_64 = arith.constant 16 : index
      %c0_65 = arith.constant 0 : index
      %116 = vector.load %arg8[%c16_64, %c0_65] : memref<64x128xf32, #tpu.memory_space<vmem>>, vector<8x128xf32>
      %117 = vector.broadcast %115 : vector<1x128xf32> to vector<8x128xf32>
      %118 = arith.mulf %116, %117 : vector<8x128xf32>
      %c8_66 = arith.constant 8 : index
      %c0_67 = arith.constant 0 : index
      %119 = vector.load %arg7[%c8_66, %c0_67] : memref<32x128xf32, #tpu.memory_space<vmem>>, vector<8x128xf32>
      tpu.vector_store %arg7[%c8_66, %c0_67], %118 {strides = array<i32>} : memref<32x128xf32, #tpu.memory_space<vmem>>, vector<8x128xf32>,
      %c40 = arith.constant 40 : index
      %c0_68 = arith.constant 0 : index
      %120 = vector.load %arg8[%c40, %c0_68] : memref<64x128xf32, #tpu.memory_space<vmem>>, vector<1x128xf32>
      %cst_69 = arith.constant 1.000000e-30 : f32
      %121 = vector.broadcast %cst_69 : f32 to vector<1x128xf32>
      %122 = arith.maximumf %120, %121 : vector<1x128xf32>
      %123 = tpu.reciprocal %122 {approx = true} : vector<1x128xf32> -> vector<1x128xf32>
      %c32_70 = arith.constant 32 : index
      %c0_71 = arith.constant 0 : index
      %124 = vector.load %arg8[%c32_70, %c0_71] : memref<64x128xf32, #tpu.memory_space<vmem>>, vector<8x128xf32>
      %125 = vector.broadcast %123 : vector<1x128xf32> to vector<8x128xf32>
      %126 = arith.mulf %124, %125 : vector<8x128xf32>
      %c16_72 = arith.constant 16 : index
      %c0_73 = arith.constant 0 : index
      %127 = vector.load %arg7[%c16_72, %c0_73] : memref<32x128xf32, #tpu.memory_space<vmem>>, vector<8x128xf32>
      tpu.vector_store %arg7[%c16_72, %c0_73], %126 {strides = array<i32>} : memref<32x128xf32, #tpu.memory_space<vmem>>, vector<8x128xf32>,
      %c56 = arith.constant 56 : index
      %c0_74 = arith.constant 0 : index
      %128 = vector.load %arg8[%c56, %c0_74] : memref<64x128xf32, #tpu.memory_space<vmem>>, vector<1x128xf32>
      %cst_75 = arith.constant 1.000000e-30 : f32
      %129 = vector.broadcast %cst_75 : f32 to vector<1x128xf32>
      %130 = arith.maximumf %128, %129 : vector<1x128xf32>
      %131 = tpu.reciprocal %130 {approx = true} : vector<1x128xf32> -> vector<1x128xf32>
      %c48_76 = arith.constant 48 : index
      %c0_77 = arith.constant 0 : index
      %132 = vector.load %arg8[%c48_76, %c0_77] : memref<64x128xf32, #tpu.memory_space<vmem>>, vector<8x128xf32>
      %133 = vector.broadcast %131 : vector<1x128xf32> to vector<8x128xf32>
      %134 = arith.mulf %132, %133 : vector<8x128xf32>
      %c24_78 = arith.constant 24 : index
      %c0_79 = arith.constant 0 : index
      %135 = vector.load %arg7[%c24_78, %c0_79] : memref<32x128xf32, #tpu.memory_space<vmem>>, vector<8x128xf32>
      tpu.vector_store %arg7[%c24_78, %c0_79], %134 {strides = array<i32>} : memref<32x128xf32, #tpu.memory_space<vmem>>, vector<8x128xf32>,
    } else {
    }
    return
  }
  func.func @transform_0(%arg0: i32, %arg1: i32) -> (i32, i32) {
    %c0_i32 = arith.constant 0 : i32
    %c0_i32_0 = arith.constant 0 : i32
    return %arg1, %c0_i32 : i32, i32
  }
  func.func @transform_1(%arg0: i32, %arg1: i32) -> (i32, i32) {
    %c0_i32 = arith.constant 0 : i32
    %c0_i32_0 = arith.constant 0 : i32
    return %c0_i32, %arg0 : i32, i32
  }
  func.func @transform_2(%arg0: i32, %arg1: i32) -> (i32, i32) {
    %c0_i32 = arith.constant 0 : i32
    %c0_i32_0 = arith.constant 0 : i32
    %c0_i32_1 = arith.constant 0 : i32
    return %c0_i32, %c0_i32_0 : i32, i32
  }
  func.func @transform_3(%arg0: i32, %arg1: i32) -> (i32, i32) {
    %c0_i32 = arith.constant 0 : i32
    %c0_i32_0 = arith.constant 0 : i32
    return %c0_i32, %arg1 : i32, i32
  }
  func.func @transform_4(%arg0: i32, %arg1: i32) -> (i32, i32) {
    %c0_i32 = arith.constant 0 : i32
    return %arg1, %arg0 : i32, i32
  }
  func.func @transform_5(%arg0: i32, %arg1: i32) -> (i32, i32) {
    %c0_i32 = arith.constant 0 : i32
    %c0_i32_0 = arith.constant 0 : i32
    return %c0_i32, %arg0 : i32, i32
  }
}

</mosaic_0001>

<llo_original>
// kernel: gat_conv_forward.2
$region0: #{gat_conv_forward.2}
  #allocation0 [shape = 'u32[]', space=smem, size = 0x4, offset = 0x4, fixed_abs, tag = 'smem constant byte address 0x4 - core index']
  #allocation1 [shape = 'u32[144,128]{1,0:T(1,128)}', space=vmem, size = 0x12000, scoped, tag = 'internal scratch']
  %s0 = inlined_call_operand.vmem [shape: bf16[128,384], index: 0, kind: input, shape index: {}]
  %s1 = inlined_call_operand.vmem [shape: bf16[64,128], index: 1, kind: input, shape index: {}]
  %s2 = inlined_call_operand.vmem [shape: bf16[4,64], index: 2, kind: input, shape index: {}]
  %s3 = inlined_call_operand.vmem [shape: bf16[4,64], index: 3, kind: input, shape index: {}]
  %s4 = inlined_call_operand.vmem [shape: f32[64,1], index: 4, kind: input, shape index: {}]
  %s5 = inlined_call_operand.vmem [shape: bf16[64,384], index: 5, kind: output, shape index: {0}]
  %s6 = inlined_call_operand.vmem [shape: f32[4,384], index: 6, kind: output, shape index: {1}]
  %s7 = inlined_call_operand.vmem [shape: f32[4,384], index: 7, kind: output, shape index: {2}]
  %8 = xla_tuple %s5, %s6, %s7
  %s9 = sld [smem:[#allocation0]]
  $region147: #{gat_conv_forward.2} parent=0
    _
  %s11 = ssub.s32 1, %s9
  %s12 = scalar_select 0, %s11, %s9
  $region1: #{gat_conv_forward.2} parent=0
    #allocation2 [shape = 'u8[65536]{0}', space=vmem, size = 0x10000, scoped, tag = 'input window, operand 0']
    #allocation3 [shape = 'u8[32768]{0}', space=vmem, size = 0x8000, scoped, tag = 'output window, operand 0']
    loop: start=0, step=1, limit=5
    $region2: #{gat_conv_forward.2} parent=1 // loop_pre_header
      _
    $region3: #{gat_conv_forward.2} parent=1 // loop_header
      %s14 = sphi 0, %s18
      %p15 = scmp.ge.s32.totalorder %s14, 5
      %s24 = sphi 0, %s26
      %s27 = sphi 0, %s24
      %s28 = sphi 0, %s27
      %s44 = sphi 0, %s28
      %s48 = sphi 0, %s48
      %s50 = sphi 0, %s48
      %s51 = sphi 0, %s50
      %s65 = sphi 0, %s51
      %s69 = sphi 0, %s69
      %s71 = sphi 0, %s69
      %s72 = sphi 0, %s71
      %s86 = sphi 0, %s72
      %s90 = sphi 0, %s90
      %s92 = sphi 0, %s90
      %s93 = sphi 0, %s92
      %s107 = sphi 0, %s93
      %s111 = sphi 0, %s111
      %s113 = sphi 0, %s111
      %s114 = sphi 0, %s113
      %s128 = sphi 0, %s114
      %s134 = sphi 0, %s136
      %s137 = sphi 0, %s134
      %s138 = sphi 0, %s137
      %s154 = sphi 0, %s138
      %s160 = sphi 0, %s162
      %s163 = sphi 0, %s160
      %s164 = sphi 0, %s163
      %s180 = sphi 0, %s164
      %s186 = sphi 0, %s188
      %s189 = sphi 0, %s186
      %s190 = sphi 0, %s189
      %s206 = sphi 0, %s190
    $region4: #{gat_conv_forward.2} parent=1 // loop_header_branch
      %17 = sbr.rel (%p15) target = $region8
    $region5: #{gat_conv_forward.2} parent=1 // loop_body
      %s19 = ssub.s32 %s14, 1
      %s20 = ssub.s32 %s14, 2
      %s21 = sadd.s32 %s14, 1
      %s22 = ssub.s32 %s14, %s21
      %p23 = scmp.eq.s32.totalorder %s22, 0
      %s25 = sadd.s32 %s24, 1
      %s26 = scalar_select %p23, %s24, %s25
      %p29 = pneg %p23
      %p30 = scmp.eq.s32.totalorder %s14, 2
      %p31 = por %p29, %p30
      %p32 = scmp.ne.s32.totalorder %s24, %s27
      %p33 = scmp.eq.s32.totalorder %s14, 0
      %p34 = por %p32, %p33
      %p35 = scmp.ne.s32.totalorder %s24, %s27
      %p36 = scmp.eq.s32.totalorder %s19, 2
      %p37 = por %p35, %p36
      %p38 = scmp.ne.s32.totalorder %s27, %s28
      %p39 = scmp.eq.s32.totalorder %s19, 0
      %p40 = por %p38, %p39
      %p41 = scmp.ne.s32.totalorder %s27, %s28
      %p42 = scmp.eq.s32.totalorder %s20, 2
      %p43 = por %p41, %p42
      %p45 = scmp.ne.s32.totalorder %s28, %s44
      %p46 = scmp.eq.s32.totalorder %s20, 0
      %p47 = por %p45, %p46
      %s49 = sadd.s32 %s48, 1
      %p52 = scmp.eq.s32.totalorder %s14, 2
      %p53 = scmp.ne.s32.totalorder %s48, %s50
      %p54 = scmp.eq.s32.totalorder %s14, 0
      %p55 = por %p53, %p54
      %p56 = scmp.ne.s32.totalorder %s48, %s50
      %p57 = scmp.eq.s32.totalorder %s19, 2
      %p58 = por %p56, %p57
      %p59 = scmp.ne.s32.totalorder %s50, %s51
      %p60 = scmp.eq.s32.totalorder %s19, 0
      %p61 = por %p59, %p60
      %p62 = scmp.ne.s32.totalorder %s50, %s51
      %p63 = scmp.eq.s32.totalorder %s20, 2
      %p64 = por %p62, %p63
      %p66 = scmp.ne.s32.totalorder %s51, %s65
      %p67 = scmp.eq.s32.totalorder %s20, 0
      %p68 = por %p66, %p67
      %s70 = sadd.s32 %s69, 1
      %p73 = scmp.eq.s32.totalorder %s14, 2
      %p74 = scmp.ne.s32.totalorder %s69, %s71
      %p75 = scmp.eq.s32.totalorder %s14, 0
      %p76 = por %p74, %p75
      %p77 = scmp.ne.s32.totalorder %s69, %s71
      %p78 = scmp.eq.s32.totalorder %s19, 2
      %p79 = por %p77, %p78
      %p80 = scmp.ne.s32.totalorder %s71, %s72
      %p81 = scmp.eq.s32.totalorder %s19, 0
      %p82 = por %p80, %p81
      %p83 = scmp.ne.s32.totalorder %s71, %s72
      %p84 = scmp.eq.s32.totalorder %s20, 2
      %p85 = por %p83, %p84
      %p87 = scmp.ne.s32.totalorder %s72, %s86
      %p88 = scmp.eq.s32.totalorder %s20, 0
      %p89 = por %p87, %p88
      %s91 = sadd.s32 %s90, 1
      %p94 = scmp.eq.s32.totalorder %s14, 2
      %p95 = scmp.ne.s32.totalorder %s90, %s92
      %p96 = scmp.eq.s32.totalorder %s14, 0
      %p97 = por %p95, %p96
      %p98 = scmp.ne.s32.totalorder %s90, %s92
      %p99 = scmp.eq.s32.totalorder %s19, 2
      %p100 = por %p98, %p99
      %p101 = scmp.ne.s32.totalorder %s92, %s93
      %p102 = scmp.eq.s32.totalorder %s19, 0
      %p103 = por %p101, %p102
      %p104 = scmp.ne.s32.totalorder %s92, %s93
      %p105 = scmp.eq.s32.totalorder %s20, 2
      %p106 = por %p104, %p105
      %p108 = scmp.ne.s32.totalorder %s93, %s107
      %p109 = scmp.eq.s32.totalorder %s20, 0
      %p110 = por %p108, %p109
      %s112 = sadd.s32 %s111, 1
      %p115 = scmp.eq.s32.totalorder %s14, 2
      %p116 = scmp.ne.s32.totalorder %s111, %s113
      %p117 = scmp.eq.s32.totalorder %s14, 0
      %p118 = por %p116, %p117
      %p119 = scmp.ne.s32.totalorder %s111, %s113
      %p120 = scmp.eq.s32.totalorder %s19, 2
      %p121 = por %p119, %p120
      %p122 = scmp.ne.s32.totalorder %s113, %s114
      %p123 = scmp.eq.s32.totalorder %s19, 0
      %p124 = por %p122, %p123
      %p125 = scmp.ne.s32.totalorder %s113, %s114
      %p126 = scmp.eq.s32.totalorder %s20, 2
      %p127 = por %p125, %p126
      %p129 = scmp.ne.s32.totalorder %s114, %s128
      %p130 = scmp.eq.s32.totalorder %s20, 0
      %p131 = por %p129, %p130
      %s132 = ssub.s32 %s14, %s21
      %p133 = scmp.eq.s32.totalorder %s132, 0
      %s135 = sadd.s32 %s134, 1
      %s136 = scalar_select %p133, %s134, %s135
      %p139 = pneg %p133
      %p140 = scmp.eq.s32.totalorder %s14, 2
      %p141 = por %p139, %p140
      %p142 = scmp.ne.s32.totalorder %s134, %s137
      %p143 = scmp.eq.s32.totalorder %s14, 0
      %p144 = por %p142, %p143
      %p145 = scmp.ne.s32.totalorder %s134, %s137
      %p146 = scmp.eq.s32.totalorder %s19, 2
      %p147 = por %p145, %p146
      %p148 = scmp.ne.s32.totalorder %s137, %s138
      %p149 = scmp.eq.s32.totalorder %s19, 0
      %p150 = por %p148, %p149
      %p151 = scmp.ne.s32.totalorder %s137, %s138
      %p152 = scmp.eq.s32.totalorder %s20, 2
      %p153 = por %p151, %p152
      %p155 = scmp.ne.s32.totalorder %s138, %s154
      %p156 = scmp.eq.s32.totalorder %s20, 0
      %p157 = por %p155, %p156
      %s158 = ssub.s32 %s14, %s21
      %p159 = scmp.eq.s32.totalorder %s158, 0
      %s161 = sadd.s32 %s160, 1
      %s162 = scalar_select %p159, %s160, %s161
      %p165 = pneg %p159
      %p166 = scmp.eq.s32.totalorder %s14, 2
      %p167 = por %p165, %p166
      %p168 = scmp.ne.s32.totalorder %s160, %s163
      %p169 = scmp.eq.s32.totalorder %s14, 0
      %p170 = por %p168, %p169
      %p171 = scmp.ne.s32.totalorder %s160, %s163
      %p172 = scmp.eq.s32.totalorder %s19, 2
      %p173 = por %p171, %p172
      %p174 = scmp.ne.s32.totalorder %s163, %s164
      %p175 = scmp.eq.s32.totalorder %s19, 0
      %p176 = por %p174, %p175
      %p177 = scmp.ne.s32.totalorder %s163, %s164
      %p178 = scmp.eq.s32.totalorder %s20, 2
      %p179 = por %p177, %p178
      %p181 = scmp.ne.s32.totalorder %s164, %s180
      %p182 = scmp.eq.s32.totalorder %s20, 0
      %p183 = por %p181, %p182
      %s184 = ssub.s32 %s14, %s21
      %p185 = scmp.eq.s32.totalorder %s184, 0
      %s187 = sadd.s32 %s186, 1
      %s188 = scalar_select %p185, %s186, %s187
      %p191 = pneg %p185
      %p192 = scmp.eq.s32.totalorder %s14, 2
      %p193 = por %p191, %p192
      %p194 = scmp.ne.s32.totalorder %s186, %s189
      %p195 = scmp.eq.s32.totalorder %s14, 0
      %p196 = por %p194, %p195
      %p197 = scmp.ne.s32.totalorder %s186, %s189
      %p198 = scmp.eq.s32.totalorder %s19, 2
      %p199 = por %p197, %p198
      %p200 = scmp.ne.s32.totalorder %s189, %s190
      %p201 = scmp.eq.s32.totalorder %s19, 0
      %p202 = por %p200, %p201
      %p203 = scmp.ne.s32.totalorder %s189, %s190
      %p204 = scmp.eq.s32.totalorder %s20, 2
      %p205 = por %p203, %p204
      %p207 = scmp.ne.s32.totalorder %s190, %s206
      %p208 = scmp.eq.s32.totalorder %s20, 0
      %p209 = por %p207, %p208
      %p210 = scmp.le.s32.totalorder 1, %s14
      %p211 = scmp.lt.s32.totalorder %s14, 4
      %p212 = pnand %p210, %p211
      %p213 = pneg %p212
      // Predicated region
      $region9: #{gat_conv_forward.2} parent=5 // pred_check
        _
      $region10: #{gat_conv_forward.2} parent=5 // pred_check_branch
        %215 = sbr.rel (%p212) target = $region12
      $region11: #{gat_conv_forward.2} parent=5 // pred_region
        %s216 = ssub.s32 %s14, 1
        // Predicated region
        $region13: #{gat_conv_forward.2} parent=11 // pred_check
          %p217 = pneg %p61
        $region14: #{gat_conv_forward.2} parent=11 // pred_check_branch
          %219 = sbr.rel (%p217) target = $region16
        $region15: #{gat_conv_forward.2} parent=11 // pred_region
          _
        $region16: #{gat_conv_forward.2} parent=11 // pred_fallthru
          _
        // Predicated region
        $region17: #{gat_conv_forward.2} parent=11 // pred_check
          %p220 = pneg %p82
        $region18: #{gat_conv_forward.2} parent=11 // pred_check_branch
          %222 = sbr.rel (%p220) target = $region20
        $region19: #{gat_conv_forward.2} parent=11 // pred_region
          _
        $region20: #{gat_conv_forward.2} parent=11 // pred_fallthru
          _
        // Predicated region
        $region21: #{gat_conv_forward.2} parent=11 // pred_check
          %p223 = pneg %p103
        $region22: #{gat_conv_forward.2} parent=11 // pred_check_branch
          %225 = sbr.rel (%p223) target = $region24
        $region23: #{gat_conv_forward.2} parent=11 // pred_region
          _
        $region24: #{gat_conv_forward.2} parent=11 // pred_fallthru
          _
        // Predicated region
        $region25: #{gat_conv_forward.2} parent=11 // pred_check
          %p226 = pneg %p124
        $region26: #{gat_conv_forward.2} parent=11 // pred_check_branch
          %228 = sbr.rel (%p226) target = $region28
        $region27: #{gat_conv_forward.2} parent=11 // pred_region
          _
        $region28: #{gat_conv_forward.2} parent=11 // pred_fallthru
          _
      $region12: #{gat_conv_forward.2} parent=5 // pred_fallthru
        _
      %p229 = scmp.lt.s32.totalorder %s14, 3
      // Predicated region
      $region29: #{gat_conv_forward.2} parent=5 // pred_check
        %p230 = pneg %p229
      $region30: #{gat_conv_forward.2} parent=5 // pred_check_branch
        %232 = sbr.rel (%p230) target = $region32
      $region31: #{gat_conv_forward.2} parent=5 // pred_region
        // Predicated region
        $region33: #{gat_conv_forward.2} parent=31 // pred_check
          %p233 = pneg %p34
        $region34: #{gat_conv_forward.2} parent=31 // pred_check_branch
          %235 = sbr.rel (%p233) target = $region36
        $region35: #{gat_conv_forward.2} parent=31 // pred_region
          %s236 = sand.u32 %s24, 1
          %s237 = sand.u32 %s24, 1
          %s238 = smul.addr %s237, 64
          %s239 = scalar_lea.vmem [#allocation2], %s238
          %s240 = smul.addr %s14, 4
          %s241 = scalar_lea.vmem %s0, %s240
          // Predicated region
          $region37: #{gat_conv_forward.2} parent=35 // pred_check
            _
          $region38: #{gat_conv_forward.2} parent=35 // pred_check_branch
            %243 = sbr.rel (0) target = $region40
          $region39: #{gat_conv_forward.2} parent=35 // pred_region
            // Predicated region
            $region41: #{gat_conv_forward.2} parent=39 // pred_check
              _
            $region42: #{gat_conv_forward.2} parent=39 // pred_check_branch
              %245 = sbr.rel target = $region44
            $region43: #{gat_conv_forward.2} parent=39 // pred_region
              // Predicated region
              $region56: #{gat_conv_forward.2} parent=43 // pred_check
                _
              $region57: #{gat_conv_forward.2} parent=43 // pred_check_branch
                %291 = sbr.rel (0) target = $region59
              $region58: #{gat_conv_forward.2} parent=43 // pred_region
                loop: start=0, step=1, limit=1
                $region60: #{gat_conv_forward.2} parent=58 // loop_pre_header
                  _
                $region61: #{gat_conv_forward.2} parent=58 // loop_header
                  %s293 = sphi 0, %s297
                  %p294 = scmp.ge.s32.totalorder %s293, 1
                  %s298 = sphi %s241, %s241
                  %s299 = sphi %s239, %s239
                $region62: #{gat_conv_forward.2} parent=58 // loop_header_branch
                  %296 = sbr.rel (%p294) target = $region66
                $region63: #{gat_conv_forward.2} parent=58 // loop_body
                  _
                $region64: #{gat_conv_forward.2} parent=58 // loop_footer
                  %s297 = sadd.s32 1, %s293
                $region65: #{gat_conv_forward.2} parent=58 // loop_footer_branch
                  %292 = sbr.rel target = $region61
                $region66: #{gat_conv_forward.2} parent=58 // loop_exit
                  _
                %s301 = ssub.s32 16, 1
                loop: start=0, step=1, limit=1
                $region67: #{gat_conv_forward.2} parent=58 // loop_pre_header
                  _
                $region68: #{gat_conv_forward.2} parent=58 // loop_header
                  %s303 = sphi 0, %s307
                  %p304 = scmp.ge.s32.totalorder %s303, 1
                  %s308 = sphi %s241, %s241
                  %s309 = sphi %s239, %s239
                $region69: #{gat_conv_forward.2} parent=58 // loop_header_branch
                  %306 = sbr.rel (%p304) target = $region73
                $region70: #{gat_conv_forward.2} parent=58 // loop_body
                  %v310 = vld [vmem:[%s308] sm:%s301]
                  %311 = vst [vmem:[%s309] sm:%s301] %v310
                  %v312 = vld [vmem:[%s308 + $0xc] sm:%s301]
                  %313 = vst [vmem:[%s309 + $0x4] sm:%s301] %v312
                  %v314 = vld [vmem:[%s308 + $0x18] sm:%s301]
                  %315 = vst [vmem:[%s309 + $0x8] sm:%s301] %v314
                  %v316 = vld [vmem:[%s308 + $0x24] sm:%s301]
                  %317 = vst [vmem:[%s309 + $0xc] sm:%s301] %v316
                  %v318 = vld [vmem:[%s308 + $0x30] sm:%s301]
                  %319 = vst [vmem:[%s309 + $0x10] sm:%s301] %v318
                  %v320 = vld [vmem:[%s308 + $0x3c] sm:%s301]
                  %321 = vst [vmem:[%s309 + $0x14] sm:%s301] %v320
                  %v322 = vld [vmem:[%s308 + $0x48] sm:%s301]
                  %323 = vst [vmem:[%s309 + $0x18] sm:%s301] %v322
                  %v324 = vld [vmem:[%s308 + $0x54] sm:%s301]
                  %325 = vst [vmem:[%s309 + $0x1c] sm:%s301] %v324
                  %v326 = vld [vmem:[%s308 + $0x60] sm:%s301]
                  %327 = vst [vmem:[%s309 + $0x20] sm:%s301] %v326
                  %v328 = vld [vmem:[%s308 + $0x6c] sm:%s301]
                  %329 = vst [vmem:[%s309 + $0x24] sm:%s301] %v328
                  %v330 = vld [vmem:[%s308 + $0x78] sm:%s301]
                  %331 = vst [vmem:[%s309 + $0x28] sm:%s301] %v330
                  %v332 = vld [vmem:[%s308 + $0x84] sm:%s301]
                  %333 = vst [vmem:[%s309 + $0x2c] sm:%s301] %v332
                  %v334 = vld [vmem:[%s308 + $0x90] sm:%s301]
                  %335 = vst [vmem:[%s309 + $0x30] sm:%s301] %v334
                  %v336 = vld [vmem:[%s308 + $0x9c] sm:%s301]
                  %337 = vst [vmem:[%s309 + $0x34] sm:%s301] %v336
                  %v338 = vld [vmem:[%s308 + $0xa8] sm:%s301]
                  %339 = vst [vmem:[%s309 + $0x38] sm:%s301] %v338
                  %v340 = vld [vmem:[%s308 + $0xb4] sm:%s301]
                  %341 = vst [vmem:[%s309 + $0x3c] sm:%s301] %v340
                $region71: #{gat_conv_forward.2} parent=58 // loop_footer
                  %s307 = sadd.s32 1, %s303
                $region72: #{gat_conv_forward.2} parent=58 // loop_footer_branch
                  %302 = sbr.rel target = $region68
                $region73: #{gat_conv_forward.2} parent=58 // loop_exit
                  _
              $region59: #{gat_conv_forward.2} parent=43 // pred_fallthru
                _
            $region44: #{gat_conv_forward.2} parent=39 // pred_fallthru
              _
            // Predicated region
            $region45: #{gat_conv_forward.2} parent=39 // pred_check
              _
            $region46: #{gat_conv_forward.2} parent=39 // pred_check_branch
              %247 = sbr.rel (0) target = $region48
            $region47: #{gat_conv_forward.2} parent=39 // pred_region
              %s249 = ssub.s32 16, 1
              loop: start=0, step=1, limit=1
              $region49: #{gat_conv_forward.2} parent=47 // loop_pre_header
                _
              $region50: #{gat_conv_forward.2} parent=47 // loop_header
                %s251 = sphi 0, %s255
                %p252 = scmp.ge.s32.totalorder %s251, 1
                %s256 = sphi %s241, %s241
                %s257 = sphi %s239, %s239
              $region51: #{gat_conv_forward.2} parent=47 // loop_header_branch
                %254 = sbr.rel (%p252) target = $region55
              $region52: #{gat_conv_forward.2} parent=47 // loop_body
                %v258 = vld [vmem:[%s256] sm:%s249]
                %259 = vst [vmem:[%s257] sm:%s249] %v258
                %v260 = vld [vmem:[%s256 + $0xc] sm:%s249]
                %261 = vst [vmem:[%s257 + $0x4] sm:%s249] %v260
                %v262 = vld [vmem:[%s256 + $0x18] sm:%s249]
                %263 = vst [vmem:[%s257 + $0x8] sm:%s249] %v262
                %v264 = vld [vmem:[%s256 + $0x24] sm:%s249]
                %265 = vst [vmem:[%s257 + $0xc] sm:%s249] %v264
                %v266 = vld [vmem:[%s256 + $0x30] sm:%s249]
                %267 = vst [vmem:[%s257 + $0x10] sm:%s249] %v266
                %v268 = vld [vmem:[%s256 + $0x3c] sm:%s249]
                %269 = vst [vmem:[%s257 + $0x14] sm:%s249] %v268
                %v270 = vld [vmem:[%s256 + $0x48] sm:%s249]
                %271 = vst [vmem:[%s257 + $0x18] sm:%s249] %v270
                %v272 = vld [vmem:[%s256 + $0x54] sm:%s249]
                %273 = vst [vmem:[%s257 + $0x1c] sm:%s249] %v272
                %v274 = vld [vmem:[%s256 + $0x60] sm:%s249]
                %275 = vst [vmem:[%s257 + $0x20] sm:%s249] %v274
                %v276 = vld [vmem:[%s256 + $0x6c] sm:%s249]
                %277 = vst [vmem:[%s257 + $0x24] sm:%s249] %v276
                %v278 = vld [vmem:[%s256 + $0x78] sm:%s249]
                %279 = vst [vmem:[%s257 + $0x28] sm:%s249] %v278
                %v280 = vld [vmem:[%s256 + $0x84] sm:%s249]
                %281 = vst [vmem:[%s257 + $0x2c] sm:%s249] %v280
                %v282 = vld [vmem:[%s256 + $0x90] sm:%s249]
                %283 = vst [vmem:[%s257 + $0x30] sm:%s249] %v282
                %v284 = vld [vmem:[%s256 + $0x9c] sm:%s249]
                %285 = vst [vmem:[%s257 + $0x34] sm:%s249] %v284
                %v286 = vld [vmem:[%s256 + $0xa8] sm:%s249]
                %287 = vst [vmem:[%s257 + $0x38] sm:%s249] %v286
                %v288 = vld [vmem:[%s256 + $0xb4] sm:%s249]
                %289 = vst [vmem:[%s257 + $0x3c] sm:%s249] %v288
              $region53: #{gat_conv_forward.2} parent=47 // loop_footer
                %s255 = sadd.s32 1, %s251
              $region54: #{gat_conv_forward.2} parent=47 // loop_footer_branch
                %250 = sbr.rel target = $region50
              $region55: #{gat_conv_forward.2} parent=47 // loop_exit
                _
            $region48: #{gat_conv_forward.2} parent=39 // pred_fallthru
              _
          $region40: #{gat_conv_forward.2} parent=35 // pred_fallthru
            _
          %342 = vnop
        $region36: #{gat_conv_forward.2} parent=31 // pred_fallthru
          _
      $region32: #{gat_conv_forward.2} parent=5 // pred_fallthru
        _
      %p343 = scmp.le.s32.totalorder 1, %s14
      %p344 = scmp.lt.s32.totalorder %s14, 4
      %p345 = pnand %p343, %p344
      %p346 = pneg %p345
      // Predicated region
      $region74: #{gat_conv_forward.2} parent=5 // pred_check
        _
      $region75: #{gat_conv_forward.2} parent=5 // pred_check_branch
        %348 = sbr.rel (%p345) target = $region77
      $region76: #{gat_conv_forward.2} parent=5 // pred_region
        %s349 = ssub.s32 %s14, 1
        %s350 = sand.u32 %s27, 1
        %s351 = sand.u32 %s27, 1
        %s352 = smul.addr %s351, 64
        %s353 = scalar_lea.vmem [#allocation2], %s352
        // Predicated region
        $region78: #{gat_conv_forward.2} parent=76 // pred_check
          %p354 = pneg %p40
        $region79: #{gat_conv_forward.2} parent=76 // pred_check_branch
          %356 = sbr.rel (%p354) target = $region81
        $region80: #{gat_conv_forward.2} parent=76 // pred_region
          _
        $region81: #{gat_conv_forward.2} parent=76 // pred_fallthru
          _
        %s357 = sand.u32 %s27, 1
        %s358 = sand.u32 %s27, 1
        %s359 = smul.addr %s358, 64
        %s360 = scalar_lea.vmem [#allocation2], %s359
        %p361 = pneg %p40
        %p362 = pneg %p37
        %p363 = pneg %p61
        %p364 = pneg %p58
        %p365 = pneg %p82
        %p366 = pneg %p79
        %p367 = pneg %p103
        %p368 = pneg %p100
        %p369 = pneg %p124
        %p370 = pneg %p121
        %p371 = pneg %p150
        %p372 = pneg %p147
        %s373 = sand.u32 %s137, 1
        %s374 = sand.u32 %s137, 1
        %s375 = smul.addr %s374, 32
        %s376 = scalar_lea.vmem [#allocation3], %s375
        %p377 = pneg %p176
        %p378 = pneg %p173
        %p379 = scmp.lt.s32.totalorder %s19, 2
        %s380 = scalar_select %p379, %s19, 2
        %s381 = smul.addr %s380, 4
        %s382 = scalar_lea.vmem %s6, %s381
        %p383 = pneg %p202
        %p384 = pneg %p199
        %p385 = scmp.lt.s32.totalorder %s19, 2
        %s386 = scalar_select %p385, %s19, 2
        %s387 = smul.addr %s386, 4
        %s388 = scalar_lea.vmem %s7, %s387
        %p389 = scmp.lt.s32.totalorder %s19, 2
        %s390 = scalar_select %p389, %s19, 2
        %s391 = smul.addr %s390, 4
        %s392 = scalar_lea.vmem %s6, %s391
        %p393 = scmp.lt.s32.totalorder %s19, 2
        %s394 = scalar_select %p393, %s19, 2
        %s395 = smul.addr %s394, 4
        %s396 = scalar_lea.vmem %s7, %s395
        %v398 = vld [vmem:[%s1] sm:$0xf]
        %v399 = vld [vmem:[%s1 + $0x4] sm:$0xf]
        %v400 = vld [vmem:[%s1 + $0x8] sm:$0xf]
        %v401 = vld [vmem:[%s1 + $0xc] sm:$0xf]
        %v402 = vld [vmem:[%s1 + $0x10] sm:$0xf]
        %v403 = vld [vmem:[%s1 + $0x14] sm:$0xf]
        %v404 = vld [vmem:[%s1 + $0x18] sm:$0xf]
        %v405 = vld [vmem:[%s1 + $0x1c] sm:$0xf]
        %v406 = vld [vmem:[%s353] sm:$0xf]
        %v407 = vld [vmem:[%s353 + $0x4] sm:$0xf]
        %v408 = vld [vmem:[%s353 + $0x8] sm:$0xf]
        %v409 = vld [vmem:[%s353 + $0xc] sm:$0xf]
        %v410 = vld [vmem:[%s353 + $0x10] sm:$0xf]
        %v411 = vld [vmem:[%s353 + $0x14] sm:$0xf]
        %v412 = vld [vmem:[%s353 + $0x18] sm:$0xf]
        %v413 = vld [vmem:[%s353 + $0x1c] sm:$0xf]
        %v414 = vld [vmem:[%s353 + $0x20] sm:$0xf]
        %v415 = vld [vmem:[%s353 + $0x24] sm:$0xf]
        %v416 = vld [vmem:[%s353 + $0x28] sm:$0xf]
        %v417 = vld [vmem:[%s353 + $0x2c] sm:$0xf]
        %v418 = vld [vmem:[%s353 + $0x30] sm:$0xf]
        %v419 = vld [vmem:[%s353 + $0x34] sm:$0xf]
        %v420 = vld [vmem:[%s353 + $0x38] sm:$0xf]
        %v421 = vld [vmem:[%s353 + $0x3c] sm:$0xf]
        %v422 = vld [vmem:[%s4] sm:$0xff]
        %v423 = vld [vmem:[%s4 + $0x8] sm:$0xff]
        %v424 = vld [vmem:[%s4 + $0x10] sm:$0xff]
        %v425 = vld [vmem:[%s4 + $0x18] sm:$0xff]
        %v426 = vld [vmem:[%s4 + $0x20] sm:$0xff]
        %v427 = vld [vmem:[%s4 + $0x28] sm:$0xff]
        %v428 = vld [vmem:[%s4 + $0x30] sm:$0xff]
        %v429 = vld [vmem:[%s4 + $0x38] sm:$0xff]
        %431 = vset.pattern.permute.xlu0 0
        %432 = vperm.xlu0 %431, %v422
        %v433 = vpop.permute.xlu0 %432
        %436 = vset.pattern.permute.xlu0 0
        %437 = vperm.xlu0 %436, %v423
        %v438 = vpop.permute.xlu0 %437
        %441 = vset.pattern.permute.xlu0 0
        %442 = vperm.xlu0 %441, %v424
        %v443 = vpop.permute.xlu0 %442
        %446 = vset.pattern.permute.xlu0 0
        %447 = vperm.xlu0 %446, %v425
        %v448 = vpop.permute.xlu0 %447
        %451 = vset.pattern.permute.xlu0 0
        %452 = vperm.xlu0 %451, %v426
        %v453 = vpop.permute.xlu0 %452
        %456 = vset.pattern.permute.xlu0 0
        %457 = vperm.xlu0 %456, %v427
        %v458 = vpop.permute.xlu0 %457
        %461 = vset.pattern.permute.xlu0 0
        %462 = vperm.xlu0 %461, %v428
        %v463 = vpop.permute.xlu0 %462
        %466 = vset.pattern.permute.xlu0 0
        %467 = vperm.xlu0 %466, %v429
        %v468 = vpop.permute.xlu0 %467
        %v478 = vunpack.c.l.b16 %v398
        %v479 = vunpack.c.l.b16 %v399
        %v480 = vunpack.c.l.b16 %v400
        %v481 = vunpack.c.l.b16 %v401
        %v482 = vunpack.c.l.b16 %v402
        %v483 = vunpack.c.l.b16 %v403
        %v484 = vunpack.c.l.b16 %v404
        %v485 = vunpack.c.l.b16 %v405
        %v486 = vpack.c.b16 %v479, %v478
        %v487 = vpack.c.b16 %v481, %v480
        %v488 = vpack.c.b16 %v483, %v482
        %v489 = vpack.c.b16 %v485, %v484
        %v510 = vunpack.c.l.b16 %v406
        %v511 = vunpack.c.l.b16 %v407
        %v512 = vunpack.c.l.b16 %v408
        %v513 = vunpack.c.l.b16 %v409
        %v514 = vunpack.c.l.b16 %v410
        %v515 = vunpack.c.l.b16 %v411
        %v516 = vunpack.c.l.b16 %v412
        %v517 = vunpack.c.l.b16 %v413
        %v518 = vunpack.c.l.b16 %v414
        %v519 = vunpack.c.l.b16 %v415
        %v520 = vunpack.c.l.b16 %v416
        %v521 = vunpack.c.l.b16 %v417
        %v522 = vunpack.c.l.b16 %v418
        %v523 = vunpack.c.l.b16 %v419
        %v524 = vunpack.c.l.b16 %v420
        %v525 = vunpack.c.l.b16 %v421
        %v526 = vpack.c.b16 %v511, %v510
        %v527 = vpack.c.b16 %v513, %v512
        %v528 = vpack.c.b16 %v515, %v514
        %v529 = vpack.c.b16 %v517, %v516
        %v530 = vpack.c.b16 %v519, %v518
        %v531 = vpack.c.b16 %v521, %v520
        %v532 = vpack.c.b16 %v523, %v522
        %v533 = vpack.c.b16 %v525, %v524
        %542 = vmatprep.subr.bf16.mxu0 0
        %543 = vmatpush1.bf16.msra.mxu0 %v533
        %544 = vmatprep.subr.bf16.mxu0 0
        %545 = vmatpush1.bf16.msra.mxu0 %v532
        %546 = vmatprep.subr.bf16.mxu0 0
        %547 = vmatpush1.bf16.msra.mxu0 %v531
        %548 = vmatprep.subr.bf16.mxu0 0
        %549 = vmatpush1.bf16.msra.mxu0 %v530
        %550 = vmatprep.subr.bf16.mxu0 0
        %551 = vmatpush1.bf16.msra.mxu0 %v529
        %552 = vmatprep.subr.bf16.mxu0 0
        %553 = vmatpush1.bf16.msra.mxu0 %v528
        %554 = vmatprep.subr.bf16.mxu0 0
        %555 = vmatpush1.bf16.msra.mxu0 %v527
        %556 = vmatprep.subr.bf16.mxu0 0
        %557 = vmatpush1.bf16.msra.mxu0 %v526
        %558 = vmatprep.subr.bf16.mxu0 0
        %559 = vmatpush2.bf16.msra.mxu0 0
        %560 = vmatprep.subr.bf16.mxu0 0
        %561 = vmatpush2.bf16.msra.mxu0 0
        %562 = vmatprep.subr.bf16.mxu0 0
        %563 = vmatpush2.bf16.msra.mxu0 0
        %564 = vmatprep.subr.bf16.mxu0 0
        %565 = vmatpush2.bf16.msra.mxu0 0
        %566 = vmatprep.subr.bf16.mxu0 0
        %567 = vmatpush2.bf16.msra.mxu0 0
        %568 = vmatprep.subr.bf16.mxu0 0
        %569 = vmatpush2.bf16.msra.mxu0 0
        %570 = vmatprep.subr.bf16.mxu0 0
        %571 = vmatpush2.bf16.msra.mxu0 0
        %572 = vmatprep.subr.bf16.mxu0 0
        %573 = vmatpush2.bf16.msra.mxu0 0
        %574 = vmatprep.mubr.bf16.mxu0 0
        %575 = vmatmul.mubr.bf16.gmra.mxu0 %v486
        %v576 = vpop.f32.mrf.mxu0
        %v577 = vadd.f32 %v433, %v576
        %v578 = vpop.f32.mrf.mxu0
        %v579 = vpop.f32.mrf.mxu0
        %v580 = vadd.f32 %v438, %v579
        %v581 = vpop.f32.mrf.mxu0
        %582 = vmatprep.mubr.bf16.mxu0 0
        %583 = vmatmul.mubr.bf16.gmra.mxu0 %v487
        %v584 = vpop.f32.mrf.mxu0
        %v585 = vadd.f32 %v443, %v584
        %v586 = vpop.f32.mrf.mxu0
        %v587 = vpop.f32.mrf.mxu0
        %v588 = vadd.f32 %v448, %v587
        %v589 = vpop.f32.mrf.mxu0
        %590 = vmatprep.mubr.bf16.mxu0 0
        %591 = vmatmul.mubr.bf16.gmra.mxu0 %v488
        %v592 = vpop.f32.mrf.mxu0
        %v593 = vadd.f32 %v453, %v592
        %v594 = vpop.f32.mrf.mxu0
        %v595 = vpop.f32.mrf.mxu0
        %v596 = vadd.f32 %v458, %v595
        %v597 = vpop.f32.mrf.mxu0
        %598 = vmatprep.mubr.bf16.mxu0 0
        %599 = vmatmul.mubr.bf16.gmra.mxu0 %v489
        %v600 = vpop.f32.mrf.mxu0
        %v601 = vadd.f32 %v463, %v600
        %v602 = vpop.f32.mrf.mxu0
        %v603 = vpop.f32.mrf.mxu0
        %v604 = vadd.f32 %v468, %v603
        %v605 = vpop.f32.mrf.mxu0
        %606 = vdwg.mxu0
        %v607 = vpack.c.bf16 %v580, %v577
        %v608 = vpack.c.bf16 %v588, %v585
        %v609 = vpack.c.bf16 %v596, %v593
        %v610 = vpack.c.bf16 %v604, %v601
        %v611 = vld [vmem:[%s2] sm:$0x3]
        %vm612 = vcmask 523264
        %v614 = vsel %vm612, %v611, 0
        %616 = vmatprep.subr.bf16.mxu0 0
        %617 = vmatpush1.bf16.msra.mxu0 0
        %618 = vmatprep.subr.bf16.mxu0 0
        %619 = vmatpush1.bf16.msra.mxu0 0
        %620 = vmatprep.subr.bf16.mxu0 0
        %621 = vmatpush1.bf16.msra.mxu0 0
        %622 = vmatprep.subr.bf16.mxu0 0
        %623 = vmatpush1.bf16.msra.mxu0 0
        %624 = vmatprep.subr.bf16.mxu0 0
        %625 = vmatpush1.bf16.msra.mxu0 %v610
        %626 = vmatprep.subr.bf16.mxu0 0
        %627 = vmatpush1.bf16.msra.mxu0 %v609
        %628 = vmatprep.subr.bf16.mxu0 0
        %629 = vmatpush1.bf16.msra.mxu0 %v608
        %630 = vmatprep.subr.bf16.mxu0 0
        %631 = vmatpush1.bf16.msra.mxu0 %v607
        %632 = vmatprep.subr.bf16.mxu0 0
        %633 = vmatpush2.bf16.msra.mxu0 0
        %634 = vmatprep.subr.bf16.mxu0 0
        %635 = vmatpush2.bf16.msra.mxu0 0
        %636 = vmatprep.subr.bf16.mxu0 0
        %637 = vmatpush2.bf16.msra.mxu0 0
        %638 = vmatprep.subr.bf16.mxu0 0
        %639 = vmatpush2.bf16.msra.mxu0 0
        %640 = vmatprep.subr.bf16.mxu0 0
        %641 = vmatpush2.bf16.msra.mxu0 0
        %642 = vmatprep.subr.bf16.mxu0 0
        %643 = vmatpush2.bf16.msra.mxu0 0
        %644 = vmatprep.subr.bf16.mxu0 0
        %645 = vmatpush2.bf16.msra.mxu0 0
        %646 = vmatprep.subr.bf16.mxu0 0
        %647 = vmatpush2.bf16.msra.mxu0 0
        %648 = vmatprep.mubr.bf16.mxu0 0
        %649 = vmatmul.mubr.bf16.gmra.mxu0 %v614
        %v650 = vpop.f32.mrf.mxu0
        %v651 = vadd.f32 0.0, %v650
        %v652 = vpop.f32.mrf.mxu0
        %v653 = vpop.f32.mrf.mxu0
        %v654 = vpop.f32.mrf.mxu0
        %655 = vdwg.mxu0
        %656 = vst [vmem:[%s392] sm:$0xf] %v651
        %v657 = vld [vmem:[%s3] sm:$0x3]
        %v659 = vsel %vm612, %v657, 0
        %661 = vmatprep.subr.bf16.mxu0 0
        %662 = vmatpush1.bf16.msra.mxu0 0
        %663 = vmatprep.subr.bf16.mxu0 0
        %664 = vmatpush1.bf16.msra.mxu0 0
        %665 = vmatprep.subr.bf16.mxu0 0
        %666 = vmatpush1.bf16.msra.mxu0 0
        %667 = vmatprep.subr.bf16.mxu0 0
        %668 = vmatpush1.bf16.msra.mxu0 0
        %669 = vmatprep.subr.bf16.mxu0 0
        %670 = vmatpush1.bf16.msra.mxu0 %v610
        %671 = vmatprep.subr.bf16.mxu0 0
        %672 = vmatpush1.bf16.msra.mxu0 %v609
        %673 = vmatprep.subr.bf16.mxu0 0
        %674 = vmatpush1.bf16.msra.mxu0 %v608
        %675 = vmatprep.subr.bf16.mxu0 0
        %676 = vmatpush1.bf16.msra.mxu0 %v607
        %677 = vmatprep.subr.bf16.mxu0 0
        %678 = vmatpush2.bf16.msra.mxu0 0
        %679 = vmatprep.subr.bf16.mxu0 0
        %680 = vmatpush2.bf16.msra.mxu0 0
        %681 = vmatprep.subr.bf16.mxu0 0
        %682 = vmatpush2.bf16.msra.mxu0 0
        %683 = vmatprep.subr.bf16.mxu0 0
        %684 = vmatpush2.bf16.msra.mxu0 0
        %685 = vmatprep.subr.bf16.mxu0 0
        %686 = vmatpush2.bf16.msra.mxu0 0
        %687 = vmatprep.subr.bf16.mxu0 0
        %688 = vmatpush2.bf16.msra.mxu0 0
        %689 = vmatprep.subr.bf16.mxu0 0
        %690 = vmatpush2.bf16.msra.mxu0 0
        %691 = vmatprep.subr.bf16.mxu0 0
        %692 = vmatpush2.bf16.msra.mxu0 0
        %693 = vmatprep.mubr.bf16.mxu0 0
        %694 = vmatmul.mubr.bf16.gmra.mxu0 %v659
        %v695 = vpop.f32.mrf.mxu0
        %v696 = vadd.f32 0.0, %v695
        %v697 = vpop.f32.mrf.mxu0
        %v698 = vpop.f32.mrf.mxu0
        %v699 = vpop.f32.mrf.mxu0
        %700 = vdwg.mxu0
        %701 = vst [vmem:[%s396] sm:$0xf] %v696
        %v706 = vunpack.c.l.b16 %v607
        %v707 = vunpack.c.h.b16 %v607
        %v708 = vunpack.c.l.b16 %v608
        %v709 = vunpack.c.h.b16 %v608
        %v710 = vunpack.c.l.b16 %v609
        %v711 = vunpack.c.h.b16 %v609
        %v712 = vunpack.c.l.b16 %v610
        %v713 = vunpack.c.h.b16 %v610
        %v714 = vpack.c.b16 %v706, %v706
        %v715 = vpack.c.b16 %v707, %v707
        %v716 = vpack.c.b16 %v708, %v708
        %v717 = vpack.c.b16 %v709, %v709
        %v718 = vpack.c.b16 %v710, %v710
        %v719 = vpack.c.b16 %v711, %v711
        %v720 = vpack.c.b16 %v712, %v712
        %v721 = vpack.c.b16 %v713, %v713
        %730 = vst [vmem:[%s376] sm:$0xf] %v714
        %731 = vst [vmem:[%s376 + $0x4] sm:$0xf] %v715
        %732 = vst [vmem:[%s376 + $0x8] sm:$0xf] %v716
        %733 = vst [vmem:[%s376 + $0xc] sm:$0xf] %v717
        %734 = vst [vmem:[%s376 + $0x10] sm:$0xf] %v718
        %735 = vst [vmem:[%s376 + $0x14] sm:$0xf] %v719
        %736 = vst [vmem:[%s376 + $0x18] sm:$0xf] %v720
        %737 = vst [vmem:[%s376 + $0x1c] sm:$0xf] %v721
        %s738 = sand.u32 %s137, 1
        %s739 = sand.u32 %s137, 1
        %s740 = smul.addr %s739, 32
        %s741 = scalar_lea.vmem [#allocation3], %s740
        %p742 = scmp.lt.s32.totalorder %s19, 2
        %s743 = scalar_select %p742, %s19, 2
        %s744 = smul.addr %s743, 4
        %s745 = scalar_lea.vmem %s6, %s744
        %p746 = scmp.lt.s32.totalorder %s19, 2
        %s747 = scalar_select %p746, %s19, 2
        %s748 = smul.addr %s747, 4
        %s749 = scalar_lea.vmem %s7, %s748
        // Predicated region
        $region82: #{gat_conv_forward.2} parent=76 // pred_check
          %p750 = pneg %p147
        $region83: #{gat_conv_forward.2} parent=76 // pred_check_branch
          %752 = sbr.rel (%p750) target = $region85
        $region84: #{gat_conv_forward.2} parent=76 // pred_region
          %s753 = smul.addr %s19, 4
          %s754 = scalar_lea.vmem %s5, %s753
          // Predicated region
          $region86: #{gat_conv_forward.2} parent=84 // pred_check
            _
          $region87: #{gat_conv_forward.2} parent=84 // pred_check_branch
            %756 = sbr.rel (0) target = $region89
          $region88: #{gat_conv_forward.2} parent=84 // pred_region
            // Predicated region
            $region90: #{gat_conv_forward.2} parent=88 // pred_check
              _
            $region91: #{gat_conv_forward.2} parent=88 // pred_check_branch
              %758 = sbr.rel target = $region93
            $region92: #{gat_conv_forward.2} parent=88 // pred_region
              // Predicated region
              $region105: #{gat_conv_forward.2} parent=92 // pred_check
                _
              $region106: #{gat_conv_forward.2} parent=92 // pred_check_branch
                %788 = sbr.rel (0) target = $region108
              $region107: #{gat_conv_forward.2} parent=92 // pred_region
                loop: start=0, step=1, limit=1
                $region109: #{gat_conv_forward.2} parent=107 // loop_pre_header
                  _
                $region110: #{gat_conv_forward.2} parent=107 // loop_header
                  %s790 = sphi 0, %s794
                  %p791 = scmp.ge.s32.totalorder %s790, 1
                  %s795 = sphi %s741, %s741
                  %s796 = sphi %s754, %s754
                $region111: #{gat_conv_forward.2} parent=107 // loop_header_branch
                  %793 = sbr.rel (%p791) target = $region115
                $region112: #{gat_conv_forward.2} parent=107 // loop_body
                  _
                $region113: #{gat_conv_forward.2} parent=107 // loop_footer
                  %s794 = sadd.s32 1, %s790
                $region114: #{gat_conv_forward.2} parent=107 // loop_footer_branch
                  %789 = sbr.rel target = $region110
                $region115: #{gat_conv_forward.2} parent=107 // loop_exit
                  _
                %s798 = ssub.s32 16, 1
                loop: start=0, step=1, limit=1
                $region116: #{gat_conv_forward.2} parent=107 // loop_pre_header
                  _
                $region117: #{gat_conv_forward.2} parent=107 // loop_header
                  %s800 = sphi 0, %s804
                  %p801 = scmp.ge.s32.totalorder %s800, 1
                  %s805 = sphi %s741, %s741
                  %s806 = sphi %s754, %s754
                $region118: #{gat_conv_forward.2} parent=107 // loop_header_branch
                  %803 = sbr.rel (%p801) target = $region122
                $region119: #{gat_conv_forward.2} parent=107 // loop_body
                  %v807 = vld [vmem:[%s805] sm:%s798]
                  %808 = vst [vmem:[%s806] sm:%s798] %v807
                  %v809 = vld [vmem:[%s805 + $0x4] sm:%s798]
                  %810 = vst [vmem:[%s806 + $0xc] sm:%s798] %v809
                  %v811 = vld [vmem:[%s805 + $0x8] sm:%s798]
                  %812 = vst [vmem:[%s806 + $0x18] sm:%s798] %v811
                  %v813 = vld [vmem:[%s805 + $0xc] sm:%s798]
                  %814 = vst [vmem:[%s806 + $0x24] sm:%s798] %v813
                  %v815 = vld [vmem:[%s805 + $0x10] sm:%s798]
                  %816 = vst [vmem:[%s806 + $0x30] sm:%s798] %v815
                  %v817 = vld [vmem:[%s805 + $0x14] sm:%s798]
                  %818 = vst [vmem:[%s806 + $0x3c] sm:%s798] %v817
                  %v819 = vld [vmem:[%s805 + $0x18] sm:%s798]
                  %820 = vst [vmem:[%s806 + $0x48] sm:%s798] %v819
                  %v821 = vld [vmem:[%s805 + $0x1c] sm:%s798]
                  %822 = vst [vmem:[%s806 + $0x54] sm:%s798] %v821
                $region120: #{gat_conv_forward.2} parent=107 // loop_footer
                  %s804 = sadd.s32 1, %s800
                $region121: #{gat_conv_forward.2} parent=107 // loop_footer_branch
                  %799 = sbr.rel target = $region117
                $region122: #{gat_conv_forward.2} parent=107 // loop_exit
                  _
              $region108: #{gat_conv_forward.2} parent=92 // pred_fallthru
                _
            $region93: #{gat_conv_forward.2} parent=88 // pred_fallthru
              _
            // Predicated region
            $region94: #{gat_conv_forward.2} parent=88 // pred_check
              _
            $region95: #{gat_conv_forward.2} parent=88 // pred_check_branch
              %760 = sbr.rel (0) target = $region97
            $region96: #{gat_conv_forward.2} parent=88 // pred_region
              %s762 = ssub.s32 16, 1
              loop: start=0, step=1, limit=1
              $region98: #{gat_conv_forward.2} parent=96 // loop_pre_header
                _
              $region99: #{gat_conv_forward.2} parent=96 // loop_header
                %s764 = sphi 0, %s768
                %p765 = scmp.ge.s32.totalorder %s764, 1
                %s769 = sphi %s741, %s741
                %s770 = sphi %s754, %s754
              $region100: #{gat_conv_forward.2} parent=96 // loop_header_branch
                %767 = sbr.rel (%p765) target = $region104
              $region101: #{gat_conv_forward.2} parent=96 // loop_body
                %v771 = vld [vmem:[%s769] sm:%s762]
                %772 = vst [vmem:[%s770] sm:%s762] %v771
                %v773 = vld [vmem:[%s769 + $0x4] sm:%s762]
                %774 = vst [vmem:[%s770 + $0xc] sm:%s762] %v773
                %v775 = vld [vmem:[%s769 + $0x8] sm:%s762]
                %776 = vst [vmem:[%s770 + $0x18] sm:%s762] %v775
                %v777 = vld [vmem:[%s769 + $0xc] sm:%s762]
                %778 = vst [vmem:[%s770 + $0x24] sm:%s762] %v777
                %v779 = vld [vmem:[%s769 + $0x10] sm:%s762]
                %780 = vst [vmem:[%s770 + $0x30] sm:%s762] %v779
                %v781 = vld [vmem:[%s769 + $0x14] sm:%s762]
                %782 = vst [vmem:[%s770 + $0x3c] sm:%s762] %v781
                %v783 = vld [vmem:[%s769 + $0x18] sm:%s762]
                %784 = vst [vmem:[%s770 + $0x48] sm:%s762] %v783
                %v785 = vld [vmem:[%s769 + $0x1c] sm:%s762]
                %786 = vst [vmem:[%s770 + $0x54] sm:%s762] %v785
              $region102: #{gat_conv_forward.2} parent=96 // loop_footer
                %s768 = sadd.s32 1, %s764
              $region103: #{gat_conv_forward.2} parent=96 // loop_footer_branch
                %763 = sbr.rel target = $region99
              $region104: #{gat_conv_forward.2} parent=96 // loop_exit
                _
            $region97: #{gat_conv_forward.2} parent=88 // pred_fallthru
              _
          $region89: #{gat_conv_forward.2} parent=84 // pred_fallthru
            _
          %823 = vnop
        $region85: #{gat_conv_forward.2} parent=76 // pred_fallthru
          _
        // Predicated region
        $region123: #{gat_conv_forward.2} parent=76 // pred_check
          %p824 = pneg %p173
        $region124: #{gat_conv_forward.2} parent=76 // pred_check_branch
          %826 = sbr.rel (%p824) target = $region126
        $region125: #{gat_conv_forward.2} parent=76 // pred_region
          _
        $region126: #{gat_conv_forward.2} parent=76 // pred_fallthru
          _
        // Predicated region
        $region127: #{gat_conv_forward.2} parent=76 // pred_check
          %p827 = pneg %p199
        $region128: #{gat_conv_forward.2} parent=76 // pred_check_branch
          %829 = sbr.rel (%p827) target = $region130
        $region129: #{gat_conv_forward.2} parent=76 // pred_region
          _
        $region130: #{gat_conv_forward.2} parent=76 // pred_fallthru
          _
      $region77: #{gat_conv_forward.2} parent=5 // pred_fallthru
        _
      %p830 = scmp.le.s32.totalorder 2, %s14
      // Predicated region
      $region131: #{gat_conv_forward.2} parent=5 // pred_check
        %p831 = pneg %p830
      $region132: #{gat_conv_forward.2} parent=5 // pred_check_branch
        %833 = sbr.rel (%p831) target = $region134
      $region133: #{gat_conv_forward.2} parent=5 // pred_region
        %s834 = ssub.s32 %s14, 2
        // Predicated region
        $region135: #{gat_conv_forward.2} parent=133 // pred_check
          %p835 = pneg %p153
        $region136: #{gat_conv_forward.2} parent=133 // pred_check_branch
          %837 = sbr.rel (%p835) target = $region138
        $region137: #{gat_conv_forward.2} parent=133 // pred_region
          %s838 = sand.u32 %s138, 1
          %s839 = sand.u32 %s138, 1
          %s840 = smul.addr %s839, 32
          %s841 = scalar_lea.vmem [#allocation3], %s840
        $region138: #{gat_conv_forward.2} parent=133 // pred_fallthru
          _
        // Predicated region
        $region139: #{gat_conv_forward.2} parent=133 // pred_check
          %p842 = pneg %p179
        $region140: #{gat_conv_forward.2} parent=133 // pred_check_branch
          %844 = sbr.rel (%p842) target = $region142
        $region141: #{gat_conv_forward.2} parent=133 // pred_region
          %p845 = scmp.lt.s32.totalorder %s20, 2
          %s846 = scalar_select %p845, %s20, 2
          %s847 = smul.addr %s846, 4
          %s848 = scalar_lea.vmem %s6, %s847
        $region142: #{gat_conv_forward.2} parent=133 // pred_fallthru
          _
        // Predicated region
        $region143: #{gat_conv_forward.2} parent=133 // pred_check
          %p849 = pneg %p205
        $region144: #{gat_conv_forward.2} parent=133 // pred_check_branch
          %851 = sbr.rel (%p849) target = $region146
        $region145: #{gat_conv_forward.2} parent=133 // pred_region
          %p852 = scmp.lt.s32.totalorder %s20, 2
          %s853 = scalar_select %p852, %s20, 2
          %s854 = smul.addr %s853, 4
          %s855 = scalar_lea.vmem %s7, %s854
        $region146: #{gat_conv_forward.2} parent=133 // pred_fallthru
          _
      $region134: #{gat_conv_forward.2} parent=5 // pred_fallthru
        _
    $region6: #{gat_conv_forward.2} parent=1 // loop_footer
      %s18 = sadd.s32 1, %s14
    $region7: #{gat_conv_forward.2} parent=1 // loop_footer_branch
      %13 = sbr.rel target = $region3
    $region8: #{gat_conv_forward.2} parent=1 // loop_exit
      _

// kernel: gat_conv_forward.3
$region0: #{gat_conv_forward.3}
  #allocation0 [shape = 'u32[]', space=smem, size = 0x4, offset = 0x4, fixed_abs, tag = 'smem constant byte address 0x4 - core index']
  #allocation1 [shape = 'u32[144,128]{1,0:T(1,128)}', space=vmem, size = 0x12000, scoped, tag = 'internal scratch']
  #allocation2 [shape = 'f32[64,128]{1,0:T(8,128)}', space=vmem, size = 0x8000, scoped, tag = 'scratch operand']
  %s0 = inlined_call_operand.vmem [shape: f32[384,4], index: 0, kind: input, shape index: {}]
  %s1 = inlined_call_operand.vmem [shape: f32[4,384], index: 1, kind: input, shape index: {}]
  %s2 = inlined_call_operand.vmem [shape: f32[1,4], index: 2, kind: input, shape index: {}]
  %s3 = inlined_call_operand.vmem [shape: bf16[64,384], index: 3, kind: input, shape index: {}]
  %s4 = inlined_call_operand.vmem [shape: s8[384,384], index: 4, kind: input, shape index: {}]
  %s5 = inlined_call_operand.vmem [shape: f32[32,384], index: 5, kind: output, shape index: {}]
  %s6 = sld [smem:[#allocation0]]
  $region174: #{gat_conv_forward.3} parent=0
    _
  %s8 = ssub.s32 1, %s6
  %s9 = scalar_select 0, %s8, %s6
  $region1: #{gat_conv_forward.3} parent=0
    #allocation3 [shape = 'u8[32768]{0}', space=vmem, size = 0x8000, scoped, tag = 'input window, operand 3']
    #allocation4 [shape = 'u8[32768]{0}', space=vmem, size = 0x8000, scoped, tag = 'input window, operand 4']
    #allocation5 [shape = 'u8[32768]{0}', space=vmem, size = 0x8000, scoped, tag = 'output window, operand 0']
    loop: start=0, step=1, limit=11
    $region2: #{gat_conv_forward.3} parent=1 // loop_pre_header
      _
    $region3: #{gat_conv_forward.3} parent=1 // loop_header
      %s11 = sphi 0, %s15
      %p12 = scmp.ge.s32.totalorder %s11, 11
      %s18 = sphi 0, %s30
      %s19 = sphi 0, %s26
      %s20 = sphi 0, %s18
      %s21 = sphi 0, %s19
      %s22 = sphi 0, %s20
      %s23 = sphi 0, %s21
      %s33 = sphi 0, %s35
      %s36 = sphi 0, %s33
      %s37 = sphi 0, %s36
      %s53 = sphi 0, %s37
      %s59 = sphi 0, %s61
      %s62 = sphi 0, %s59
      %s63 = sphi 0, %s62
      %s79 = sphi 0, %s63
      %s83 = sphi 0, %s83
      %s85 = sphi 0, %s83
      %s86 = sphi 0, %s85
      %s100 = sphi 0, %s86
      %s106 = sphi 0, %s108
      %s109 = sphi 0, %s106
      %s110 = sphi 0, %s109
      %s126 = sphi 0, %s110
      %s134 = sphi 0, %s136
      %s137 = sphi 0, %s134
      %s138 = sphi 0, %s137
      %s154 = sphi 0, %s138
      %s160 = sphi 0, %s162
      %s163 = sphi 0, %s160
      %s164 = sphi 0, %s163
      %s180 = sphi 0, %s164
    $region4: #{gat_conv_forward.3} parent=1 // loop_header_branch
      %14 = sbr.rel (%p12) target = $region8
    $region5: #{gat_conv_forward.3} parent=1 // loop_body
      %s16 = ssub.s32 %s11, 1
      %s17 = ssub.s32 %s11, 2
      %s24 = sadd.s32 1, %s19
      %p25 = scmp.ge.s32.totalorder %s24, 3
      %s26 = scalar_select %p25, 0, %s24
      %s27 = sadd.s32 1, %s18
      %s28 = scalar_select %p25, %s27, %s18
      %p29 = scmp.ge.s32.totalorder %s28, 3
      %s30 = scalar_select %p29, 0, %s28
      %s31 = ssub.s32 %s19, %s26
      %p32 = scmp.eq.s32.totalorder %s31, 0
      %s34 = sadd.s32 %s33, 1
      %s35 = scalar_select %p32, %s33, %s34
      %p38 = pneg %p32
      %p39 = scmp.eq.s32.totalorder %s11, 8
      %p40 = por %p38, %p39
      %p41 = scmp.ne.s32.totalorder %s33, %s36
      %p42 = scmp.eq.s32.totalorder %s11, 0
      %p43 = por %p41, %p42
      %p44 = scmp.ne.s32.totalorder %s33, %s36
      %p45 = scmp.eq.s32.totalorder %s16, 8
      %p46 = por %p44, %p45
      %p47 = scmp.ne.s32.totalorder %s36, %s37
      %p48 = scmp.eq.s32.totalorder %s16, 0
      %p49 = por %p47, %p48
      %p50 = scmp.ne.s32.totalorder %s36, %s37
      %p51 = scmp.eq.s32.totalorder %s17, 8
      %p52 = por %p50, %p51
      %p54 = scmp.ne.s32.totalorder %s37, %s53
      %p55 = scmp.eq.s32.totalorder %s17, 0
      %p56 = por %p54, %p55
      %s57 = ssub.s32 %s18, %s30
      %p58 = scmp.eq.s32.totalorder %s57, 0
      %s60 = sadd.s32 %s59, 1
      %s61 = scalar_select %p58, %s59, %s60
      %p64 = pneg %p58
      %p65 = scmp.eq.s32.totalorder %s11, 8
      %p66 = por %p64, %p65
      %p67 = scmp.ne.s32.totalorder %s59, %s62
      %p68 = scmp.eq.s32.totalorder %s11, 0
      %p69 = por %p67, %p68
      %p70 = scmp.ne.s32.totalorder %s59, %s62
      %p71 = scmp.eq.s32.totalorder %s16, 8
      %p72 = por %p70, %p71
      %p73 = scmp.ne.s32.totalorder %s62, %s63
      %p74 = scmp.eq.s32.totalorder %s16, 0
      %p75 = por %p73, %p74
      %p76 = scmp.ne.s32.totalorder %s62, %s63
      %p77 = scmp.eq.s32.totalorder %s17, 8
      %p78 = por %p76, %p77
      %p80 = scmp.ne.s32.totalorder %s63, %s79
      %p81 = scmp.eq.s32.totalorder %s17, 0
      %p82 = por %p80, %p81
      %s84 = sadd.s32 %s83, 1
      %p87 = scmp.eq.s32.totalorder %s11, 8
      %p88 = scmp.ne.s32.totalorder %s83, %s85
      %p89 = scmp.eq.s32.totalorder %s11, 0
      %p90 = por %p88, %p89
      %p91 = scmp.ne.s32.totalorder %s83, %s85
      %p92 = scmp.eq.s32.totalorder %s16, 8
      %p93 = por %p91, %p92
      %p94 = scmp.ne.s32.totalorder %s85, %s86
      %p95 = scmp.eq.s32.totalorder %s16, 0
      %p96 = por %p94, %p95
      %p97 = scmp.ne.s32.totalorder %s85, %s86
      %p98 = scmp.eq.s32.totalorder %s17, 8
      %p99 = por %p97, %p98
      %p101 = scmp.ne.s32.totalorder %s86, %s100
      %p102 = scmp.eq.s32.totalorder %s17, 0
      %p103 = por %p101, %p102
      %s104 = ssub.s32 %s19, %s26
      %p105 = scmp.eq.s32.totalorder %s104, 0
      %s107 = sadd.s32 %s106, 1
      %s108 = scalar_select %p105, %s106, %s107
      %p111 = pneg %p105
      %p112 = scmp.eq.s32.totalorder %s11, 8
      %p113 = por %p111, %p112
      %p114 = scmp.ne.s32.totalorder %s106, %s109
      %p115 = scmp.eq.s32.totalorder %s11, 0
      %p116 = por %p114, %p115
      %p117 = scmp.ne.s32.totalorder %s106, %s109
      %p118 = scmp.eq.s32.totalorder %s16, 8
      %p119 = por %p117, %p118
      %p120 = scmp.ne.s32.totalorder %s109, %s110
      %p121 = scmp.eq.s32.totalorder %s16, 0
      %p122 = por %p120, %p121
      %p123 = scmp.ne.s32.totalorder %s109, %s110
      %p124 = scmp.eq.s32.totalorder %s17, 8
      %p125 = por %p123, %p124
      %p127 = scmp.ne.s32.totalorder %s110, %s126
      %p128 = scmp.eq.s32.totalorder %s17, 0
      %p129 = por %p127, %p128
      %s130 = ssub.s32 %s19, %s26
      %s131 = ssub.s32 %s18, %s30
      %s132 = sor.u32 %s130, %s131
      %p133 = scmp.eq.s32.totalorder %s132, 0
      %s135 = sadd.s32 %s134, 1
      %s136 = scalar_select %p133, %s134, %s135
      %p139 = pneg %p133
      %p140 = scmp.eq.s32.totalorder %s11, 8
      %p141 = por %p139, %p140
      %p142 = scmp.ne.s32.totalorder %s134, %s137
      %p143 = scmp.eq.s32.totalorder %s11, 0
      %p144 = por %p142, %p143
      %p145 = scmp.ne.s32.totalorder %s134, %s137
      %p146 = scmp.eq.s32.totalorder %s16, 8
      %p147 = por %p145, %p146
      %p148 = scmp.ne.s32.totalorder %s137, %s138
      %p149 = scmp.eq.s32.totalorder %s16, 0
      %p150 = por %p148, %p149
      %p151 = scmp.ne.s32.totalorder %s137, %s138
      %p152 = scmp.eq.s32.totalorder %s17, 8
      %p153 = por %p151, %p152
      %p155 = scmp.ne.s32.totalorder %s138, %s154
      %p156 = scmp.eq.s32.totalorder %s17, 0
      %p157 = por %p155, %p156
      %s158 = ssub.s32 %s18, %s30
      %p159 = scmp.eq.s32.totalorder %s158, 0
      %s161 = sadd.s32 %s160, 1
      %s162 = scalar_select %p159, %s160, %s161
      %p165 = pneg %p159
      %p166 = scmp.eq.s32.totalorder %s11, 8
      %p167 = por %p165, %p166
      %p168 = scmp.ne.s32.totalorder %s160, %s163
      %p169 = scmp.eq.s32.totalorder %s11, 0
      %p170 = por %p168, %p169
      %p171 = scmp.ne.s32.totalorder %s160, %s163
      %p172 = scmp.eq.s32.totalorder %s16, 8
      %p173 = por %p171, %p172
      %p174 = scmp.ne.s32.totalorder %s163, %s164
      %p175 = scmp.eq.s32.totalorder %s16, 0
      %p176 = por %p174, %p175
      %p177 = scmp.ne.s32.totalorder %s163, %s164
      %p178 = scmp.eq.s32.totalorder %s17, 8
      %p179 = por %p177, %p178
      %p181 = scmp.ne.s32.totalorder %s164, %s180
      %p182 = scmp.eq.s32.totalorder %s17, 0
      %p183 = por %p181, %p182
      %p184 = scmp.le.s32.totalorder 1, %s11
      %p185 = scmp.lt.s32.totalorder %s11, 10
      %p186 = pnand %p184, %p185
      %p187 = pneg %p186
      // Predicated region
      $region9: #{gat_conv_forward.3} parent=5 // pred_check
        _
      $region10: #{gat_conv_forward.3} parent=5 // pred_check_branch
        %189 = sbr.rel (%p186) target = $region12
      $region11: #{gat_conv_forward.3} parent=5 // pred_region
        %s190 = ssub.s32 %s11, 1
        // Predicated region
        $region13: #{gat_conv_forward.3} parent=11 // pred_check
          %p191 = pneg %p96
        $region14: #{gat_conv_forward.3} parent=11 // pred_check_branch
          %193 = sbr.rel (%p191) target = $region16
        $region15: #{gat_conv_forward.3} parent=11 // pred_region
          _
        $region16: #{gat_conv_forward.3} parent=11 // pred_fallthru
          _
      $region12: #{gat_conv_forward.3} parent=5 // pred_fallthru
        _
      %p194 = scmp.lt.s32.totalorder %s11, 9
      // Predicated region
      $region17: #{gat_conv_forward.3} parent=5 // pred_check
        %p195 = pneg %p194
      $region18: #{gat_conv_forward.3} parent=5 // pred_check_branch
        %197 = sbr.rel (%p195) target = $region20
      $region19: #{gat_conv_forward.3} parent=5 // pred_region
        // Predicated region
        $region21: #{gat_conv_forward.3} parent=19 // pred_check
          %p198 = pneg %p43
        $region22: #{gat_conv_forward.3} parent=19 // pred_check_branch
          %200 = sbr.rel (%p198) target = $region24
        $region23: #{gat_conv_forward.3} parent=19 // pred_region
          %s201 = smul.u32 16, %s19
          %p202 = scmp.lt.s32.totalorder %s201, 47
          %s203 = scalar_select %p202, %s201, 47
          %s204 = smul.addr %s203, 8
          %s205 = scalar_lea.vmem %s0, %s204
          %s206 = smul.u32 16, %s19
        $region24: #{gat_conv_forward.3} parent=19 // pred_fallthru
          _
        // Predicated region
        $region25: #{gat_conv_forward.3} parent=19 // pred_check
          %p207 = pneg %p69
        $region26: #{gat_conv_forward.3} parent=19 // pred_check_branch
          %209 = sbr.rel (%p207) target = $region28
        $region27: #{gat_conv_forward.3} parent=19 // pred_region
          %p210 = scmp.lt.s32.totalorder %s18, 2
          %s211 = scalar_select %p210, %s18, 2
          %s212 = smul.addr %s211, 4
          %s213 = scalar_lea.vmem %s1, %s212
        $region28: #{gat_conv_forward.3} parent=19 // pred_fallthru
          _
        // Predicated region
        $region29: #{gat_conv_forward.3} parent=19 // pred_check
          %p214 = pneg %p116
        $region30: #{gat_conv_forward.3} parent=19 // pred_check_branch
          %216 = sbr.rel (%p214) target = $region32
        $region31: #{gat_conv_forward.3} parent=19 // pred_region
          %s217 = sand.u32 %s106, 1
          %s218 = sand.u32 %s106, 1
          %s219 = smul.addr %s218, 32
          %s220 = scalar_lea.vmem [#allocation3], %s219
          %s221 = smul.addr %s19, 4
          %s222 = scalar_lea.vmem %s3, %s221
          // Predicated region
          $region33: #{gat_conv_forward.3} parent=31 // pred_check
            _
          $region34: #{gat_conv_forward.3} parent=31 // pred_check_branch
            %224 = sbr.rel (0) target = $region36
          $region35: #{gat_conv_forward.3} parent=31 // pred_region
            // Predicated region
            $region37: #{gat_conv_forward.3} parent=35 // pred_check
              _
            $region38: #{gat_conv_forward.3} parent=35 // pred_check_branch
              %226 = sbr.rel target = $region40
            $region39: #{gat_conv_forward.3} parent=35 // pred_region
              // Predicated region
              $region52: #{gat_conv_forward.3} parent=39 // pred_check
                _
              $region53: #{gat_conv_forward.3} parent=39 // pred_check_branch
                %256 = sbr.rel (0) target = $region55
              $region54: #{gat_conv_forward.3} parent=39 // pred_region
                loop: start=0, step=1, limit=1
                $region56: #{gat_conv_forward.3} parent=54 // loop_pre_header
                  _
                $region57: #{gat_conv_forward.3} parent=54 // loop_header
                  %s258 = sphi 0, %s262
                  %p259 = scmp.ge.s32.totalorder %s258, 1
                  %s263 = sphi %s222, %s222
                  %s264 = sphi %s220, %s220
                $region58: #{gat_conv_forward.3} parent=54 // loop_header_branch
                  %261 = sbr.rel (%p259) target = $region62
                $region59: #{gat_conv_forward.3} parent=54 // loop_body
                  _
                $region60: #{gat_conv_forward.3} parent=54 // loop_footer
                  %s262 = sadd.s32 1, %s258
                $region61: #{gat_conv_forward.3} parent=54 // loop_footer_branch
                  %257 = sbr.rel target = $region57
                $region62: #{gat_conv_forward.3} parent=54 // loop_exit
                  _
                %s266 = ssub.s32 16, 1
                loop: start=0, step=1, limit=1
                $region63: #{gat_conv_forward.3} parent=54 // loop_pre_header
                  _
                $region64: #{gat_conv_forward.3} parent=54 // loop_header
                  %s268 = sphi 0, %s272
                  %p269 = scmp.ge.s32.totalorder %s268, 1
                  %s273 = sphi %s222, %s222
                  %s274 = sphi %s220, %s220
                $region65: #{gat_conv_forward.3} parent=54 // loop_header_branch
                  %271 = sbr.rel (%p269) target = $region69
                $region66: #{gat_conv_forward.3} parent=54 // loop_body
                  %v275 = vld [vmem:[%s273] sm:%s266]
                  %276 = vst [vmem:[%s274] sm:%s266] %v275
                  %v277 = vld [vmem:[%s273 + $0xc] sm:%s266]
                  %278 = vst [vmem:[%s274 + $0x4] sm:%s266] %v277
                  %v279 = vld [vmem:[%s273 + $0x18] sm:%s266]
                  %280 = vst [vmem:[%s274 + $0x8] sm:%s266] %v279
                  %v281 = vld [vmem:[%s273 + $0x24] sm:%s266]
                  %282 = vst [vmem:[%s274 + $0xc] sm:%s266] %v281
                  %v283 = vld [vmem:[%s273 + $0x30] sm:%s266]
                  %284 = vst [vmem:[%s274 + $0x10] sm:%s266] %v283
                  %v285 = vld [vmem:[%s273 + $0x3c] sm:%s266]
                  %286 = vst [vmem:[%s274 + $0x14] sm:%s266] %v285
                  %v287 = vld [vmem:[%s273 + $0x48] sm:%s266]
                  %288 = vst [vmem:[%s274 + $0x18] sm:%s266] %v287
                  %v289 = vld [vmem:[%s273 + $0x54] sm:%s266]
                  %290 = vst [vmem:[%s274 + $0x1c] sm:%s266] %v289
                $region67: #{gat_conv_forward.3} parent=54 // loop_footer
                  %s272 = sadd.s32 1, %s268
                $region68: #{gat_conv_forward.3} parent=54 // loop_footer_branch
                  %267 = sbr.rel target = $region64
                $region69: #{gat_conv_forward.3} parent=54 // loop_exit
                  _
              $region55: #{gat_conv_forward.3} parent=39 // pred_fallthru
                _
            $region40: #{gat_conv_forward.3} parent=35 // pred_fallthru
              _
            // Predicated region
            $region41: #{gat_conv_forward.3} parent=35 // pred_check
              _
            $region42: #{gat_conv_forward.3} parent=35 // pred_check_branch
              %228 = sbr.rel (0) target = $region44
            $region43: #{gat_conv_forward.3} parent=35 // pred_region
              %s230 = ssub.s32 16, 1
              loop: start=0, step=1, limit=1
              $region45: #{gat_conv_forward.3} parent=43 // loop_pre_header
                _
              $region46: #{gat_conv_forward.3} parent=43 // loop_header
                %s232 = sphi 0, %s236
                %p233 = scmp.ge.s32.totalorder %s232, 1
                %s237 = sphi %s222, %s222
                %s238 = sphi %s220, %s220
              $region47: #{gat_conv_forward.3} parent=43 // loop_header_branch
                %235 = sbr.rel (%p233) target = $region51
              $region48: #{gat_conv_forward.3} parent=43 // loop_body
                %v239 = vld [vmem:[%s237] sm:%s230]
                %240 = vst [vmem:[%s238] sm:%s230] %v239
                %v241 = vld [vmem:[%s237 + $0xc] sm:%s230]
                %242 = vst [vmem:[%s238 + $0x4] sm:%s230] %v241
                %v243 = vld [vmem:[%s237 + $0x18] sm:%s230]
                %244 = vst [vmem:[%s238 + $0x8] sm:%s230] %v243
                %v245 = vld [vmem:[%s237 + $0x24] sm:%s230]
                %246 = vst [vmem:[%s238 + $0xc] sm:%s230] %v245
                %v247 = vld [vmem:[%s237 + $0x30] sm:%s230]
                %248 = vst [vmem:[%s238 + $0x10] sm:%s230] %v247
                %v249 = vld [vmem:[%s237 + $0x3c] sm:%s230]
                %250 = vst [vmem:[%s238 + $0x14] sm:%s230] %v249
                %v251 = vld [vmem:[%s237 + $0x48] sm:%s230]
                %252 = vst [vmem:[%s238 + $0x18] sm:%s230] %v251
                %v253 = vld [vmem:[%s237 + $0x54] sm:%s230]
                %254 = vst [vmem:[%s238 + $0x1c] sm:%s230] %v253
              $region49: #{gat_conv_forward.3} parent=43 // loop_footer
                %s236 = sadd.s32 1, %s232
              $region50: #{gat_conv_forward.3} parent=43 // loop_footer_branch
                %231 = sbr.rel target = $region46
              $region51: #{gat_conv_forward.3} parent=43 // loop_exit
                _
            $region44: #{gat_conv_forward.3} parent=35 // pred_fallthru
              _
          $region36: #{gat_conv_forward.3} parent=31 // pred_fallthru
            _
          %291 = vnop
        $region32: #{gat_conv_forward.3} parent=19 // pred_fallthru
          _
        // Predicated region
        $region70: #{gat_conv_forward.3} parent=19 // pred_check
          %p292 = pneg %p144
        $region71: #{gat_conv_forward.3} parent=19 // pred_check_branch
          %294 = sbr.rel (%p292) target = $region73
        $region72: #{gat_conv_forward.3} parent=19 // pred_region
          %s295 = sand.u32 %s134, 1
          %s296 = sand.u32 %s134, 1
          %s297 = smul.addr %s296, 32
          %s298 = scalar_lea.vmem [#allocation4], %s297
          %s299 = smul.u32 4, %s19
          %s300 = smul.addr %s299, 3
          %s301 = sadd.s32 %s18, %s300
          %s302 = smul.addr %s301, 8
          %s303 = scalar_lea.vmem %s4, %s302
          // Predicated region
          $region74: #{gat_conv_forward.3} parent=72 // pred_check
            _
          $region75: #{gat_conv_forward.3} parent=72 // pred_check_branch
            %305 = sbr.rel (0) target = $region77
          $region76: #{gat_conv_forward.3} parent=72 // pred_region
            // Predicated region
            $region78: #{gat_conv_forward.3} parent=76 // pred_check
              _
            $region79: #{gat_conv_forward.3} parent=76 // pred_check_branch
              %307 = sbr.rel (0) target = $region81
            $region80: #{gat_conv_forward.3} parent=76 // pred_region
              // Predicated region
              $region93: #{gat_conv_forward.3} parent=80 // pred_check
                _
              $region94: #{gat_conv_forward.3} parent=80 // pred_check_branch
                %329 = sbr.rel (0) target = $region96
              $region95: #{gat_conv_forward.3} parent=80 // pred_region
                loop: start=0, step=1, limit=1
                $region97: #{gat_conv_forward.3} parent=95 // loop_pre_header
                  _
                $region98: #{gat_conv_forward.3} parent=95 // loop_header
                  %s331 = sphi 0, %s335
                  %p332 = scmp.ge.s32.totalorder %s331, 1
                  %s336 = sphi %s303, %s303
                  %s337 = sphi %s298, %s298
                $region99: #{gat_conv_forward.3} parent=95 // loop_header_branch
                  %334 = sbr.rel (%p332) target = $region103
                $region100: #{gat_conv_forward.3} parent=95 // loop_body
                  %v338 = vld [vmem:[%s336] sm:$0xff]
                  %339 = vst [vmem:[%s337] sm:$0xff] %v338
                  %v340 = vld [vmem:[%s336 + $0x18] sm:$0xff]
                  %341 = vst [vmem:[%s337 + $0x8] sm:$0xff] %v340
                  %v342 = vld [vmem:[%s336 + $0x30] sm:$0xff]
                  %343 = vst [vmem:[%s337 + $0x10] sm:$0xff] %v342
                  %v344 = vld [vmem:[%s336 + $0x48] sm:$0xff]
                  %345 = vst [vmem:[%s337 + $0x18] sm:$0xff] %v344
                $region101: #{gat_conv_forward.3} parent=95 // loop_footer
                  %s335 = sadd.s32 1, %s331
                $region102: #{gat_conv_forward.3} parent=95 // loop_footer_branch
                  %330 = sbr.rel target = $region98
                $region103: #{gat_conv_forward.3} parent=95 // loop_exit
                  _
              $region96: #{gat_conv_forward.3} parent=80 // pred_fallthru
                _
              // Predicated region
              $region104: #{gat_conv_forward.3} parent=80 // pred_check
                _
              $region105: #{gat_conv_forward.3} parent=80 // pred_check_branch
                %347 = sbr.rel target = $region107
              $region106: #{gat_conv_forward.3} parent=80 // pred_region
                _
              $region107: #{gat_conv_forward.3} parent=80 // pred_fallthru
                _
            $region81: #{gat_conv_forward.3} parent=76 // pred_fallthru
              _
            // Predicated region
            $region82: #{gat_conv_forward.3} parent=76 // pred_check
              _
            $region83: #{gat_conv_forward.3} parent=76 // pred_check_branch
              %309 = sbr.rel target = $region85
            $region84: #{gat_conv_forward.3} parent=76 // pred_region
              %s311 = ssub.s32 256, 1
              loop: start=0, step=1, limit=1
              $region86: #{gat_conv_forward.3} parent=84 // loop_pre_header
                _
              $region87: #{gat_conv_forward.3} parent=84 // loop_header
                %s313 = sphi 0, %s317
                %p314 = scmp.ge.s32.totalorder %s313, 1
                %s318 = sphi %s303, %s303
                %s319 = sphi %s298, %s298
              $region88: #{gat_conv_forward.3} parent=84 // loop_header_branch
                %316 = sbr.rel (%p314) target = $region92
              $region89: #{gat_conv_forward.3} parent=84 // loop_body
                %v320 = vld [vmem:[%s318] sm:%s311]
                %321 = vst [vmem:[%s319] sm:%s311] %v320
                %v322 = vld [vmem:[%s318 + $0x18] sm:%s311]
                %323 = vst [vmem:[%s319 + $0x8] sm:%s311] %v322
                %v324 = vld [vmem:[%s318 + $0x30] sm:%s311]
                %325 = vst [vmem:[%s319 + $0x10] sm:%s311] %v324
                %v326 = vld [vmem:[%s318 + $0x48] sm:%s311]
                %327 = vst [vmem:[%s319 + $0x18] sm:%s311] %v326
              $region90: #{gat_conv_forward.3} parent=84 // loop_footer
                %s317 = sadd.s32 1, %s313
              $region91: #{gat_conv_forward.3} parent=84 // loop_footer_branch
                %312 = sbr.rel target = $region87
              $region92: #{gat_conv_forward.3} parent=84 // loop_exit
                _
            $region85: #{gat_conv_forward.3} parent=76 // pred_fallthru
              _
          $region77: #{gat_conv_forward.3} parent=72 // pred_fallthru
            _
          %348 = vnop
        $region73: #{gat_conv_forward.3} parent=19 // pred_fallthru
          _
      $region20: #{gat_conv_forward.3} parent=5 // pred_fallthru
        _
      %p349 = scmp.le.s32.totalorder 1, %s11
      %p350 = scmp.lt.s32.totalorder %s11, 10
      %p351 = pnand %p349, %p350
      %p352 = pneg %p351
      // Predicated region
      $region108: #{gat_conv_forward.3} parent=5 // pred_check
        _
      $region109: #{gat_conv_forward.3} parent=5 // pred_check_branch
        %354 = sbr.rel (%p351) target = $region111
      $region110: #{gat_conv_forward.3} parent=5 // pred_region
        %s355 = ssub.s32 %s11, 1
        %s356 = sand.u32 %s109, 1
        %s357 = sand.u32 %s109, 1
        %s358 = smul.addr %s357, 32
        %s359 = scalar_lea.vmem [#allocation3], %s358
        // Predicated region
        $region112: #{gat_conv_forward.3} parent=110 // pred_check
          %p360 = pneg %p122
        $region113: #{gat_conv_forward.3} parent=110 // pred_check_branch
          %362 = sbr.rel (%p360) target = $region115
        $region114: #{gat_conv_forward.3} parent=110 // pred_region
          _
        $region115: #{gat_conv_forward.3} parent=110 // pred_fallthru
          _
        %s363 = sand.u32 %s137, 1
        %s364 = sand.u32 %s137, 1
        %s365 = smul.addr %s364, 32
        %s366 = scalar_lea.vmem [#allocation4], %s365
        // Predicated region
        $region116: #{gat_conv_forward.3} parent=110 // pred_check
          %p367 = pneg %p150
        $region117: #{gat_conv_forward.3} parent=110 // pred_check_branch
          %369 = sbr.rel (%p367) target = $region119
        $region118: #{gat_conv_forward.3} parent=110 // pred_region
          _
        $region119: #{gat_conv_forward.3} parent=110 // pred_fallthru
          _
        %s370 = smul.u32 16, %s21
        %p371 = scmp.lt.s32.totalorder %s370, 47
        %s372 = scalar_select %p371, %s370, 47
        %s373 = smul.addr %s372, 8
        %s374 = scalar_lea.vmem %s0, %s373
        %p375 = pneg %p49
        %p376 = pneg %p46
        %p377 = scmp.lt.s32.totalorder %s20, 2
        %s378 = scalar_select %p377, %s20, 2
        %s379 = smul.addr %s378, 4
        %s380 = scalar_lea.vmem %s1, %s379
        %p381 = pneg %p75
        %p382 = pneg %p72
        %p383 = pneg %p96
        %p384 = pneg %p93
        %s385 = sand.u32 %s109, 1
        %s386 = sand.u32 %s109, 1
        %s387 = smul.addr %s386, 32
        %s388 = scalar_lea.vmem [#allocation3], %s387
        %p389 = pneg %p122
        %p390 = pneg %p119
        %s391 = sand.u32 %s137, 1
        %s392 = sand.u32 %s137, 1
        %s393 = smul.addr %s392, 32
        %s394 = scalar_lea.vmem [#allocation4], %s393
        %p395 = pneg %p150
        %p396 = pneg %p147
        %p397 = pneg %p176
        %p398 = pneg %p173
        %s399 = sand.u32 %s163, 1
        %s400 = sand.u32 %s163, 1
        %s401 = smul.addr %s400, 32
        %s402 = scalar_lea.vmem [#allocation5], %s401
        %s403 = smul.u32 16, %s21
        %p404 = scmp.lt.s32.totalorder %s403, 47
        %s405 = scalar_select %p404, %s403, 47
        %s406 = smul.addr %s405, 8
        %s407 = scalar_lea.vmem %s0, %s406
        %s408 = smul.u32 16, %s21
        %p409 = scmp.lt.s32.totalorder %s20, 2
        %s410 = scalar_select %p409, %s20, 2
        %s411 = smul.addr %s410, 4
        %s412 = scalar_lea.vmem %s1, %s411
        %s413 = smul.u32 4, %s21
        %p415 = scmp.eq.s32.totalorder %s21, 0
        // Predicated region
        $region120: #{gat_conv_forward.3} parent=110 // pred_check
          %p416 = pneg %p415
        $region121: #{gat_conv_forward.3} parent=110 // pred_check_branch
          %418 = sbr.rel (%p416) target = $region123
        $region122: #{gat_conv_forward.3} parent=110 // pred_region
          %419 = vst [vmem:[#allocation2] sm:$0xff] 0.0
          %420 = vst [vmem:[#allocation2 + $0x8] sm:$0xff] 0.0
          %421 = vst [vmem:[#allocation2 + $0x10] sm:$0xff] 0.0
          %422 = vst [vmem:[#allocation2 + $0x18] sm:$0xff] 0.0
          %423 = vst [vmem:[#allocation2 + $0x20] sm:$0xff] 0.0
          %424 = vst [vmem:[#allocation2 + $0x28] sm:$0xff] 0.0
          %425 = vst [vmem:[#allocation2 + $0x30] sm:$0xff] 0.0
          %426 = vst [vmem:[#allocation2 + $0x38] sm:$0xff] 0.0
        $region123: #{gat_conv_forward.3} parent=110 // pred_fallthru
          _
        %v427 = vld [vmem:[%s366] sm:$0xff]
        %v428 = vld [vmem:[%s366 + $0x8] sm:$0xff]
        %v429 = vld [vmem:[%s366 + $0x10] sm:$0xff]
        %v430 = vld [vmem:[%s366 + $0x18] sm:$0xff]
        %v431 = vunpack.c.0.s8 %v427
        %v432 = vunpack.c.1.s8 %v427
        %v433 = vunpack.c.2.s8 %v427
        %v434 = vunpack.c.3.s8 %v427
        %v435 = vunpack.c.0.s8 %v428
        %v436 = vunpack.c.1.s8 %v428
        %v437 = vunpack.c.2.s8 %v428
        %v438 = vunpack.c.3.s8 %v428
        %v439 = vunpack.c.0.s8 %v429
        %v440 = vunpack.c.1.s8 %v429
        %v441 = vunpack.c.2.s8 %v429
        %v442 = vunpack.c.3.s8 %v429
        %v443 = vunpack.c.0.s8 %v430
        %v444 = vunpack.c.1.s8 %v430
        %v445 = vunpack.c.2.s8 %v430
        %v446 = vunpack.c.3.s8 %v430
        %v447 = vcvt.s32.f32 %v431
        %v448 = vcvt.s32.f32 %v432
        %v449 = vcvt.s32.f32 %v433
        %v450 = vcvt.s32.f32 %v434
        %v451 = vcvt.s32.f32 %v435
        %v452 = vcvt.s32.f32 %v436
        %v453 = vcvt.s32.f32 %v437
        %v454 = vcvt.s32.f32 %v438
        %v455 = vcvt.s32.f32 %v439
        %v456 = vcvt.s32.f32 %v440
        %v457 = vcvt.s32.f32 %v441
        %v458 = vcvt.s32.f32 %v442
        %v459 = vcvt.s32.f32 %v443
        %v460 = vcvt.s32.f32 %v444
        %v461 = vcvt.s32.f32 %v445
        %v462 = vcvt.s32.f32 %v446
        %v463 = vld [vmem:[%s412] sm:$0x1]
        %v464 = vld [vmem:[%s2] sm:$0x1]
        %466 = vset.pattern.permute.xlu0 0
        %467 = vperm.xlu0 %466, %v464
        %v468 = vpop.permute.xlu0 %467
        %v470 = vlaneseq
        %v471 = vshrl.u32 %v470, 7
        %v472 = vsub.s32 0, %v471
        %v473 = vrot.slane %v468, %v472
        %v474 = vadd.f32 %v463, %v473
        %v475 = vmul.f32 %v474, 0.2
        %v476 = vmax.f32 %v474, %v475
        %v477 = vld [vmem:[%s407] sm:$0xff]
        %v478 = vld [vmem:[%s407 + $0x8] sm:$0xff]
        %v479 = vld [vmem:[%s407 + $0x10] sm:$0xff]
        %v480 = vld [vmem:[%s407 + $0x18] sm:$0xff]
        %v481 = vld [vmem:[%s407 + $0x20] sm:$0xff]
        %v482 = vld [vmem:[%s407 + $0x28] sm:$0xff]
        %v483 = vld [vmem:[%s407 + $0x30] sm:$0xff]
        %v484 = vld [vmem:[%s407 + $0x38] sm:$0xff]
        %v485 = vld [vmem:[%s407 + $0x40] sm:$0xff]
        %v486 = vld [vmem:[%s407 + $0x48] sm:$0xff]
        %v487 = vld [vmem:[%s407 + $0x50] sm:$0xff]
        %v488 = vld [vmem:[%s407 + $0x58] sm:$0xff]
        %v489 = vld [vmem:[%s407 + $0x60] sm:$0xff]
        %v490 = vld [vmem:[%s407 + $0x68] sm:$0xff]
        %v491 = vld [vmem:[%s407 + $0x70] sm:$0xff]
        %v492 = vld [vmem:[%s407 + $0x78] sm:$0xff]
        %494 = vset.pattern.permute.xlu0 0
        %495 = vperm.xlu0 %494, %v477
        %v496 = vpop.permute.xlu0 %495
        %499 = vset.pattern.permute.xlu0 0
        %500 = vperm.xlu0 %499, %v478
        %v501 = vpop.permute.xlu0 %500
        %504 = vset.pattern.permute.xlu0 0
        %505 = vperm.xlu0 %504, %v479
        %v506 = vpop.permute.xlu0 %505
        %509 = vset.pattern.permute.xlu0 0
        %510 = vperm.xlu0 %509, %v480
        %v511 = vpop.permute.xlu0 %510
        %514 = vset.pattern.permute.xlu0 0
        %515 = vperm.xlu0 %514, %v481
        %v516 = vpop.permute.xlu0 %515
        %519 = vset.pattern.permute.xlu0 0
        %520 = vperm.xlu0 %519, %v482
        %v521 = vpop.permute.xlu0 %520
        %524 = vset.pattern.permute.xlu0 0
        %525 = vperm.xlu0 %524, %v483
        %v526 = vpop.permute.xlu0 %525
        %529 = vset.pattern.permute.xlu0 0
        %530 = vperm.xlu0 %529, %v484
        %v531 = vpop.permute.xlu0 %530
        %534 = vset.pattern.permute.xlu0 0
        %535 = vperm.xlu0 %534, %v485
        %v536 = vpop.permute.xlu0 %535
        %539 = vset.pattern.permute.xlu0 0
        %540 = vperm.xlu0 %539, %v486
        %v541 = vpop.permute.xlu0 %540
        %544 = vset.pattern.permute.xlu0 0
        %545 = vperm.xlu0 %544, %v487
        %v546 = vpop.permute.xlu0 %545
        %549 = vset.pattern.permute.xlu0 0
        %550 = vperm.xlu0 %549, %v488
        %v551 = vpop.permute.xlu0 %550
        %554 = vset.pattern.permute.xlu0 0
        %555 = vperm.xlu0 %554, %v489
        %v556 = vpop.permute.xlu0 %555
        %559 = vset.pattern.permute.xlu0 0
        %560 = vperm.xlu0 %559, %v490
        %v561 = vpop.permute.xlu0 %560
        %564 = vset.pattern.permute.xlu0 0
        %565 = vperm.xlu0 %564, %v491
        %v566 = vpop.permute.xlu0 %565
        %569 = vset.pattern.permute.xlu0 0
        %570 = vperm.xlu0 %569, %v492
        %v571 = vpop.permute.xlu0 %570
        %v573 = vlaneseq
        %v574 = vshrl.u32 %v573, 7
        %v575 = vsub.s32 0, %v574
        %v576 = vrot.slane %v463, %v575
        %v577 = vadd.f32 %v496, %v576
        %v578 = vadd.f32 %v501, %v576
        %v579 = vadd.f32 %v506, %v576
        %v580 = vadd.f32 %v511, %v576
        %v581 = vadd.f32 %v516, %v576
        %v582 = vadd.f32 %v521, %v576
        %v583 = vadd.f32 %v526, %v576
        %v584 = vadd.f32 %v531, %v576
        %v585 = vadd.f32 %v536, %v576
        %v586 = vadd.f32 %v541, %v576
        %v587 = vadd.f32 %v546, %v576
        %v588 = vadd.f32 %v551, %v576
        %v589 = vadd.f32 %v556, %v576
        %v590 = vadd.f32 %v561, %v576
        %v591 = vadd.f32 %v566, %v576
        %v592 = vadd.f32 %v571, %v576
        %v593 = vmul.f32 %v577, 0.2
        %v594 = vmul.f32 %v578, 0.2
        %v595 = vmul.f32 %v579, 0.2
        %v596 = vmul.f32 %v580, 0.2
        %v597 = vmul.f32 %v581, 0.2
        %v598 = vmul.f32 %v582, 0.2
        %v599 = vmul.f32 %v583, 0.2
        %v600 = vmul.f32 %v584, 0.2
        %v601 = vmul.f32 %v585, 0.2
        %v602 = vmul.f32 %v586, 0.2
        %v603 = vmul.f32 %v587, 0.2
        %v604 = vmul.f32 %v588, 0.2
        %v605 = vmul.f32 %v589, 0.2
        %v606 = vmul.f32 %v590, 0.2
        %v607 = vmul.f32 %v591, 0.2
        %v608 = vmul.f32 %v592, 0.2
        %v609 = vmax.f32 %v577, %v593
        %v610 = vmax.f32 %v578, %v594
        %v611 = vmax.f32 %v579, %v595
        %v612 = vmax.f32 %v580, %v596
        %v613 = vmax.f32 %v581, %v597
        %v614 = vmax.f32 %v582, %v598
        %v615 = vmax.f32 %v583, %v599
        %v616 = vmax.f32 %v584, %v600
        %v617 = vmax.f32 %v585, %v601
        %v618 = vmax.f32 %v586, %v602
        %v619 = vmax.f32 %v587, %v603
        %v620 = vmax.f32 %v588, %v604
        %v621 = vmax.f32 %v589, %v605
        %v622 = vmax.f32 %v590, %v606
        %v623 = vmax.f32 %v591, %v607
        %v624 = vmax.f32 %v592, %v608
        %v625 = vlaneseq
        %v626 = vshrl.u32 %v625, 7
        %v627 = vsub.s32 0, %v626
        %v628 = vrot.slane %v476, %v627
        %v629 = vsub.f32 %v609, %v628
        %v630 = vsub.f32 %v610, %v628
        %v631 = vsub.f32 %v611, %v628
        %v632 = vsub.f32 %v612, %v628
        %v633 = vsub.f32 %v613, %v628
        %v634 = vsub.f32 %v614, %v628
        %v635 = vsub.f32 %v615, %v628
        %v636 = vsub.f32 %v616, %v628
        %v637 = vsub.f32 %v617, %v628
        %v638 = vsub.f32 %v618, %v628
        %v639 = vsub.f32 %v619, %v628
        %v640 = vsub.f32 %v620, %v628
        %v641 = vsub.f32 %v621, %v628
        %v642 = vsub.f32 %v622, %v628
        %v643 = vsub.f32 %v623, %v628
        %v644 = vsub.f32 %v624, %v628
        %v645 = vmul.f32 %v629, 1.442695
        %v646 = vpow.pop %v645
        %v647 = vmul.f32 %v630, 1.442695
        %v648 = vpow.pop %v647
        %v649 = vmul.f32 %v631, 1.442695
        %v650 = vpow.pop %v649
        %v651 = vmul.f32 %v632, 1.442695
        %v652 = vpow.pop %v651
        %v653 = vmul.f32 %v633, 1.442695
        %v654 = vpow.pop %v653
        %v655 = vmul.f32 %v634, 1.442695
        %v656 = vpow.pop %v655
        %v657 = vmul.f32 %v635, 1.442695
        %v658 = vpow.pop %v657
        %v659 = vmul.f32 %v636, 1.442695
        %v660 = vpow.pop %v659
        %v661 = vmul.f32 %v637, 1.442695
        %v662 = vpow.pop %v661
        %v663 = vmul.f32 %v638, 1.442695
        %v664 = vpow.pop %v663
        %v665 = vmul.f32 %v639, 1.442695
        %v666 = vpow.pop %v665
        %v667 = vmul.f32 %v640, 1.442695
        %v668 = vpow.pop %v667
        %v669 = vmul.f32 %v641, 1.442695
        %v670 = vpow.pop %v669
        %v671 = vmul.f32 %v642, 1.442695
        %v672 = vpow.pop %v671
        %v673 = vmul.f32 %v643, 1.442695
        %v674 = vpow.pop %v673
        %v675 = vmul.f32 %v644, 1.442695
        %v676 = vpow.pop %v675
        %v677 = vmul.f32 %v646, %v447
        %v678 = vmul.f32 %v648, %v448
        %v679 = vmul.f32 %v650, %v449
        %v680 = vmul.f32 %v652, %v450
        %v681 = vmul.f32 %v654, %v451
        %v682 = vmul.f32 %v656, %v452
        %v683 = vmul.f32 %v658, %v453
        %v684 = vmul.f32 %v660, %v454
        %v685 = vmul.f32 %v662, %v455
        %v686 = vmul.f32 %v664, %v456
        %v687 = vmul.f32 %v666, %v457
        %v688 = vmul.f32 %v668, %v458
        %v689 = vmul.f32 %v670, %v459
        %v690 = vmul.f32 %v672, %v460
        %v691 = vmul.f32 %v674, %v461
        %v692 = vmul.f32 %v676, %v462
        %v693 = vld [vmem:[#allocation2] sm:$0xff]
        %v694 = vld [vmem:[#allocation2 + $0x8] sm:$0xff]
        %v695 = vld [vmem:[%s359] sm:$0xf]
        %v696 = vld [vmem:[%s359 + $0x4] sm:$0xf]
        %v697 = vpack.c.bf16 %v678, %v677
        %v698 = vpack.c.bf16 %v680, %v679
        %v699 = vpack.c.bf16 %v682, %v681
        %v700 = vpack.c.bf16 %v684, %v683
        %v701 = vpack.c.bf16 %v686, %v685
        %v702 = vpack.c.bf16 %v688, %v687
        %v703 = vpack.c.bf16 %v690, %v689
        %v704 = vpack.c.bf16 %v692, %v691
        %v707 = vunpack.c.l.b16 %v695
        %v708 = vunpack.c.l.b16 %v696
        %v709 = vpack.c.b16 %v708, %v707
        %711 = vmatprep.subr.bf16.mxu0 0
        %712 = vmatpush1.bf16.msra.mxu0 %v704
        %713 = vmatprep.subr.bf16.mxu0 0
        %714 = vmatpush1.bf16.msra.mxu0 %v703
        %715 = vmatprep.subr.bf16.mxu0 0
        %716 = vmatpush1.bf16.msra.mxu0 %v702
        %717 = vmatprep.subr.bf16.mxu0 0
        %718 = vmatpush1.bf16.msra.mxu0 %v701
        %719 = vmatprep.subr.bf16.mxu0 0
        %720 = vmatpush1.bf16.msra.mxu0 %v700
        %721 = vmatprep.subr.bf16.mxu0 0
        %722 = vmatpush1.bf16.msra.mxu0 %v699
        %723 = vmatprep.subr.bf16.mxu0 0
        %724 = vmatpush1.bf16.msra.mxu0 %v698
        %725 = vmatprep.subr.bf16.mxu0 0
        %726 = vmatpush1.bf16.msra.mxu0 %v697
        %727 = vmatprep.subr.bf16.mxu0 0
        %728 = vmatpush2.bf16.msra.mxu0 0
        %729 = vmatprep.subr.bf16.mxu0 0
        %730 = vmatpush2.bf16.msra.mxu0 0
        %731 = vmatprep.subr.bf16.mxu0 0
        %732 = vmatpush2.bf16.msra.mxu0 0
        %733 = vmatprep.subr.bf16.mxu0 0
        %734 = vmatpush2.bf16.msra.mxu0 0
        %735 = vmatprep.subr.bf16.mxu0 0
        %736 = vmatpush2.bf16.msra.mxu0 0
        %737 = vmatprep.subr.bf16.mxu0 0
        %738 = vmatpush2.bf16.msra.mxu0 0
        %739 = vmatprep.subr.bf16.mxu0 0
        %740 = vmatpush2.bf16.msra.mxu0 0
        %741 = vmatprep.subr.bf16.mxu0 0
        %742 = vmatpush2.bf16.msra.mxu0 0
        %743 = vmatprep.mubr.bf16.mxu0 0
        %744 = vmatmul.mubr.bf16.gmra.mxu0 %v709
        %v745 = vpop.f32.mrf.mxu0
        %v746 = vadd.f32 0.0, %v745
        %v747 = vpop.f32.mrf.mxu0
        %v748 = vpop.f32.mrf.mxu0
        %v749 = vadd.f32 0.0, %v748
        %v750 = vpop.f32.mrf.mxu0
        %751 = vdwg.mxu0
        %v752 = vadd.f32 %v693, %v746
        %v753 = vadd.f32 %v694, %v749
        %754 = vst [vmem:[#allocation2] sm:$0xff] %v752
        %755 = vst [vmem:[#allocation2 + $0x8] sm:$0xff] %v753
        %v756 = vld [vmem:[%s412 + $0x1] sm:$0x1]
        %v757 = vld [vmem:[%s2] sm:$0x1]
        %759 = vset.pattern.permute.xlu0 1
        %760 = vperm.xlu0 %759, %v757
        %v761 = vpop.permute.xlu0 %760
        %v763 = vlaneseq
        %v764 = vshrl.u32 %v763, 7
        %v765 = vsub.s32 0, %v764
        %v766 = vrot.slane %v761, %v765
        %v767 = vadd.f32 %v756, %v766
        %v768 = vmul.f32 %v767, 0.2
        %v769 = vmax.f32 %v767, %v768
        %v770 = vld [vmem:[%s407] sm:$0xff]
        %v771 = vld [vmem:[%s407 + $0x8] sm:$0xff]
        %v772 = vld [vmem:[%s407 + $0x10] sm:$0xff]
        %v773 = vld [vmem:[%s407 + $0x18] sm:$0xff]
        %v774 = vld [vmem:[%s407 + $0x20] sm:$0xff]
        %v775 = vld [vmem:[%s407 + $0x28] sm:$0xff]
        %v776 = vld [vmem:[%s407 + $0x30] sm:$0xff]
        %v777 = vld [vmem:[%s407 + $0x38] sm:$0xff]
        %v778 = vld [vmem:[%s407 + $0x40] sm:$0xff]
        %v779 = vld [vmem:[%s407 + $0x48] sm:$0xff]
        %v780 = vld [vmem:[%s407 + $0x50] sm:$0xff]
        %v781 = vld [vmem:[%s407 + $0x58] sm:$0xff]
        %v782 = vld [vmem:[%s407 + $0x60] sm:$0xff]
        %v783 = vld [vmem:[%s407 + $0x68] sm:$0xff]
        %v784 = vld [vmem:[%s407 + $0x70] sm:$0xff]
        %v785 = vld [vmem:[%s407 + $0x78] sm:$0xff]
        %787 = vset.pattern.permute.xlu0 1
        %788 = vperm.xlu0 %787, %v770
        %v789 = vpop.permute.xlu0 %788
        %792 = vset.pattern.permute.xlu0 1
        %793 = vperm.xlu0 %792, %v771
        %v794 = vpop.permute.xlu0 %793
        %797 = vset.pattern.permute.xlu0 1
        %798 = vperm.xlu0 %797, %v772
        %v799 = vpop.permute.xlu0 %798
        %802 = vset.pattern.permute.xlu0 1
        %803 = vperm.xlu0 %802, %v773
        %v804 = vpop.permute.xlu0 %803
        %807 = vset.pattern.permute.xlu0 1
        %808 = vperm.xlu0 %807, %v774
        %v809 = vpop.permute.xlu0 %808
        %812 = vset.pattern.permute.xlu0 1
        %813 = vperm.xlu0 %812, %v775
        %v814 = vpop.permute.xlu0 %813
        %817 = vset.pattern.permute.xlu0 1
        %818 = vperm.xlu0 %817, %v776
        %v819 = vpop.permute.xlu0 %818
        %822 = vset.pattern.permute.xlu0 1
        %823 = vperm.xlu0 %822, %v777
        %v824 = vpop.permute.xlu0 %823
        %827 = vset.pattern.permute.xlu0 1
        %828 = vperm.xlu0 %827, %v778
        %v829 = vpop.permute.xlu0 %828
        %832 = vset.pattern.permute.xlu0 1
        %833 = vperm.xlu0 %832, %v779
        %v834 = vpop.permute.xlu0 %833
        %837 = vset.pattern.permute.xlu0 1
        %838 = vperm.xlu0 %837, %v780
        %v839 = vpop.permute.xlu0 %838
        %842 = vset.pattern.permute.xlu0 1
        %843 = vperm.xlu0 %842, %v781
        %v844 = vpop.permute.xlu0 %843
        %847 = vset.pattern.permute.xlu0 1
        %848 = vperm.xlu0 %847, %v782
        %v849 = vpop.permute.xlu0 %848
        %852 = vset.pattern.permute.xlu0 1
        %853 = vperm.xlu0 %852, %v783
        %v854 = vpop.permute.xlu0 %853
        %857 = vset.pattern.permute.xlu0 1
        %858 = vperm.xlu0 %857, %v784
        %v859 = vpop.permute.xlu0 %858
        %862 = vset.pattern.permute.xlu0 1
        %863 = vperm.xlu0 %862, %v785
        %v864 = vpop.permute.xlu0 %863
        %v866 = vlaneseq
        %v867 = vshrl.u32 %v866, 7
        %v868 = vsub.s32 0, %v867
        %v869 = vrot.slane %v756, %v868
        %v870 = vadd.f32 %v789, %v869
        %v871 = vadd.f32 %v794, %v869
        %v872 = vadd.f32 %v799, %v869
        %v873 = vadd.f32 %v804, %v869
        %v874 = vadd.f32 %v809, %v869
        %v875 = vadd.f32 %v814, %v869
        %v876 = vadd.f32 %v819, %v869
        %v877 = vadd.f32 %v824, %v869
        %v878 = vadd.f32 %v829, %v869
        %v879 = vadd.f32 %v834, %v869
        %v880 = vadd.f32 %v839, %v869
        %v881 = vadd.f32 %v844, %v869
        %v882 = vadd.f32 %v849, %v869
        %v883 = vadd.f32 %v854, %v869
        %v884 = vadd.f32 %v859, %v869
        %v885 = vadd.f32 %v864, %v869
        %v886 = vmul.f32 %v870, 0.2
        %v887 = vmul.f32 %v871, 0.2
        %v888 = vmul.f32 %v872, 0.2
        %v889 = vmul.f32 %v873, 0.2
        %v890 = vmul.f32 %v874, 0.2
        %v891 = vmul.f32 %v875, 0.2
        %v892 = vmul.f32 %v876, 0.2
        %v893 = vmul.f32 %v877, 0.2
        %v894 = vmul.f32 %v878, 0.2
        %v895 = vmul.f32 %v879, 0.2
        %v896 = vmul.f32 %v880, 0.2
        %v897 = vmul.f32 %v881, 0.2
        %v898 = vmul.f32 %v882, 0.2
        %v899 = vmul.f32 %v883, 0.2
        %v900 = vmul.f32 %v884, 0.2
        %v901 = vmul.f32 %v885, 0.2
        %v902 = vmax.f32 %v870, %v886
        %v903 = vmax.f32 %v871, %v887
        %v904 = vmax.f32 %v872, %v888
        %v905 = vmax.f32 %v873, %v889
        %v906 = vmax.f32 %v874, %v890
        %v907 = vmax.f32 %v875, %v891
        %v908 = vmax.f32 %v876, %v892
        %v909 = vmax.f32 %v877, %v893
        %v910 = vmax.f32 %v878, %v894
        %v911 = vmax.f32 %v879, %v895
        %v912 = vmax.f32 %v880, %v896
        %v913 = vmax.f32 %v881, %v897
        %v914 = vmax.f32 %v882, %v898
        %v915 = vmax.f32 %v883, %v899
        %v916 = vmax.f32 %v884, %v900
        %v917 = vmax.f32 %v885, %v901
        %v918 = vlaneseq
        %v919 = vshrl.u32 %v918, 7
        %v920 = vsub.s32 0, %v919
        %v921 = vrot.slane %v769, %v920
        %v922 = vsub.f32 %v902, %v921
        %v923 = vsub.f32 %v903, %v921
        %v924 = vsub.f32 %v904, %v921
        %v925 = vsub.f32 %v905, %v921
        %v926 = vsub.f32 %v906, %v921
        %v927 = vsub.f32 %v907, %v921
        %v928 = vsub.f32 %v908, %v921
        %v929 = vsub.f32 %v909, %v921
        %v930 = vsub.f32 %v910, %v921
        %v931 = vsub.f32 %v911, %v921
        %v932 = vsub.f32 %v912, %v921
        %v933 = vsub.f32 %v913, %v921
        %v934 = vsub.f32 %v914, %v921
        %v935 = vsub.f32 %v915, %v921
        %v936 = vsub.f32 %v916, %v921
        %v937 = vsub.f32 %v917, %v921
        %v938 = vmul.f32 %v922, 1.442695
        %v939 = vpow.pop %v938
        %v940 = vmul.f32 %v923, 1.442695
        %v941 = vpow.pop %v940
        %v942 = vmul.f32 %v924, 1.442695
        %v943 = vpow.pop %v942
        %v944 = vmul.f32 %v925, 1.442695
        %v945 = vpow.pop %v944
        %v946 = vmul.f32 %v926, 1.442695
        %v947 = vpow.pop %v946
        %v948 = vmul.f32 %v927, 1.442695
        %v949 = vpow.pop %v948
        %v950 = vmul.f32 %v928, 1.442695
        %v951 = vpow.pop %v950
        %v952 = vmul.f32 %v929, 1.442695
        %v953 = vpow.pop %v952
        %v954 = vmul.f32 %v930, 1.442695
        %v955 = vpow.pop %v954
        %v956 = vmul.f32 %v931, 1.442695
        %v957 = vpow.pop %v956
        %v958 = vmul.f32 %v932, 1.442695
        %v959 = vpow.pop %v958
        %v960 = vmul.f32 %v933, 1.442695
        %v961 = vpow.pop %v960
        %v962 = vmul.f32 %v934, 1.442695
        %v963 = vpow.pop %v962
        %v964 = vmul.f32 %v935, 1.442695
        %v965 = vpow.pop %v964
        %v966 = vmul.f32 %v936, 1.442695
        %v967 = vpow.pop %v966
        %v968 = vmul.f32 %v937, 1.442695
        %v969 = vpow.pop %v968
        %v970 = vmul.f32 %v939, %v447
        %v971 = vmul.f32 %v941, %v448
        %v972 = vmul.f32 %v943, %v449
        %v973 = vmul.f32 %v945, %v450
        %v974 = vmul.f32 %v947, %v451
        %v975 = vmul.f32 %v949, %v452
        %v976 = vmul.f32 %v951, %v453
        %v977 = vmul.f32 %v953, %v454
        %v978 = vmul.f32 %v955, %v455
        %v979 = vmul.f32 %v957, %v456
        %v980 = vmul.f32 %v959, %v457
        %v981 = vmul.f32 %v961, %v458
        %v982 = vmul.f32 %v963, %v459
        %v983 = vmul.f32 %v965, %v460
        %v984 = vmul.f32 %v967, %v461
        %v985 = vmul.f32 %v969, %v462
        %v986 = vld [vmem:[#allocation2 + $0x10] sm:$0xff]
        %v987 = vld [vmem:[#allocation2 + $0x18] sm:$0xff]
        %v988 = vld [vmem:[%s359 + $0x8] sm:$0xf]
        %v989 = vld [vmem:[%s359 + $0xc] sm:$0xf]
        %v990 = vpack.c.bf16 %v971, %v970
        %v991 = vpack.c.bf16 %v973, %v972
        %v992 = vpack.c.bf16 %v975, %v974
        %v993 = vpack.c.bf16 %v977, %v976
        %v994 = vpack.c.bf16 %v979, %v978
        %v995 = vpack.c.bf16 %v981, %v980
        %v996 = vpack.c.bf16 %v983, %v982
        %v997 = vpack.c.bf16 %v985, %v984
        %v1000 = vunpack.c.l.b16 %v988
        %v1001 = vunpack.c.l.b16 %v989
        %v1002 = vpack.c.b16 %v1001, %v1000
        %1004 = vmatprep.subr.bf16.mxu0 0
        %1005 = vmatpush1.bf16.msra.mxu0 %v997
        %1006 = vmatprep.subr.bf16.mxu0 0
        %1007 = vmatpush1.bf16.msra.mxu0 %v996
        %1008 = vmatprep.subr.bf16.mxu0 0
        %1009 = vmatpush1.bf16.msra.mxu0 %v995
        %1010 = vmatprep.subr.bf16.mxu0 0
        %1011 = vmatpush1.bf16.msra.mxu0 %v994
        %1012 = vmatprep.subr.bf16.mxu0 0
        %1013 = vmatpush1.bf16.msra.mxu0 %v993
        %1014 = vmatprep.subr.bf16.mxu0 0
        %1015 = vmatpush1.bf16.msra.mxu0 %v992
        %1016 = vmatprep.subr.bf16.mxu0 0
        %1017 = vmatpush1.bf16.msra.mxu0 %v991
        %1018 = vmatprep.subr.bf16.mxu0 0
        %1019 = vmatpush1.bf16.msra.mxu0 %v990
        %1020 = vmatprep.subr.bf16.mxu0 0
        %1021 = vmatpush2.bf16.msra.mxu0 0
        %1022 = vmatprep.subr.bf16.mxu0 0
        %1023 = vmatpush2.bf16.msra.mxu0 0
        %1024 = vmatprep.subr.bf16.mxu0 0
        %1025 = vmatpush2.bf16.msra.mxu0 0
        %1026 = vmatprep.subr.bf16.mxu0 0
        %1027 = vmatpush2.bf16.msra.mxu0 0
        %1028 = vmatprep.subr.bf16.mxu0 0
        %1029 = vmatpush2.bf16.msra.mxu0 0
        %1030 = vmatprep.subr.bf16.mxu0 0
        %1031 = vmatpush2.bf16.msra.mxu0 0
        %1032 = vmatprep.subr.bf16.mxu0 0
        %1033 = vmatpush2.bf16.msra.mxu0 0
        %1034 = vmatprep.subr.bf16.mxu0 0
        %1035 = vmatpush2.bf16.msra.mxu0 0
        %1036 = vmatprep.mubr.bf16.mxu0 0
        %1037 = vmatmul.mubr.bf16.gmra.mxu0 %v1002
        %v1038 = vpop.f32.mrf.mxu0
        %v1039 = vadd.f32 0.0, %v1038
        %v1040 = vpop.f32.mrf.mxu0
        %v1041 = vpop.f32.mrf.mxu0
        %v1042 = vadd.f32 0.0, %v1041
        %v1043 = vpop.f32.mrf.mxu0
        %1044 = vdwg.mxu0
        %v1045 = vadd.f32 %v986, %v1039
        %v1046 = vadd.f32 %v987, %v1042
        %1047 = vst [vmem:[#allocation2 + $0x10] sm:$0xff] %v1045
        %1048 = vst [vmem:[#allocation2 + $0x18] sm:$0xff] %v1046
        %v1049 = vld [vmem:[%s412 + $0x2] sm:$0x1]
        %v1050 = vld [vmem:[%s2] sm:$0x1]
        %1052 = vset.pattern.permute.xlu0 2
        %1053 = vperm.xlu0 %1052, %v1050
        %v1054 = vpop.permute.xlu0 %1053
        %v1056 = vlaneseq
        %v1057 = vshrl.u32 %v1056, 7
        %v1058 = vsub.s32 0, %v1057
        %v1059 = vrot.slane %v1054, %v1058
        %v1060 = vadd.f32 %v1049, %v1059
        %v1061 = vmul.f32 %v1060, 0.2
        %v1062 = vmax.f32 %v1060, %v1061
        %v1063 = vld [vmem:[%s407] sm:$0xff]
        %v1064 = vld [vmem:[%s407 + $0x8] sm:$0xff]
        %v1065 = vld [vmem:[%s407 + $0x10] sm:$0xff]
        %v1066 = vld [vmem:[%s407 + $0x18] sm:$0xff]
        %v1067 = vld [vmem:[%s407 + $0x20] sm:$0xff]
        %v1068 = vld [vmem:[%s407 + $0x28] sm:$0xff]
        %v1069 = vld [vmem:[%s407 + $0x30] sm:$0xff]
        %v1070 = vld [vmem:[%s407 + $0x38] sm:$0xff]
        %v1071 = vld [vmem:[%s407 + $0x40] sm:$0xff]
        %v1072 = vld [vmem:[%s407 + $0x48] sm:$0xff]
        %v1073 = vld [vmem:[%s407 + $0x50] sm:$0xff]
        %v1074 = vld [vmem:[%s407 + $0x58] sm:$0xff]
        %v1075 = vld [vmem:[%s407 + $0x60] sm:$0xff]
        %v1076 = vld [vmem:[%s407 + $0x68] sm:$0xff]
        %v1077 = vld [vmem:[%s407 + $0x70] sm:$0xff]
        %v1078 = vld [vmem:[%s407 + $0x78] sm:$0xff]
        %1080 = vset.pattern.permute.xlu0 2
        %1081 = vperm.xlu0 %1080, %v1063
        %v1082 = vpop.permute.xlu0 %1081
        %1085 = vset.pattern.permute.xlu0 2
        %1086 = vperm.xlu0 %1085, %v1064
        %v1087 = vpop.permute.xlu0 %1086
        %1090 = vset.pattern.permute.xlu0 2
        %1091 = vperm.xlu0 %1090, %v1065
        %v1092 = vpop.permute.xlu0 %1091
        %1095 = vset.pattern.permute.xlu0 2
        %1096 = vperm.xlu0 %1095, %v1066
        %v1097 = vpop.permute.xlu0 %1096
        %1100 = vset.pattern.permute.xlu0 2
        %1101 = vperm.xlu0 %1100, %v1067
        %v1102 = vpop.permute.xlu0 %1101
        %1105 = vset.pattern.permute.xlu0 2
        %1106 = vperm.xlu0 %1105, %v1068
        %v1107 = vpop.permute.xlu0 %1106
        %1110 = vset.pattern.permute.xlu0 2
        %1111 = vperm.xlu0 %1110, %v1069
        %v1112 = vpop.permute.xlu0 %1111
        %1115 = vset.pattern.permute.xlu0 2
        %1116 = vperm.xlu0 %1115, %v1070
        %v1117 = vpop.permute.xlu0 %1116
        %1120 = vset.pattern.permute.xlu0 2
        %1121 = vperm.xlu0 %1120, %v1071
        %v1122 = vpop.permute.xlu0 %1121
        %1125 = vset.pattern.permute.xlu0 2
        %1126 = vperm.xlu0 %1125, %v1072
        %v1127 = vpop.permute.xlu0 %1126
        %1130 = vset.pattern.permute.xlu0 2
        %1131 = vperm.xlu0 %1130, %v1073
        %v1132 = vpop.permute.xlu0 %1131
        %1135 = vset.pattern.permute.xlu0 2
        %1136 = vperm.xlu0 %1135, %v1074
        %v1137 = vpop.permute.xlu0 %1136
        %1140 = vset.pattern.permute.xlu0 2
        %1141 = vperm.xlu0 %1140, %v1075
        %v1142 = vpop.permute.xlu0 %1141
        %1145 = vset.pattern.permute.xlu0 2
        %1146 = vperm.xlu0 %1145, %v1076
        %v1147 = vpop.permute.xlu0 %1146
        %1150 = vset.pattern.permute.xlu0 2
        %1151 = vperm.xlu0 %1150, %v1077
        %v1152 = vpop.permute.xlu0 %1151
        %1155 = vset.pattern.permute.xlu0 2
        %1156 = vperm.xlu0 %1155, %v1078
        %v1157 = vpop.permute.xlu0 %1156
        %v1159 = vlaneseq
        %v1160 = vshrl.u32 %v1159, 7
        %v1161 = vsub.s32 0, %v1160
        %v1162 = vrot.slane %v1049, %v1161
        %v1163 = vadd.f32 %v1082, %v1162
        %v1164 = vadd.f32 %v1087, %v1162
        %v1165 = vadd.f32 %v1092, %v1162
        %v1166 = vadd.f32 %v1097, %v1162
        %v1167 = vadd.f32 %v1102, %v1162
        %v1168 = vadd.f32 %v1107, %v1162
        %v1169 = vadd.f32 %v1112, %v1162
        %v1170 = vadd.f32 %v1117, %v1162
        %v1171 = vadd.f32 %v1122, %v1162
        %v1172 = vadd.f32 %v1127, %v1162
        %v1173 = vadd.f32 %v1132, %v1162
        %v1174 = vadd.f32 %v1137, %v1162
        %v1175 = vadd.f32 %v1142, %v1162
        %v1176 = vadd.f32 %v1147, %v1162
        %v1177 = vadd.f32 %v1152, %v1162
        %v1178 = vadd.f32 %v1157, %v1162
        %v1179 = vmul.f32 %v1163, 0.2
        %v1180 = vmul.f32 %v1164, 0.2
        %v1181 = vmul.f32 %v1165, 0.2
        %v1182 = vmul.f32 %v1166, 0.2
        %v1183 = vmul.f32 %v1167, 0.2
        %v1184 = vmul.f32 %v1168, 0.2
        %v1185 = vmul.f32 %v1169, 0.2
        %v1186 = vmul.f32 %v1170, 0.2
        %v1187 = vmul.f32 %v1171, 0.2
        %v1188 = vmul.f32 %v1172, 0.2
        %v1189 = vmul.f32 %v1173, 0.2
        %v1190 = vmul.f32 %v1174, 0.2
        %v1191 = vmul.f32 %v1175, 0.2
        %v1192 = vmul.f32 %v1176, 0.2
        %v1193 = vmul.f32 %v1177, 0.2
        %v1194 = vmul.f32 %v1178, 0.2
        %v1195 = vmax.f32 %v1163, %v1179
        %v1196 = vmax.f32 %v1164, %v1180
        %v1197 = vmax.f32 %v1165, %v1181
        %v1198 = vmax.f32 %v1166, %v1182
        %v1199 = vmax.f32 %v1167, %v1183
        %v1200 = vmax.f32 %v1168, %v1184
        %v1201 = vmax.f32 %v1169, %v1185
        %v1202 = vmax.f32 %v1170, %v1186
        %v1203 = vmax.f32 %v1171, %v1187
        %v1204 = vmax.f32 %v1172, %v1188
        %v1205 = vmax.f32 %v1173, %v1189
        %v1206 = vmax.f32 %v1174, %v1190
        %v1207 = vmax.f32 %v1175, %v1191
        %v1208 = vmax.f32 %v1176, %v1192
        %v1209 = vmax.f32 %v1177, %v1193
        %v1210 = vmax.f32 %v1178, %v1194
        %v1211 = vlaneseq
        %v1212 = vshrl.u32 %v1211, 7
        %v1213 = vsub.s32 0, %v1212
        %v1214 = vrot.slane %v1062, %v1213
        %v1215 = vsub.f32 %v1195, %v1214
        %v1216 = vsub.f32 %v1196, %v1214
        %v1217 = vsub.f32 %v1197, %v1214
        %v1218 = vsub.f32 %v1198, %v1214
        %v1219 = vsub.f32 %v1199, %v1214
        %v1220 = vsub.f32 %v1200, %v1214
        %v1221 = vsub.f32 %v1201, %v1214
        %v1222 = vsub.f32 %v1202, %v1214
        %v1223 = vsub.f32 %v1203, %v1214
        %v1224 = vsub.f32 %v1204, %v1214
        %v1225 = vsub.f32 %v1205, %v1214
        %v1226 = vsub.f32 %v1206, %v1214
        %v1227 = vsub.f32 %v1207, %v1214
        %v1228 = vsub.f32 %v1208, %v1214
        %v1229 = vsub.f32 %v1209, %v1214
        %v1230 = vsub.f32 %v1210, %v1214
        %v1231 = vmul.f32 %v1215, 1.442695
        %v1232 = vpow.pop %v1231
        %v1233 = vmul.f32 %v1216, 1.442695
        %v1234 = vpow.pop %v1233
        %v1235 = vmul.f32 %v1217, 1.442695
        %v1236 = vpow.pop %v1235
        %v1237 = vmul.f32 %v1218, 1.442695
        %v1238 = vpow.pop %v1237
        %v1239 = vmul.f32 %v1219, 1.442695
        %v1240 = vpow.pop %v1239
        %v1241 = vmul.f32 %v1220, 1.442695
        %v1242 = vpow.pop %v1241
        %v1243 = vmul.f32 %v1221, 1.442695
        %v1244 = vpow.pop %v1243
        %v1245 = vmul.f32 %v1222, 1.442695
        %v1246 = vpow.pop %v1245
        %v1247 = vmul.f32 %v1223, 1.442695
        %v1248 = vpow.pop %v1247
        %v1249 = vmul.f32 %v1224, 1.442695
        %v1250 = vpow.pop %v1249
        %v1251 = vmul.f32 %v1225, 1.442695
        %v1252 = vpow.pop %v1251
        %v1253 = vmul.f32 %v1226, 1.442695
        %v1254 = vpow.pop %v1253
        %v1255 = vmul.f32 %v1227, 1.442695
        %v1256 = vpow.pop %v1255
        %v1257 = vmul.f32 %v1228, 1.442695
        %v1258 = vpow.pop %v1257
        %v1259 = vmul.f32 %v1229, 1.442695
        %v1260 = vpow.pop %v1259
        %v1261 = vmul.f32 %v1230, 1.442695
        %v1262 = vpow.pop %v1261
        %v1263 = vmul.f32 %v1232, %v447
        %v1264 = vmul.f32 %v1234, %v448
        %v1265 = vmul.f32 %v1236, %v449
        %v1266 = vmul.f32 %v1238, %v450
        %v1267 = vmul.f32 %v1240, %v451
        %v1268 = vmul.f32 %v1242, %v452
        %v1269 = vmul.f32 %v1244, %v453
        %v1270 = vmul.f32 %v1246, %v454
        %v1271 = vmul.f32 %v1248, %v455
        %v1272 = vmul.f32 %v1250, %v456
        %v1273 = vmul.f32 %v1252, %v457
        %v1274 = vmul.f32 %v1254, %v458
        %v1275 = vmul.f32 %v1256, %v459
        %v1276 = vmul.f32 %v1258, %v460
        %v1277 = vmul.f32 %v1260, %v461
        %v1278 = vmul.f32 %v1262, %v462
        %v1279 = vld [vmem:[#allocation2 + $0x20] sm:$0xff]
        %v1280 = vld [vmem:[#allocation2 + $0x28] sm:$0xff]
        %v1281 = vld [vmem:[%s359 + $0x10] sm:$0xf]
        %v1282 = vld [vmem:[%s359 + $0x14] sm:$0xf]
        %v1283 = vpack.c.bf16 %v1264, %v1263
        %v1284 = vpack.c.bf16 %v1266, %v1265
        %v1285 = vpack.c.bf16 %v1268, %v1267
        %v1286 = vpack.c.bf16 %v1270, %v1269
        %v1287 = vpack.c.bf16 %v1272, %v1271
        %v1288 = vpack.c.bf16 %v1274, %v1273
        %v1289 = vpack.c.bf16 %v1276, %v1275
        %v1290 = vpack.c.bf16 %v1278, %v1277
        %v1293 = vunpack.c.l.b16 %v1281
        %v1294 = vunpack.c.l.b16 %v1282
        %v1295 = vpack.c.b16 %v1294, %v1293
        %1297 = vmatprep.subr.bf16.mxu0 0
        %1298 = vmatpush1.bf16.msra.mxu0 %v1290
        %1299 = vmatprep.subr.bf16.mxu0 0
        %1300 = vmatpush1.bf16.msra.mxu0 %v1289
        %1301 = vmatprep.subr.bf16.mxu0 0
        %1302 = vmatpush1.bf16.msra.mxu0 %v1288
        %1303 = vmatprep.subr.bf16.mxu0 0
        %1304 = vmatpush1.bf16.msra.mxu0 %v1287
        %1305 = vmatprep.subr.bf16.mxu0 0
        %1306 = vmatpush1.bf16.msra.mxu0 %v1286
        %1307 = vmatprep.subr.bf16.mxu0 0
        %1308 = vmatpush1.bf16.msra.mxu0 %v1285
        %1309 = vmatprep.subr.bf16.mxu0 0
        %1310 = vmatpush1.bf16.msra.mxu0 %v1284
        %1311 = vmatprep.subr.bf16.mxu0 0
        %1312 = vmatpush1.bf16.msra.mxu0 %v1283
        %1313 = vmatprep.subr.bf16.mxu0 0
        %1314 = vmatpush2.bf16.msra.mxu0 0
        %1315 = vmatprep.subr.bf16.mxu0 0
        %1316 = vmatpush2.bf16.msra.mxu0 0
        %1317 = vmatprep.subr.bf16.mxu0 0
        %1318 = vmatpush2.bf16.msra.mxu0 0
        %1319 = vmatprep.subr.bf16.mxu0 0
        %1320 = vmatpush2.bf16.msra.mxu0 0
        %1321 = vmatprep.subr.bf16.mxu0 0
        %1322 = vmatpush2.bf16.msra.mxu0 0
        %1323 = vmatprep.subr.bf16.mxu0 0
        %1324 = vmatpush2.bf16.msra.mxu0 0
        %1325 = vmatprep.subr.bf16.mxu0 0
        %1326 = vmatpush2.bf16.msra.mxu0 0
        %1327 = vmatprep.subr.bf16.mxu0 0
        %1328 = vmatpush2.bf16.msra.mxu0 0
        %1329 = vmatprep.mubr.bf16.mxu0 0
        %1330 = vmatmul.mubr.bf16.gmra.mxu0 %v1295
        %v1331 = vpop.f32.mrf.mxu0
        %v1332 = vadd.f32 0.0, %v1331
        %v1333 = vpop.f32.mrf.mxu0
        %v1334 = vpop.f32.mrf.mxu0
        %v1335 = vadd.f32 0.0, %v1334
        %v1336 = vpop.f32.mrf.mxu0
        %1337 = vdwg.mxu0
        %v1338 = vadd.f32 %v1279, %v1332
        %v1339 = vadd.f32 %v1280, %v1335
        %1340 = vst [vmem:[#allocation2 + $0x20] sm:$0xff] %v1338
        %1341 = vst [vmem:[#allocation2 + $0x28] sm:$0xff] %v1339
        %v1342 = vld [vmem:[%s412 + $0x3] sm:$0x1]
        %v1343 = vld [vmem:[%s2] sm:$0x1]
        %1345 = vset.pattern.permute.xlu0 3
        %1346 = vperm.xlu0 %1345, %v1343
        %v1347 = vpop.permute.xlu0 %1346
        %v1349 = vlaneseq
        %v1350 = vshrl.u32 %v1349, 7
        %v1351 = vsub.s32 0, %v1350
        %v1352 = vrot.slane %v1347, %v1351
        %v1353 = vadd.f32 %v1342, %v1352
        %v1354 = vmul.f32 %v1353, 0.2
        %v1355 = vmax.f32 %v1353, %v1354
        %v1356 = vld [vmem:[%s407] sm:$0xff]
        %v1357 = vld [vmem:[%s407 + $0x8] sm:$0xff]
        %v1358 = vld [vmem:[%s407 + $0x10] sm:$0xff]
        %v1359 = vld [vmem:[%s407 + $0x18] sm:$0xff]
        %v1360 = vld [vmem:[%s407 + $0x20] sm:$0xff]
        %v1361 = vld [vmem:[%s407 + $0x28] sm:$0xff]
        %v1362 = vld [vmem:[%s407 + $0x30] sm:$0xff]
        %v1363 = vld [vmem:[%s407 + $0x38] sm:$0xff]
        %v1364 = vld [vmem:[%s407 + $0x40] sm:$0xff]
        %v1365 = vld [vmem:[%s407 + $0x48] sm:$0xff]
        %v1366 = vld [vmem:[%s407 + $0x50] sm:$0xff]
        %v1367 = vld [vmem:[%s407 + $0x58] sm:$0xff]
        %v1368 = vld [vmem:[%s407 + $0x60] sm:$0xff]
        %v1369 = vld [vmem:[%s407 + $0x68] sm:$0xff]
        %v1370 = vld [vmem:[%s407 + $0x70] sm:$0xff]
        %v1371 = vld [vmem:[%s407 + $0x78] sm:$0xff]
        %1373 = vset.pattern.permute.xlu0 3
        %1374 = vperm.xlu0 %1373, %v1356
        %v1375 = vpop.permute.xlu0 %1374
        %1378 = vset.pattern.permute.xlu0 3
        %1379 = vperm.xlu0 %1378, %v1357
        %v1380 = vpop.permute.xlu0 %1379
        %1383 = vset.pattern.permute.xlu0 3
        %1384 = vperm.xlu0 %1383, %v1358
        %v1385 = vpop.permute.xlu0 %1384
        %1388 = vset.pattern.permute.xlu0 3
        %1389 = vperm.xlu0 %1388, %v1359
        %v1390 = vpop.permute.xlu0 %1389
        %1393 = vset.pattern.permute.xlu0 3
        %1394 = vperm.xlu0 %1393, %v1360
        %v1395 = vpop.permute.xlu0 %1394
        %1398 = vset.pattern.permute.xlu0 3
        %1399 = vperm.xlu0 %1398, %v1361
        %v1400 = vpop.permute.xlu0 %1399
        %1403 = vset.pattern.permute.xlu0 3
        %1404 = vperm.xlu0 %1403, %v1362
        %v1405 = vpop.permute.xlu0 %1404
        %1408 = vset.pattern.permute.xlu0 3
        %1409 = vperm.xlu0 %1408, %v1363
        %v1410 = vpop.permute.xlu0 %1409
        %1413 = vset.pattern.permute.xlu0 3
        %1414 = vperm.xlu0 %1413, %v1364
        %v1415 = vpop.permute.xlu0 %1414
        %1418 = vset.pattern.permute.xlu0 3
        %1419 = vperm.xlu0 %1418, %v1365
        %v1420 = vpop.permute.xlu0 %1419
        %1423 = vset.pattern.permute.xlu0 3
        %1424 = vperm.xlu0 %1423, %v1366
        %v1425 = vpop.permute.xlu0 %1424
        %1428 = vset.pattern.permute.xlu0 3
        %1429 = vperm.xlu0 %1428, %v1367
        %v1430 = vpop.permute.xlu0 %1429
        %1433 = vset.pattern.permute.xlu0 3
        %1434 = vperm.xlu0 %1433, %v1368
        %v1435 = vpop.permute.xlu0 %1434
        %1438 = vset.pattern.permute.xlu0 3
        %1439 = vperm.xlu0 %1438, %v1369
        %v1440 = vpop.permute.xlu0 %1439
        %1443 = vset.pattern.permute.xlu0 3
        %1444 = vperm.xlu0 %1443, %v1370
        %v1445 = vpop.permute.xlu0 %1444
        %1448 = vset.pattern.permute.xlu0 3
        %1449 = vperm.xlu0 %1448, %v1371
        %v1450 = vpop.permute.xlu0 %1449
        %v1452 = vlaneseq
        %v1453 = vshrl.u32 %v1452, 7
        %v1454 = vsub.s32 0, %v1453
        %v1455 = vrot.slane %v1342, %v1454
        %v1456 = vadd.f32 %v1375, %v1455
        %v1457 = vadd.f32 %v1380, %v1455
        %v1458 = vadd.f32 %v1385, %v1455
        %v1459 = vadd.f32 %v1390, %v1455
        %v1460 = vadd.f32 %v1395, %v1455
        %v1461 = vadd.f32 %v1400, %v1455
        %v1462 = vadd.f32 %v1405, %v1455
        %v1463 = vadd.f32 %v1410, %v1455
        %v1464 = vadd.f32 %v1415, %v1455
        %v1465 = vadd.f32 %v1420, %v1455
        %v1466 = vadd.f32 %v1425, %v1455
        %v1467 = vadd.f32 %v1430, %v1455
        %v1468 = vadd.f32 %v1435, %v1455
        %v1469 = vadd.f32 %v1440, %v1455
        %v1470 = vadd.f32 %v1445, %v1455
        %v1471 = vadd.f32 %v1450, %v1455
        %v1472 = vmul.f32 %v1456, 0.2
        %v1473 = vmul.f32 %v1457, 0.2
        %v1474 = vmul.f32 %v1458, 0.2
        %v1475 = vmul.f32 %v1459, 0.2
        %v1476 = vmul.f32 %v1460, 0.2
        %v1477 = vmul.f32 %v1461, 0.2
        %v1478 = vmul.f32 %v1462, 0.2
        %v1479 = vmul.f32 %v1463, 0.2
        %v1480 = vmul.f32 %v1464, 0.2
        %v1481 = vmul.f32 %v1465, 0.2
        %v1482 = vmul.f32 %v1466, 0.2
        %v1483 = vmul.f32 %v1467, 0.2
        %v1484 = vmul.f32 %v1468, 0.2
        %v1485 = vmul.f32 %v1469, 0.2
        %v1486 = vmul.f32 %v1470, 0.2
        %v1487 = vmul.f32 %v1471, 0.2
        %v1488 = vmax.f32 %v1456, %v1472
        %v1489 = vmax.f32 %v1457, %v1473
        %v1490 = vmax.f32 %v1458, %v1474
        %v1491 = vmax.f32 %v1459, %v1475
        %v1492 = vmax.f32 %v1460, %v1476
        %v1493 = vmax.f32 %v1461, %v1477
        %v1494 = vmax.f32 %v1462, %v1478
        %v1495 = vmax.f32 %v1463, %v1479
        %v1496 = vmax.f32 %v1464, %v1480
        %v1497 = vmax.f32 %v1465, %v1481
        %v1498 = vmax.f32 %v1466, %v1482
        %v1499 = vmax.f32 %v1467, %v1483
        %v1500 = vmax.f32 %v1468, %v1484
        %v1501 = vmax.f32 %v1469, %v1485
        %v1502 = vmax.f32 %v1470, %v1486
        %v1503 = vmax.f32 %v1471, %v1487
        %v1504 = vlaneseq
        %v1505 = vshrl.u32 %v1504, 7
        %v1506 = vsub.s32 0, %v1505
        %v1507 = vrot.slane %v1355, %v1506
        %v1508 = vsub.f32 %v1488, %v1507
        %v1509 = vsub.f32 %v1489, %v1507
        %v1510 = vsub.f32 %v1490, %v1507
        %v1511 = vsub.f32 %v1491, %v1507
        %v1512 = vsub.f32 %v1492, %v1507
        %v1513 = vsub.f32 %v1493, %v1507
        %v1514 = vsub.f32 %v1494, %v1507
        %v1515 = vsub.f32 %v1495, %v1507
        %v1516 = vsub.f32 %v1496, %v1507
        %v1517 = vsub.f32 %v1497, %v1507
        %v1518 = vsub.f32 %v1498, %v1507
        %v1519 = vsub.f32 %v1499, %v1507
        %v1520 = vsub.f32 %v1500, %v1507
        %v1521 = vsub.f32 %v1501, %v1507
        %v1522 = vsub.f32 %v1502, %v1507
        %v1523 = vsub.f32 %v1503, %v1507
        %v1524 = vmul.f32 %v1508, 1.442695
        %v1525 = vpow.pop %v1524
        %v1526 = vmul.f32 %v1509, 1.442695
        %v1527 = vpow.pop %v1526
        %v1528 = vmul.f32 %v1510, 1.442695
        %v1529 = vpow.pop %v1528
        %v1530 = vmul.f32 %v1511, 1.442695
        %v1531 = vpow.pop %v1530
        %v1532 = vmul.f32 %v1512, 1.442695
        %v1533 = vpow.pop %v1532
        %v1534 = vmul.f32 %v1513, 1.442695
        %v1535 = vpow.pop %v1534
        %v1536 = vmul.f32 %v1514, 1.442695
        %v1537 = vpow.pop %v1536
        %v1538 = vmul.f32 %v1515, 1.442695
        %v1539 = vpow.pop %v1538
        %v1540 = vmul.f32 %v1516, 1.442695
        %v1541 = vpow.pop %v1540
        %v1542 = vmul.f32 %v1517, 1.442695
        %v1543 = vpow.pop %v1542
        %v1544 = vmul.f32 %v1518, 1.442695
        %v1545 = vpow.pop %v1544
        %v1546 = vmul.f32 %v1519, 1.442695
        %v1547 = vpow.pop %v1546
        %v1548 = vmul.f32 %v1520, 1.442695
        %v1549 = vpow.pop %v1548
        %v1550 = vmul.f32 %v1521, 1.442695
        %v1551 = vpow.pop %v1550
        %v1552 = vmul.f32 %v1522, 1.442695
        %v1553 = vpow.pop %v1552
        %v1554 = vmul.f32 %v1523, 1.442695
        %v1555 = vpow.pop %v1554
        %v1556 = vmul.f32 %v1525, %v447
        %v1557 = vmul.f32 %v1527, %v448
        %v1558 = vmul.f32 %v1529, %v449
        %v1559 = vmul.f32 %v1531, %v450
        %v1560 = vmul.f32 %v1533, %v451
        %v1561 = vmul.f32 %v1535, %v452
        %v1562 = vmul.f32 %v1537, %v453
        %v1563 = vmul.f32 %v1539, %v454
        %v1564 = vmul.f32 %v1541, %v455
        %v1565 = vmul.f32 %v1543, %v456
        %v1566 = vmul.f32 %v1545, %v457
        %v1567 = vmul.f32 %v1547, %v458
        %v1568 = vmul.f32 %v1549, %v459
        %v1569 = vmul.f32 %v1551, %v460
        %v1570 = vmul.f32 %v1553, %v461
        %v1571 = vmul.f32 %v1555, %v462
        %v1572 = vld [vmem:[#allocation2 + $0x30] sm:$0xff]
        %v1573 = vld [vmem:[#allocation2 + $0x38] sm:$0xff]
        %v1574 = vld [vmem:[%s359 + $0x18] sm:$0xf]
        %v1575 = vld [vmem:[%s359 + $0x1c] sm:$0xf]
        %v1576 = vpack.c.bf16 %v1557, %v1556
        %v1577 = vpack.c.bf16 %v1559, %v1558
        %v1578 = vpack.c.bf16 %v1561, %v1560
        %v1579 = vpack.c.bf16 %v1563, %v1562
        %v1580 = vpack.c.bf16 %v1565, %v1564
        %v1581 = vpack.c.bf16 %v1567, %v1566
        %v1582 = vpack.c.bf16 %v1569, %v1568
        %v1583 = vpack.c.bf16 %v1571, %v1570
        %v1586 = vunpack.c.l.b16 %v1574
        %v1587 = vunpack.c.l.b16 %v1575
        %v1588 = vpack.c.b16 %v1587, %v1586
        %1590 = vmatprep.subr.bf16.mxu0 0
        %1591 = vmatpush1.bf16.msra.mxu0 %v1583
        %1592 = vmatprep.subr.bf16.mxu0 0
        %1593 = vmatpush1.bf16.msra.mxu0 %v1582
        %1594 = vmatprep.subr.bf16.mxu0 0
        %1595 = vmatpush1.bf16.msra.mxu0 %v1581
        %1596 = vmatprep.subr.bf16.mxu0 0
        %1597 = vmatpush1.bf16.msra.mxu0 %v1580
        %1598 = vmatprep.subr.bf16.mxu0 0
        %1599 = vmatpush1.bf16.msra.mxu0 %v1579
        %1600 = vmatprep.subr.bf16.mxu0 0
        %1601 = vmatpush1.bf16.msra.mxu0 %v1578
        %1602 = vmatprep.subr.bf16.mxu0 0
        %1603 = vmatpush1.bf16.msra.mxu0 %v1577
        %1604 = vmatprep.subr.bf16.mxu0 0
        %1605 = vmatpush1.bf16.msra.mxu0 %v1576
        %1606 = vmatprep.subr.bf16.mxu0 0
        %1607 = vmatpush2.bf16.msra.mxu0 0
        %1608 = vmatprep.subr.bf16.mxu0 0
        %1609 = vmatpush2.bf16.msra.mxu0 0
        %1610 = vmatprep.subr.bf16.mxu0 0
        %1611 = vmatpush2.bf16.msra.mxu0 0
        %1612 = vmatprep.subr.bf16.mxu0 0
        %1613 = vmatpush2.bf16.msra.mxu0 0
        %1614 = vmatprep.subr.bf16.mxu0 0
        %1615 = vmatpush2.bf16.msra.mxu0 0
        %1616 = vmatprep.subr.bf16.mxu0 0
        %1617 = vmatpush2.bf16.msra.mxu0 0
        %1618 = vmatprep.subr.bf16.mxu0 0
        %1619 = vmatpush2.bf16.msra.mxu0 0
        %1620 = vmatprep.subr.bf16.mxu0 0
        %1621 = vmatpush2.bf16.msra.mxu0 0
        %1622 = vmatprep.mubr.bf16.mxu0 0
        %1623 = vmatmul.mubr.bf16.gmra.mxu0 %v1588
        %v1624 = vpop.f32.mrf.mxu0
        %v1625 = vadd.f32 0.0, %v1624
        %v1626 = vpop.f32.mrf.mxu0
        %v1627 = vpop.f32.mrf.mxu0
        %v1628 = vadd.f32 0.0, %v1627
        %v1629 = vpop.f32.mrf.mxu0
        %1630 = vdwg.mxu0
        %v1631 = vadd.f32 %v1572, %v1625
        %v1632 = vadd.f32 %v1573, %v1628
        %1633 = vst [vmem:[#allocation2 + $0x30] sm:$0xff] %v1631
        %1634 = vst [vmem:[#allocation2 + $0x38] sm:$0xff] %v1632
        %p1635 = scmp.eq.s32.totalorder %s21, 2
        // Predicated region
        $region124: #{gat_conv_forward.3} parent=110 // pred_check
          %p1636 = pneg %p1635
        $region125: #{gat_conv_forward.3} parent=110 // pred_check_branch
          %1638 = sbr.rel (%p1636) target = $region127
        $region126: #{gat_conv_forward.3} parent=110 // pred_region
          %v1639 = vld [vmem:[#allocation2 + $0x8] sm:$0x1]
          %v1640 = vmax.f32 %v1639, 1e-30
          %v1641 = vrcp.pop %v1640
          %v1642 = vld [vmem:[#allocation2] sm:$0xff]
          %v1643 = vlaneseq
          %v1644 = vshrl.u32 %v1643, 7
          %v1645 = vsub.s32 0, %v1644
          %v1646 = vrot.slane %v1641, %v1645
          %v1647 = vmul.f32 %v1642, %v1646
          %1648 = vst [vmem:[%s402] sm:$0xff] %v1647
          %v1649 = vld [vmem:[#allocation2 + $0x18] sm:$0x1]
          %v1650 = vmax.f32 %v1649, 1e-30
          %v1651 = vrcp.pop %v1650
          %v1652 = vld [vmem:[#allocation2 + $0x10] sm:$0xff]
          %v1653 = vlaneseq
          %v1654 = vshrl.u32 %v1653, 7
          %v1655 = vsub.s32 0, %v1654
          %v1656 = vrot.slane %v1651, %v1655
          %v1657 = vmul.f32 %v1652, %v1656
          %1658 = vst [vmem:[%s402 + $0x8] sm:$0xff] %v1657
          %v1659 = vld [vmem:[#allocation2 + $0x28] sm:$0x1]
          %v1660 = vmax.f32 %v1659, 1e-30
          %v1661 = vrcp.pop %v1660
          %v1662 = vld [vmem:[#allocation2 + $0x20] sm:$0xff]
          %v1663 = vlaneseq
          %v1664 = vshrl.u32 %v1663, 7
          %v1665 = vsub.s32 0, %v1664
          %v1666 = vrot.slane %v1661, %v1665
          %v1667 = vmul.f32 %v1662, %v1666
          %1668 = vst [vmem:[%s402 + $0x10] sm:$0xff] %v1667
          %v1669 = vld [vmem:[#allocation2 + $0x38] sm:$0x1]
          %v1670 = vmax.f32 %v1669, 1e-30
          %v1671 = vrcp.pop %v1670
          %v1672 = vld [vmem:[#allocation2 + $0x30] sm:$0xff]
          %v1673 = vlaneseq
          %v1674 = vshrl.u32 %v1673, 7
          %v1675 = vsub.s32 0, %v1674
          %v1676 = vrot.slane %v1671, %v1675
          %v1677 = vmul.f32 %v1672, %v1676
          %1678 = vst [vmem:[%s402 + $0x18] sm:$0xff] %v1677
        $region127: #{gat_conv_forward.3} parent=110 // pred_fallthru
          _
        %s1679 = sand.u32 %s163, 1
        %s1680 = sand.u32 %s163, 1
        %s1681 = smul.addr %s1680, 32
        %s1682 = scalar_lea.vmem [#allocation5], %s1681
        // Predicated region
        $region128: #{gat_conv_forward.3} parent=110 // pred_check
          %p1683 = pneg %p173
        $region129: #{gat_conv_forward.3} parent=110 // pred_check_branch
          %1685 = sbr.rel (%p1683) target = $region131
        $region130: #{gat_conv_forward.3} parent=110 // pred_region
          %s1686 = smul.addr %s20, 8
          %s1687 = scalar_lea.vmem %s5, %s1686
          // Predicated region
          $region132: #{gat_conv_forward.3} parent=130 // pred_check
            _
          $region133: #{gat_conv_forward.3} parent=130 // pred_check_branch
            %1689 = sbr.rel (0) target = $region135
          $region134: #{gat_conv_forward.3} parent=130 // pred_region
            // Predicated region
            $region136: #{gat_conv_forward.3} parent=134 // pred_check
              _
            $region137: #{gat_conv_forward.3} parent=134 // pred_check_branch
              %1691 = sbr.rel (0) target = $region139
            $region138: #{gat_conv_forward.3} parent=134 // pred_region
              // Predicated region
              $region151: #{gat_conv_forward.3} parent=138 // pred_check
                _
              $region152: #{gat_conv_forward.3} parent=138 // pred_check_branch
                %1713 = sbr.rel (0) target = $region154
              $region153: #{gat_conv_forward.3} parent=138 // pred_region
                loop: start=0, step=1, limit=1
                $region155: #{gat_conv_forward.3} parent=153 // loop_pre_header
                  _
                $region156: #{gat_conv_forward.3} parent=153 // loop_header
                  %s1715 = sphi 0, %s1719
                  %p1716 = scmp.ge.s32.totalorder %s1715, 1
                  %s1720 = sphi %s1682, %s1682
                  %s1721 = sphi %s1687, %s1687
                $region157: #{gat_conv_forward.3} parent=153 // loop_header_branch
                  %1718 = sbr.rel (%p1716) target = $region161
                $region158: #{gat_conv_forward.3} parent=153 // loop_body
                  %v1722 = vld [vmem:[%s1720] sm:$0xff]
                  %1723 = vst [vmem:[%s1721] sm:$0xff] %v1722
                  %v1724 = vld [vmem:[%s1720 + $0x8] sm:$0xff]
                  %1725 = vst [vmem:[%s1721 + $0x18] sm:$0xff] %v1724
                  %v1726 = vld [vmem:[%s1720 + $0x10] sm:$0xff]
                  %1727 = vst [vmem:[%s1721 + $0x30] sm:$0xff] %v1726
                  %v1728 = vld [vmem:[%s1720 + $0x18] sm:$0xff]
                  %1729 = vst [vmem:[%s1721 + $0x48] sm:$0xff] %v1728
                $region159: #{gat_conv_forward.3} parent=153 // loop_footer
                  %s1719 = sadd.s32 1, %s1715
                $region160: #{gat_conv_forward.3} parent=153 // loop_footer_branch
                  %1714 = sbr.rel target = $region156
                $region161: #{gat_conv_forward.3} parent=153 // loop_exit
                  _
              $region154: #{gat_conv_forward.3} parent=138 // pred_fallthru
                _
              // Predicated region
              $region162: #{gat_conv_forward.3} parent=138 // pred_check
                _
              $region163: #{gat_conv_forward.3} parent=138 // pred_check_branch
                %1731 = sbr.rel target = $region165
              $region164: #{gat_conv_forward.3} parent=138 // pred_region
                _
              $region165: #{gat_conv_forward.3} parent=138 // pred_fallthru
                _
            $region139: #{gat_conv_forward.3} parent=134 // pred_fallthru
              _
            // Predicated region
            $region140: #{gat_conv_forward.3} parent=134 // pred_check
              _
            $region141: #{gat_conv_forward.3} parent=134 // pred_check_branch
              %1693 = sbr.rel target = $region143
            $region142: #{gat_conv_forward.3} parent=134 // pred_region
              %s1695 = ssub.s32 256, 1
              loop: start=0, step=1, limit=1
              $region144: #{gat_conv_forward.3} parent=142 // loop_pre_header
                _
              $region145: #{gat_conv_forward.3} parent=142 // loop_header
                %s1697 = sphi 0, %s1701
                %p1698 = scmp.ge.s32.totalorder %s1697, 1
                %s1702 = sphi %s1682, %s1682
                %s1703 = sphi %s1687, %s1687
              $region146: #{gat_conv_forward.3} parent=142 // loop_header_branch
                %1700 = sbr.rel (%p1698) target = $region150
              $region147: #{gat_conv_forward.3} parent=142 // loop_body
                %v1704 = vld [vmem:[%s1702] sm:%s1695]
                %1705 = vst [vmem:[%s1703] sm:%s1695] %v1704
                %v1706 = vld [vmem:[%s1702 + $0x8] sm:%s1695]
                %1707 = vst [vmem:[%s1703 + $0x18] sm:%s1695] %v1706
                %v1708 = vld [vmem:[%s1702 + $0x10] sm:%s1695]
                %1709 = vst [vmem:[%s1703 + $0x30] sm:%s1695] %v1708
                %v1710 = vld [vmem:[%s1702 + $0x18] sm:%s1695]
                %1711 = vst [vmem:[%s1703 + $0x48] sm:%s1695] %v1710
              $region148: #{gat_conv_forward.3} parent=142 // loop_footer
                %s1701 = sadd.s32 1, %s1697
              $region149: #{gat_conv_forward.3} parent=142 // loop_footer_branch
                %1696 = sbr.rel target = $region145
              $region150: #{gat_conv_forward.3} parent=142 // loop_exit
                _
            $region143: #{gat_conv_forward.3} parent=134 // pred_fallthru
              _
          $region135: #{gat_conv_forward.3} parent=130 // pred_fallthru
            _
          %1732 = vnop
        $region131: #{gat_conv_forward.3} parent=110 // pred_fallthru
          _
      $region111: #{gat_conv_forward.3} parent=5 // pred_fallthru
        _
      %p1733 = scmp.le.s32.totalorder 2, %s11
      // Predicated region
      $region166: #{gat_conv_forward.3} parent=5 // pred_check
        %p1734 = pneg %p1733
      $region167: #{gat_conv_forward.3} parent=5 // pred_check_branch
        %1736 = sbr.rel (%p1734) target = $region169
      $region168: #{gat_conv_forward.3} parent=5 // pred_region
        %s1737 = ssub.s32 %s11, 2
        // Predicated region
        $region170: #{gat_conv_forward.3} parent=168 // pred_check
          %p1738 = pneg %p179
        $region171: #{gat_conv_forward.3} parent=168 // pred_check_branch
          %1740 = sbr.rel (%p1738) target = $region173
        $region172: #{gat_conv_forward.3} parent=168 // pred_region
          %s1741 = sand.u32 %s164, 1
          %s1742 = sand.u32 %s164, 1
          %s1743 = smul.addr %s1742, 32
          %s1744 = scalar_lea.vmem [#allocation5], %s1743
        $region173: #{gat_conv_forward.3} parent=168 // pred_fallthru
          _
      $region169: #{gat_conv_forward.3} parent=5 // pred_fallthru
        _
    $region6: #{gat_conv_forward.3} parent=1 // loop_footer
      %s15 = sadd.s32 1, %s11
    $region7: #{gat_conv_forward.3} parent=1 // loop_footer_branch
      %10 = sbr.rel target = $region3
    $region8: #{gat_conv_forward.3} parent=1 // loop_exit
      _

</llo_original>
